<compile_context>
chip_gen: v7x
topology: tpu7x:2x2x1
jax: 0.10.0
libtpu: 0.0.40
codegen_flags: <defaults>
</compile_context>

<pallas_src>
import functools

import jax
import jax.numpy as jnp
from jax.experimental import pallas as pl
from jax.experimental.pallas import tpu as pltpu

VOCAB = 40002
H = 100                 # nn.RNN hidden_size
HP = 128                # hidden padded to one 128-lane tile
DHP = 2 * HP            # per-layer lane layout: [fwd 0:HP | bwd HP:2HP]
NUM_LAYERS = 3
HEAD_H = 200            # linear1 out_features
HEAD_HP = 256           # padded (== DHP, head reuses the 256-lane slab width)
EP = 128                # embedding dim padded to one lane tile (requires E <= 128)
assert HEAD_HP == DHP


def _slab_layout():
    """Row offsets of every parameter block inside the single bf16 weight slab.

    Every block start is a multiple of 16 rows so the bf16 (16,128) tiling stays
    aligned for both the HBM->VMEM DMAs and the in-kernel slices.
    """
    off, r = {}, 0
    for l in range(NUM_LAYERS):
        din = EP if l == 0 else DHP
        off[f"wih{l}"] = r; r += din      # (din, 256)  input->hidden, both dirs
        off[f"b{l}"] = r;   r += 16       # row 0 = folded b_ih + b_hh, both dirs
        off[f"whh{l}"] = r; r += DHP      # (256, 256)  block-diag [Whh_f, Whh_b]
    off["hw1"] = r; r += 4 * HP           # (512, 256)  linear1 (enc -> 200)
    off["hb1"] = r                        # single row: linear1 bias (+1.0 in last lane)
    off["w2"] = r + 8                     # single row: linear2 weight (+b2 in last lane)
    r += 16
    return off, r


OFF, SLAB_ROWS = _slab_layout()


# ----------------------------------------------------------------------------
# The fused kernel.
# ----------------------------------------------------------------------------
def fused_rnn_kernel(tok_ref, emb_ref, slab_ref, out_ref,
                     wbuf, xbuf, pre_ref, seq1, seq2, sem_w, sem_x,
                     *, B, Bp, L):
    f32, bf16 = jnp.float32, jnp.bfloat16
    r1, r2 = OFF["wih1"], OFF["wih2"]

    # ---- issue DMAs: layer-1 weights first, then the L*B embedding rows, then
    #      layer-2 and layer-3+head weights so the big transfers hide behind
    #      the layer-1 / layer-2 recurrences.
    cp_w0 = pltpu.make_async_copy(slab_ref.at[0:r1], wbuf.at[0:r1], sem_w.at[0])
    cp_w0.start()
    x_copies = []
    for t in range(L):
        for b in range(B):
            row = t * Bp + b
            cp = pltpu.make_async_copy(
                emb_ref.at[pl.ds(tok_ref[b, t], 1)],      # (1, EP) HBM row
                xbuf.at[pl.ds(row, 1)],                    # (1, EP) VMEM row
                sem_x.at[t * B + b])
            cp.start()
            x_copies.append(cp)
    cp_w1 = pltpu.make_async_copy(slab_ref.at[r1:r2], wbuf.at[r1:r2], sem_w.at[1])
    cp_w1.start()
    cp_w2 = pltpu.make_async_copy(slab_ref.at[r2:SLAB_ROWS],
                                  wbuf.at[r2:SLAB_ROWS], sem_w.at[2])
    cp_w2.start()

    def run_layer(lidx, inp_bf16, din, out_seq):
        o_wih = OFF[f"wih{lidx}"]
        o_b = OFF[f"b{lidx}"]
        o_whh = OFF[f"whh{lidx}"]
        # Hoisted input projection for BOTH directions in one matmul, plus the
        # folded bias (b_ih + b_hh).  Stored to VMEM scratch in a *permuted*
        # layout: fwd lanes time-ordered, bwd lanes time-reversed, so each
        # recurrence step reads one contiguous (Bp, 256) row block.
        bias = wbuf[o_b:o_b + 1, :].astype(f32)
        pre = jnp.dot(inp_bf16, wbuf[o_wih:o_wih + din, :],
                      preferred_element_type=f32) + bias
        pre_ref[:, 0:HP] = pre[:, 0:HP]
        for s in range(L):
            tb = L - 1 - s
            pre_ref[s * Bp:(s + 1) * Bp, HP:DHP] = pre[tb * Bp:(tb + 1) * Bp, HP:DHP]

        h = jnp.zeros((Bp, DHP), f32)
        h_first = None
        for s in range(L):
            # One fused 256-wide block-diagonal matmul per step (fwd + bwd).
            # whh / pre are read straight from VMEM each step -> short live
            # ranges, MXU fed directly, no spills across the unrolled chain.
            h = jnp.tanh(pre_ref[s * Bp:(s + 1) * Bp, :] +
                         jnp.dot(h.astype(bf16), wbuf[o_whh:o_whh + DHP, :],
                                 preferred_element_type=f32))
            if out_seq is not None:
                out_seq[s * Bp:(s + 1) * Bp, 0:HP] = h[:, 0:HP]              # fwd @ t=s
                out_seq[(L - 1 - s) * Bp:(L - s) * Bp, HP:DHP] = h[:, HP:DHP]  # bwd @ t=L-1-s
            if s == 0:
                h_first = h
        return h_first, h

    # Layer 1: needs only its own weights + the gathered embeddings.
    cp_w0.wait()
    for cp in x_copies:
        cp.wait()
    run_layer(0, xbuf[...].astype(bf16), EP, seq1)

    cp_w1.wait()                                   # hidden behind layer-1 compute
    run_layer(1, seq1[...].astype(bf16), DHP, seq2)

    cp_w2.wait()                                   # hidden behind layers 1-2
    h30, h3L = run_layer(2, seq2[...].astype(bf16), DHP, None)

    # encoding = cat(states[0], states[-1]) = [fwd_0|bwd_0|fwd_{L-1}|bwd_{L-1}];
    # our lane order is [fwd_0|bwd_{L-1}|fwd_{L-1}|bwd_0] and hw1's row blocks
    # were permuted to match at pack time.
    enc = jnp.concatenate([h30, h3L], axis=1).astype(jnp.bfloat16)   # (Bp, 4*HP)
    oh = OFF["hw1"]
    h1 = jnp.maximum(
        jnp.dot(enc, wbuf[oh:oh + 4 * HP, :], preferred_element_type=f32)
        + wbuf[OFF["hb1"]:OFF["hb1"] + 1, :].astype(f32), 0.0)
    # Lane-dense linear2: VPU multiply + lane reduce.  b2 rides in the last
    # padded lane (hb1[last]=1 -> h1[:,last]=1, w2[last]=b2).
    w2 = wbuf[OFF["w2"]:OFF["w2"] + 1, :].astype(f32)
    logit = jnp.sum(h1 * w2, axis=1, keepdims=True)                  # (Bp, 1)
    out_ref[...] = jnp.broadcast_to(jax.nn.sigmoid(logit), (Bp, HP))


@jax.jit
def rnn_forward(x_tokens, emb_pad, slab):
    """x_tokens: (B, L) int32; emb_pad: (VOCAB, EP) f32; slab: (SLAB_ROWS, 256) bf16."""
    B, L = x_tokens.shape
    Bp = max(8, ((B + 7) // 8) * 8)
    kernel = functools.partial(fused_rnn_kernel, B=B, Bp=Bp, L=L)
    out = pl.pallas_call(
        kernel,
        out_shape=jax.ShapeDtypeStruct((Bp, HP), jnp.float32),
        in_specs=[
            pl.BlockSpec(memory_space=pltpu.MemorySpace.SMEM),   # tokens (scalars)
            pl.BlockSpec(memory_space=pl.ANY),                   # embedding table (HBM)
            pl.BlockSpec(memory_space=pl.ANY),                   # weight slab (HBM)
        ],
        out_specs=pl.BlockSpec(memory_space=pltpu.MemorySpace.VMEM),
        scratch_shapes=[
            pltpu.VMEM((SLAB_ROWS, DHP), jnp.bfloat16),   # weight slab, VMEM-resident
            pltpu.VMEM((L * Bp, EP), jnp.float32),        # gathered embeddings (time-major)
            pltpu.VMEM((L * Bp, DHP), jnp.float32),       # permuted input projection
            pltpu.VMEM((L * Bp, DHP), jnp.float32),       # layer-1 output sequence
            pltpu.VMEM((L * Bp, DHP), jnp.float32),       # layer-2 output sequence
            pltpu.SemaphoreType.DMA((3,)),                # weight-slab copies
            pltpu.SemaphoreType.DMA((L * B,)),            # embedding row copies
        ],
    )(x_tokens, emb_pad, slab)
    return out[:B, :1]


# ----------------------------------------------------------------------------
# Parameter construction (PyTorch layout) + packing into the padded slab.
# ----------------------------------------------------------------------------
def _uniform(key, shape, bound):
    return jax.random.uniform(key, shape, jnp.float32, minval=-bound, maxval=bound)


def init_torch_like_params(key, embed_size):
    ks = iter(jax.random.split(key, 32))
    bound = 1.0 / (H ** 0.5)
    p = {"embedding": jax.random.normal(next(ks), (VOCAB, embed_size), jnp.float32) * 0.1}
    rnn = []
    for layer in range(NUM_LAYERS):
        din = embed_size if layer == 0 else 2 * H
        lp = {}
        for d in ("fwd", "bwd"):
            lp[d] = dict(
                w_ih=_uniform(next(ks), (H, din), bound),
                w_hh=_uniform(next(ks), (H, H), bound),
                b_ih=_uniform(next(ks), (H,), bound),
                b_hh=_uniform(next(ks), (H,), bound),
            )
        rnn.append(lp)
    p["rnn"] = rnn
    b1 = 1.0 / ((4 * H) ** 0.5)
    p["w1"] = _uniform(next(ks), (HEAD_H, 4 * H), b1)
    p["b1"] = _uniform(next(ks), (HEAD_H,), b1)
    b2 = 1.0 / (HEAD_H ** 0.5)
    p["w2"] = _uniform(next(ks), (1, HEAD_H), b2)
    p["b2"] = _uniform(next(ks), (1,), b2)
    return p


def pack_params(p):
    """Zero-pad the embedding table to EP lanes and pack all weights into one
    contiguous lane-dense bf16 slab (rows = _slab_layout())."""
    f32 = jnp.float32
    E = p["embedding"].shape[1]
    assert E <= EP
    emb_pad = jnp.zeros((p["embedding"].shape[0], EP), f32).at[:, :E].set(p["embedding"])

    slab = jnp.zeros((SLAB_ROWS, DHP), f32)
    for l, lp in enumerate(p["rnn"]):
        wfT, wbT = lp["fwd"]["w_ih"].T, lp["bwd"]["w_ih"].T          # (din, H)
        o = OFF[f"wih{l}"]
        if l == 0:
            slab = slab.at[o:o + E, 0:H].set(wfT)
            slab = slab.at[o:o + E, HP:HP + H].set(wbT)
        else:
            # layer input lanes: [fwd_h 0:H | 0-pad | bwd_h HP:HP+H | 0-pad]
            slab = slab.at[o:o + H, 0:H].set(wfT[0:H])
            slab = slab.at[o + HP:o + HP + H, 0:H].set(wfT[H:2 * H])
            slab = slab.at[o:o + H, HP:HP + H].set(wbT[0:H])
            slab = slab.at[o + HP:o + HP + H, HP:HP + H].set(wbT[H:2 * H])
        bf = lp["fwd"]["b_ih"] + lp["fwd"]["b_hh"]                   # fold biases
        bb = lp["bwd"]["b_ih"] + lp["bwd"]["b_hh"]
        ob = OFF[f"b{l}"]
        slab = slab.at[ob, 0:H].set(bf).at[ob, HP:HP + H].set(bb)
        ow = OFF[f"whh{l}"]
        slab = slab.at[ow:ow + H, 0:H].set(lp["fwd"]["w_hh"].T)
        slab = slab.at[ow + HP:ow + HP + H, HP:HP + H].set(lp["bwd"]["w_hh"].T)

    # head.  kernel encoding lane blocks = [fwd_0 | bwd_{L-1} | fwd_{L-1} | bwd_0]
    # while PyTorch w1 columns are    [fwd_0 | bwd_0 | fwd_{L-1} | bwd_{L-1}].
    w1T = p["w1"].T                                                   # (4H, HEAD_H)
    oh = OFF["hw1"]
    for k, sb in enumerate((0, 3, 2, 1)):
        slab = slab.at[oh + k * HP:oh + k * HP + H, 0:HEAD_H].set(w1T[sb * H:(sb + 1) * H])
    slab = slab.at[OFF["hb1"], 0:HEAD_H].set(p["b1"])
    slab = slab.at[OFF["hb1"], HEAD_HP - 1].set(1.0)                  # feeds b2 lane
    slab = slab.at[OFF["w2"], 0:HEAD_H].set(p["w2"][0])
    slab = slab.at[OFF["w2"], HEAD_HP - 1].set(p["b2"][0])
    return emb_pad, slab.astype(jnp.bfloat16)


# ----------------------------------------------------------------------------
# Pure-JAX reference mirroring the kernel's numerics: every matmul uses bf16
# operands with f32 accumulation (MXU-native), slab-resident weights/biases are
# used at bf16 precision, everything else (tanh/ReLU/sigmoid/adds) is f32.
# ----------------------------------------------------------------------------
@jax.jit
def reference_forward(p, x_tokens):
    f32, bf16 = jnp.float32, jnp.bfloat16
    q = lambda a: a.astype(bf16).astype(f32)
    bdot = lambda a, b: jnp.dot(a.astype(bf16), b.astype(bf16),
                                preferred_element_type=f32)
    x = jnp.take(p["embedding"], x_tokens, axis=0)                    # (B, L, E)
    seq = jnp.transpose(x, (1, 0, 2))                                 # (L, B, E)
    L, B = seq.shape[0], seq.shape[1]
    for lp in p["rnn"]:
        outs = []
        for d, rev in (("fwd", False), ("bwd", True)):
            w_ih, w_hh = lp[d]["w_ih"], lp[d]["w_hh"]
            b = q(lp[d]["b_ih"] + lp[d]["b_hh"])
            pre = jnp.stack([bdot(seq[t], w_ih.T) for t in range(L)], 0) + b
            h = jnp.zeros((B, H), f32)
            hs = [None] * L
            ts = range(L - 1, -1, -1) if rev else range(L)
            for t in ts:
                h = jnp.tanh(pre[t] + bdot(h, w_hh.T))
                hs[t] = h
            outs.append(jnp.stack(hs, 0))
        seq = jnp.concatenate(outs, axis=-1)                          # (L, B, 2H)
    enc = jnp.concatenate([seq[0], seq[-1]], axis=1)                  # (B, 4H)
    h1 = jnp.maximum(bdot(enc, p["w1"].T) + q(p["b1"]), 0.0)
    logit = jnp.sum(h1 * q(p["w2"]), axis=1, keepdims=True) + q(p["b2"])
    return jax.nn.sigmoid(logit)


if __name__ == "__main__":
    B, L, E = 2, 8, 32
    key = jax.random.PRNGKey(0)
    k_param, k_tok = jax.random.split(key)

    params = init_torch_like_params(k_param, E)
    emb_pad, slab = pack_params(params)
    x_tokens = jax.random.randint(k_tok, (B, L), 0, VOCAB, dtype=jnp.int32)

    out = jax.block_until_ready(rnn_forward(x_tokens, emb_pad, slab))
    assert out.shape == (B, 1)
    assert bool(jnp.all(jnp.isfinite(out)))
    assert bool(jnp.all((out >= 0.0) & (out <= 1.0)))

    ref = jax.block_until_ready(reference_forward(params, x_tokens))
    # bf16-aware tolerance: the reference applies the exact same bf16-operand /
    # f32-accumulate matmul discipline, so this checks packing & layout.
    assert bool(jnp.allclose(out, ref, atol=1e-4)), (
        f"max|diff| = {float(jnp.max(jnp.abs(out - ref)))}")
    print("KERNEL_OK")
</pallas_src>

<mosaic_0001>
module attributes {stable_mosaic.version = 11 : i64} {
  func.func @fused_rnn_kernel(%arg0: memref<2x8xi32, #tpu.memory_space<smem>>, %arg1: memref<40002x128xf32, #tpu.memory_space<any>>, %arg2: memref<1984x256xbf16, #tpu.memory_space<any>>, %arg3: memref<8x128xf32, #tpu.memory_space<vmem>>, %arg4: memref<1984x256xbf16, #tpu.memory_space<vmem>>, %arg5: memref<64x128xf32, #tpu.memory_space<vmem>>, %arg6: memref<64x256xf32, #tpu.memory_space<vmem>>, %arg7: memref<64x256xf32, #tpu.memory_space<vmem>>, %arg8: memref<64x256xf32, #tpu.memory_space<vmem>>, %arg9: memref<3x!tpu.dma_semaphore, #tpu.memory_space<semaphore_mem>>, %arg10: memref<16x!tpu.dma_semaphore, #tpu.memory_space<semaphore_mem>>) attributes {dimension_semantics = [], scalar_prefetch = 0 : i64, scratch_operands = 7 : i64, tpu.core_type = #tpu.core_type<tc>} {
    %c0_i32 = arith.constant 0 : i32
    %c0_i32_0 = arith.constant 0 : i32
    %c0_i32_1 = arith.constant 0 : i32
    %0 = tpu.memref_slice %arg2[%c0_i32_0, %c0_i32_1] : memref<1984x256xbf16, #tpu.memory_space<any>> -> memref<400x256xbf16, #tpu.memory_space<any>>
    %c0_i32_2 = arith.constant 0 : i32
    %c0_i32_3 = arith.constant 0 : i32
    %1 = tpu.memref_slice %arg4[%c0_i32_2, %c0_i32_3] : memref<1984x256xbf16, #tpu.memory_space<vmem>> -> memref<400x256xbf16, #tpu.memory_space<vmem>>
    %2 = tpu.memref_slice %arg9[%c0_i32] : memref<3x!tpu.dma_semaphore, #tpu.memory_space<semaphore_mem>> -> memref<1x!tpu.dma_semaphore, #tpu.memory_space<semaphore_mem>>
    %3 = tpu.memref_squeeze %2 : memref<1x!tpu.dma_semaphore, #tpu.memory_space<semaphore_mem>> -> memref<!tpu.dma_semaphore, #tpu.memory_space<semaphore_mem>>
    tpu.enqueue_dma source(%0 : memref<400x256xbf16, #tpu.memory_space<any>>) target(%1 : memref<400x256xbf16, #tpu.memory_space<vmem>>) target_semaphore(%3 : memref<!tpu.dma_semaphore, #tpu.memory_space<semaphore_mem>>)
    %c0 = arith.constant 0 : index
    %c0_4 = arith.constant 0 : index
    %4 = memref.load %arg0[%c0, %c0_4] : memref<2x8xi32, #tpu.memory_space<smem>>
    %c0_i32_5 = arith.constant 0 : i32
    %c0_i32_6 = arith.constant 0 : i32
    %5 = tpu.memref_slice %arg1[%4, %c0_i32_6] : memref<40002x128xf32, #tpu.memory_space<any>> -> memref<1x128xf32, #tpu.memory_space<any>>
    %c0_i32_7 = arith.constant 0 : i32
    %c0_i32_8 = arith.constant 0 : i32
    %6 = tpu.memref_slice %arg5[%c0_i32_7, %c0_i32_8] : memref<64x128xf32, #tpu.memory_space<vmem>> -> memref<1x128xf32, #tpu.memory_space<vmem>>
    %7 = tpu.memref_slice %arg10[%c0_i32_5] : memref<16x!tpu.dma_semaphore, #tpu.memory_space<semaphore_mem>> -> memref<1x!tpu.dma_semaphore, #tpu.memory_space<semaphore_mem>>
    %8 = tpu.memref_squeeze %7 : memref<1x!tpu.dma_semaphore, #tpu.memory_space<semaphore_mem>> -> memref<!tpu.dma_semaphore, #tpu.memory_space<semaphore_mem>>
    tpu.enqueue_dma source(%5 : memref<1x128xf32, #tpu.memory_space<any>>) target(%6 : memref<1x128xf32, #tpu.memory_space<vmem>>) target_semaphore(%8 : memref<!tpu.dma_semaphore, #tpu.memory_space<semaphore_mem>>)
    %c1 = arith.constant 1 : index
    %c0_9 = arith.constant 0 : index
    %9 = memref.load %arg0[%c1, %c0_9] : memref<2x8xi32, #tpu.memory_space<smem>>
    %c1_i32 = arith.constant 1 : i32
    %c0_i32_10 = arith.constant 0 : i32
    %10 = tpu.memref_slice %arg1[%9, %c0_i32_10] : memref<40002x128xf32, #tpu.memory_space<any>> -> memref<1x128xf32, #tpu.memory_space<any>>
    %c1_i32_11 = arith.constant 1 : i32
    %c0_i32_12 = arith.constant 0 : i32
    %11 = tpu.memref_slice %arg5[%c1_i32_11, %c0_i32_12] : memref<64x128xf32, #tpu.memory_space<vmem>> -> memref<1x128xf32, #tpu.memory_space<vmem>>
    %12 = tpu.memref_slice %arg10[%c1_i32] : memref<16x!tpu.dma_semaphore, #tpu.memory_space<semaphore_mem>> -> memref<1x!tpu.dma_semaphore, #tpu.memory_space<semaphore_mem>>
    %13 = tpu.memref_squeeze %12 : memref<1x!tpu.dma_semaphore, #tpu.memory_space<semaphore_mem>> -> memref<!tpu.dma_semaphore, #tpu.memory_space<semaphore_mem>>
    tpu.enqueue_dma source(%10 : memref<1x128xf32, #tpu.memory_space<any>>) target(%11 : memref<1x128xf32, #tpu.memory_space<vmem>>) target_semaphore(%13 : memref<!tpu.dma_semaphore, #tpu.memory_space<semaphore_mem>>)
    %c0_13 = arith.constant 0 : index
    %c1_14 = arith.constant 1 : index
    %14 = memref.load %arg0[%c0_13, %c1_14] : memref<2x8xi32, #tpu.memory_space<smem>>
    %c2_i32 = arith.constant 2 : i32
    %c0_i32_15 = arith.constant 0 : i32
    %15 = tpu.memref_slice %arg1[%14, %c0_i32_15] : memref<40002x128xf32, #tpu.memory_space<any>> -> memref<1x128xf32, #tpu.memory_space<any>>
    %c8_i32 = arith.constant 8 : i32
    %c0_i32_16 = arith.constant 0 : i32
    %16 = tpu.memref_slice %arg5[%c8_i32, %c0_i32_16] : memref<64x128xf32, #tpu.memory_space<vmem>> -> memref<1x128xf32, #tpu.memory_space<vmem>>
    %17 = tpu.memref_slice %arg10[%c2_i32] : memref<16x!tpu.dma_semaphore, #tpu.memory_space<semaphore_mem>> -> memref<1x!tpu.dma_semaphore, #tpu.memory_space<semaphore_mem>>
    %18 = tpu.memref_squeeze %17 : memref<1x!tpu.dma_semaphore, #tpu.memory_space<semaphore_mem>> -> memref<!tpu.dma_semaphore, #tpu.memory_space<semaphore_mem>>
    tpu.enqueue_dma source(%15 : memref<1x128xf32, #tpu.memory_space<any>>) target(%16 : memref<1x128xf32, #tpu.memory_space<vmem>>) target_semaphore(%18 : memref<!tpu.dma_semaphore, #tpu.memory_space<semaphore_mem>>)
    %c1_17 = arith.constant 1 : index
    %c1_18 = arith.constant 1 : index
    %19 = memref.load %arg0[%c1_17, %c1_18] : memref<2x8xi32, #tpu.memory_space<smem>>
    %c3_i32 = arith.constant 3 : i32
    %c0_i32_19 = arith.constant 0 : i32
    %20 = tpu.memref_slice %arg1[%19, %c0_i32_19] : memref<40002x128xf32, #tpu.memory_space<any>> -> memref<1x128xf32, #tpu.memory_space<any>>
    %c9_i32 = arith.constant 9 : i32
    %c0_i32_20 = arith.constant 0 : i32
    %21 = tpu.memref_slice %arg5[%c9_i32, %c0_i32_20] : memref<64x128xf32, #tpu.memory_space<vmem>> -> memref<1x128xf32, #tpu.memory_space<vmem>>
    %22 = tpu.memref_slice %arg10[%c3_i32] : memref<16x!tpu.dma_semaphore, #tpu.memory_space<semaphore_mem>> -> memref<1x!tpu.dma_semaphore, #tpu.memory_space<semaphore_mem>>
    %23 = tpu.memref_squeeze %22 : memref<1x!tpu.dma_semaphore, #tpu.memory_space<semaphore_mem>> -> memref<!tpu.dma_semaphore, #tpu.memory_space<semaphore_mem>>
    tpu.enqueue_dma source(%20 : memref<1x128xf32, #tpu.memory_space<any>>) target(%21 : memref<1x128xf32, #tpu.memory_space<vmem>>) target_semaphore(%23 : memref<!tpu.dma_semaphore, #tpu.memory_space<semaphore_mem>>)
    %c0_21 = arith.constant 0 : index
    %c2 = arith.constant 2 : index
    %24 = memref.load %arg0[%c0_21, %c2] : memref<2x8xi32, #tpu.memory_space<smem>>
    %c4_i32 = arith.constant 4 : i32
    %c0_i32_22 = arith.constant 0 : i32
    %25 = tpu.memref_slice %arg1[%24, %c0_i32_22] : memref<40002x128xf32, #tpu.memory_space<any>> -> memref<1x128xf32, #tpu.memory_space<any>>
    %c16_i32 = arith.constant 16 : i32
    %c0_i32_23 = arith.constant 0 : i32
    %26 = tpu.memref_slice %arg5[%c16_i32, %c0_i32_23] : memref<64x128xf32, #tpu.memory_space<vmem>> -> memref<1x128xf32, #tpu.memory_space<vmem>>
    %27 = tpu.memref_slice %arg10[%c4_i32] : memref<16x!tpu.dma_semaphore, #tpu.memory_space<semaphore_mem>> -> memref<1x!tpu.dma_semaphore, #tpu.memory_space<semaphore_mem>>
    %28 = tpu.memref_squeeze %27 : memref<1x!tpu.dma_semaphore, #tpu.memory_space<semaphore_mem>> -> memref<!tpu.dma_semaphore, #tpu.memory_space<semaphore_mem>>
    tpu.enqueue_dma source(%25 : memref<1x128xf32, #tpu.memory_space<any>>) target(%26 : memref<1x128xf32, #tpu.memory_space<vmem>>) target_semaphore(%28 : memref<!tpu.dma_semaphore, #tpu.memory_space<semaphore_mem>>)
    %c1_24 = arith.constant 1 : index
    %c2_25 = arith.constant 2 : index
    %29 = memref.load %arg0[%c1_24, %c2_25] : memref<2x8xi32, #tpu.memory_space<smem>>
    %c5_i32 = arith.constant 5 : i32
    %c0_i32_26 = arith.constant 0 : i32
    %30 = tpu.memref_slice %arg1[%29, %c0_i32_26] : memref<40002x128xf32, #tpu.memory_space<any>> -> memref<1x128xf32, #tpu.memory_space<any>>
    %c17_i32 = arith.constant 17 : i32
    %c0_i32_27 = arith.constant 0 : i32
    %31 = tpu.memref_slice %arg5[%c17_i32, %c0_i32_27] : memref<64x128xf32, #tpu.memory_space<vmem>> -> memref<1x128xf32, #tpu.memory_space<vmem>>
    %32 = tpu.memref_slice %arg10[%c5_i32] : memref<16x!tpu.dma_semaphore, #tpu.memory_space<semaphore_mem>> -> memref<1x!tpu.dma_semaphore, #tpu.memory_space<semaphore_mem>>
    %33 = tpu.memref_squeeze %32 : memref<1x!tpu.dma_semaphore, #tpu.memory_space<semaphore_mem>> -> memref<!tpu.dma_semaphore, #tpu.memory_space<semaphore_mem>>
    tpu.enqueue_dma source(%30 : memref<1x128xf32, #tpu.memory_space<any>>) target(%31 : memref<1x128xf32, #tpu.memory_space<vmem>>) target_semaphore(%33 : memref<!tpu.dma_semaphore, #tpu.memory_space<semaphore_mem>>)
    %c0_28 = arith.constant 0 : index
    %c3 = arith.constant 3 : index
    %34 = memref.load %arg0[%c0_28, %c3] : memref<2x8xi32, #tpu.memory_space<smem>>
    %c6_i32 = arith.constant 6 : i32
    %c0_i32_29 = arith.constant 0 : i32
    %35 = tpu.memref_slice %arg1[%34, %c0_i32_29] : memref<40002x128xf32, #tpu.memory_space<any>> -> memref<1x128xf32, #tpu.memory_space<any>>
    %c24_i32 = arith.constant 24 : i32
    %c0_i32_30 = arith.constant 0 : i32
    %36 = tpu.memref_slice %arg5[%c24_i32, %c0_i32_30] : memref<64x128xf32, #tpu.memory_space<vmem>> -> memref<1x128xf32, #tpu.memory_space<vmem>>
    %37 = tpu.memref_slice %arg10[%c6_i32] : memref<16x!tpu.dma_semaphore, #tpu.memory_space<semaphore_mem>> -> memref<1x!tpu.dma_semaphore, #tpu.memory_space<semaphore_mem>>
    %38 = tpu.memref_squeeze %37 : memref<1x!tpu.dma_semaphore, #tpu.memory_space<semaphore_mem>> -> memref<!tpu.dma_semaphore, #tpu.memory_space<semaphore_mem>>
    tpu.enqueue_dma source(%35 : memref<1x128xf32, #tpu.memory_space<any>>) target(%36 : memref<1x128xf32, #tpu.memory_space<vmem>>) target_semaphore(%38 : memref<!tpu.dma_semaphore, #tpu.memory_space<semaphore_mem>>)
    %c1_31 = arith.constant 1 : index
    %c3_32 = arith.constant 3 : index
    %39 = memref.load %arg0[%c1_31, %c3_32] : memref<2x8xi32, #tpu.memory_space<smem>>
    %c7_i32 = arith.constant 7 : i32
    %c0_i32_33 = arith.constant 0 : i32
    %40 = tpu.memref_slice %arg1[%39, %c0_i32_33] : memref<40002x128xf32, #tpu.memory_space<any>> -> memref<1x128xf32, #tpu.memory_space<any>>
    %c25_i32 = arith.constant 25 : i32
    %c0_i32_34 = arith.constant 0 : i32
    %41 = tpu.memref_slice %arg5[%c25_i32, %c0_i32_34] : memref<64x128xf32, #tpu.memory_space<vmem>> -> memref<1x128xf32, #tpu.memory_space<vmem>>
    %42 = tpu.memref_slice %arg10[%c7_i32] : memref<16x!tpu.dma_semaphore, #tpu.memory_space<semaphore_mem>> -> memref<1x!tpu.dma_semaphore, #tpu.memory_space<semaphore_mem>>
    %43 = tpu.memref_squeeze %42 : memref<1x!tpu.dma_semaphore, #tpu.memory_space<semaphore_mem>> -> memref<!tpu.dma_semaphore, #tpu.memory_space<semaphore_mem>>
    tpu.enqueue_dma source(%40 : memref<1x128xf32, #tpu.memory_space<any>>) target(%41 : memref<1x128xf32, #tpu.memory_space<vmem>>) target_semaphore(%43 : memref<!tpu.dma_semaphore, #tpu.memory_space<semaphore_mem>>)
    %c0_35 = arith.constant 0 : index
    %c4 = arith.constant 4 : index
    %44 = memref.load %arg0[%c0_35, %c4] : memref<2x8xi32, #tpu.memory_space<smem>>
    %c8_i32_36 = arith.constant 8 : i32
    %c0_i32_37 = arith.constant 0 : i32
    %45 = tpu.memref_slice %arg1[%44, %c0_i32_37] : memref<40002x128xf32, #tpu.memory_space<any>> -> memref<1x128xf32, #tpu.memory_space<any>>
    %c32_i32 = arith.constant 32 : i32
    %c0_i32_38 = arith.constant 0 : i32
    %46 = tpu.memref_slice %arg5[%c32_i32, %c0_i32_38] : memref<64x128xf32, #tpu.memory_space<vmem>> -> memref<1x128xf32, #tpu.memory_space<vmem>>
    %47 = tpu.memref_slice %arg10[%c8_i32_36] : memref<16x!tpu.dma_semaphore, #tpu.memory_space<semaphore_mem>> -> memref<1x!tpu.dma_semaphore, #tpu.memory_space<semaphore_mem>>
    %48 = tpu.memref_squeeze %47 : memref<1x!tpu.dma_semaphore, #tpu.memory_space<semaphore_mem>> -> memref<!tpu.dma_semaphore, #tpu.memory_space<semaphore_mem>>
    tpu.enqueue_dma source(%45 : memref<1x128xf32, #tpu.memory_space<any>>) target(%46 : memref<1x128xf32, #tpu.memory_space<vmem>>) target_semaphore(%48 : memref<!tpu.dma_semaphore, #tpu.memory_space<semaphore_mem>>)
    %c1_39 = arith.constant 1 : index
    %c4_40 = arith.constant 4 : index
    %49 = memref.load %arg0[%c1_39, %c4_40] : memref<2x8xi32, #tpu.memory_space<smem>>
    %c9_i32_41 = arith.constant 9 : i32
    %c0_i32_42 = arith.constant 0 : i32
    %50 = tpu.memref_slice %arg1[%49, %c0_i32_42] : memref<40002x128xf32, #tpu.memory_space<any>> -> memref<1x128xf32, #tpu.memory_space<any>>
    %c33_i32 = arith.constant 33 : i32
    %c0_i32_43 = arith.constant 0 : i32
    %51 = tpu.memref_slice %arg5[%c33_i32, %c0_i32_43] : memref<64x128xf32, #tpu.memory_space<vmem>> -> memref<1x128xf32, #tpu.memory_space<vmem>>
    %52 = tpu.memref_slice %arg10[%c9_i32_41] : memref<16x!tpu.dma_semaphore, #tpu.memory_space<semaphore_mem>> -> memref<1x!tpu.dma_semaphore, #tpu.memory_space<semaphore_mem>>
    %53 = tpu.memref_squeeze %52 : memref<1x!tpu.dma_semaphore, #tpu.memory_space<semaphore_mem>> -> memref<!tpu.dma_semaphore, #tpu.memory_space<semaphore_mem>>
    tpu.enqueue_dma source(%50 : memref<1x128xf32, #tpu.memory_space<any>>) target(%51 : memref<1x128xf32, #tpu.memory_space<vmem>>) target_semaphore(%53 : memref<!tpu.dma_semaphore, #tpu.memory_space<semaphore_mem>>)
    %c0_44 = arith.constant 0 : index
    %c5 = arith.constant 5 : index
    %54 = memref.load %arg0[%c0_44, %c5] : memref<2x8xi32, #tpu.memory_space<smem>>
    %c10_i32 = arith.constant 10 : i32
    %c0_i32_45 = arith.constant 0 : i32
    %55 = tpu.memref_slice %arg1[%54, %c0_i32_45] : memref<40002x128xf32, #tpu.memory_space<any>> -> memref<1x128xf32, #tpu.memory_space<any>>
    %c40_i32 = arith.constant 40 : i32
    %c0_i32_46 = arith.constant 0 : i32
    %56 = tpu.memref_slice %arg5[%c40_i32, %c0_i32_46] : memref<64x128xf32, #tpu.memory_space<vmem>> -> memref<1x128xf32, #tpu.memory_space<vmem>>
    %57 = tpu.memref_slice %arg10[%c10_i32] : memref<16x!tpu.dma_semaphore, #tpu.memory_space<semaphore_mem>> -> memref<1x!tpu.dma_semaphore, #tpu.memory_space<semaphore_mem>>
    %58 = tpu.memref_squeeze %57 : memref<1x!tpu.dma_semaphore, #tpu.memory_space<semaphore_mem>> -> memref<!tpu.dma_semaphore, #tpu.memory_space<semaphore_mem>>
    tpu.enqueue_dma source(%55 : memref<1x128xf32, #tpu.memory_space<any>>) target(%56 : memref<1x128xf32, #tpu.memory_space<vmem>>) target_semaphore(%58 : memref<!tpu.dma_semaphore, #tpu.memory_space<semaphore_mem>>)
    %c1_47 = arith.constant 1 : index
    %c5_48 = arith.constant 5 : index
    %59 = memref.load %arg0[%c1_47, %c5_48] : memref<2x8xi32, #tpu.memory_space<smem>>
    %c11_i32 = arith.constant 11 : i32
    %c0_i32_49 = arith.constant 0 : i32
    %60 = tpu.memref_slice %arg1[%59, %c0_i32_49] : memref<40002x128xf32, #tpu.memory_space<any>> -> memref<1x128xf32, #tpu.memory_space<any>>
    %c41_i32 = arith.constant 41 : i32
    %c0_i32_50 = arith.constant 0 : i32
    %61 = tpu.memref_slice %arg5[%c41_i32, %c0_i32_50] : memref<64x128xf32, #tpu.memory_space<vmem>> -> memref<1x128xf32, #tpu.memory_space<vmem>>
    %62 = tpu.memref_slice %arg10[%c11_i32] : memref<16x!tpu.dma_semaphore, #tpu.memory_space<semaphore_mem>> -> memref<1x!tpu.dma_semaphore, #tpu.memory_space<semaphore_mem>>
    %63 = tpu.memref_squeeze %62 : memref<1x!tpu.dma_semaphore, #tpu.memory_space<semaphore_mem>> -> memref<!tpu.dma_semaphore, #tpu.memory_space<semaphore_mem>>
    tpu.enqueue_dma source(%60 : memref<1x128xf32, #tpu.memory_space<any>>) target(%61 : memref<1x128xf32, #tpu.memory_space<vmem>>) target_semaphore(%63 : memref<!tpu.dma_semaphore, #tpu.memory_space<semaphore_mem>>)
    %c0_51 = arith.constant 0 : index
    %c6 = arith.constant 6 : index
    %64 = memref.load %arg0[%c0_51, %c6] : memref<2x8xi32, #tpu.memory_space<smem>>
    %c12_i32 = arith.constant 12 : i32
    %c0_i32_52 = arith.constant 0 : i32
    %65 = tpu.memref_slice %arg1[%64, %c0_i32_52] : memref<40002x128xf32, #tpu.memory_space<any>> -> memref<1x128xf32, #tpu.memory_space<any>>
    %c48_i32 = arith.constant 48 : i32
    %c0_i32_53 = arith.constant 0 : i32
    %66 = tpu.memref_slice %arg5[%c48_i32, %c0_i32_53] : memref<64x128xf32, #tpu.memory_space<vmem>> -> memref<1x128xf32, #tpu.memory_space<vmem>>
    %67 = tpu.memref_slice %arg10[%c12_i32] : memref<16x!tpu.dma_semaphore, #tpu.memory_space<semaphore_mem>> -> memref<1x!tpu.dma_semaphore, #tpu.memory_space<semaphore_mem>>
    %68 = tpu.memref_squeeze %67 : memref<1x!tpu.dma_semaphore, #tpu.memory_space<semaphore_mem>> -> memref<!tpu.dma_semaphore, #tpu.memory_space<semaphore_mem>>
    tpu.enqueue_dma source(%65 : memref<1x128xf32, #tpu.memory_space<any>>) target(%66 : memref<1x128xf32, #tpu.memory_space<vmem>>) target_semaphore(%68 : memref<!tpu.dma_semaphore, #tpu.memory_space<semaphore_mem>>)
    %c1_54 = arith.constant 1 : index
    %c6_55 = arith.constant 6 : index
    %69 = memref.load %arg0[%c1_54, %c6_55] : memref<2x8xi32, #tpu.memory_space<smem>>
    %c13_i32 = arith.constant 13 : i32
    %c0_i32_56 = arith.constant 0 : i32
    %70 = tpu.memref_slice %arg1[%69, %c0_i32_56] : memref<40002x128xf32, #tpu.memory_space<any>> -> memref<1x128xf32, #tpu.memory_space<any>>
    %c49_i32 = arith.constant 49 : i32
    %c0_i32_57 = arith.constant 0 : i32
    %71 = tpu.memref_slice %arg5[%c49_i32, %c0_i32_57] : memref<64x128xf32, #tpu.memory_space<vmem>> -> memref<1x128xf32, #tpu.memory_space<vmem>>
    %72 = tpu.memref_slice %arg10[%c13_i32] : memref<16x!tpu.dma_semaphore, #tpu.memory_space<semaphore_mem>> -> memref<1x!tpu.dma_semaphore, #tpu.memory_space<semaphore_mem>>
    %73 = tpu.memref_squeeze %72 : memref<1x!tpu.dma_semaphore, #tpu.memory_space<semaphore_mem>> -> memref<!tpu.dma_semaphore, #tpu.memory_space<semaphore_mem>>
    tpu.enqueue_dma source(%70 : memref<1x128xf32, #tpu.memory_space<any>>) target(%71 : memref<1x128xf32, #tpu.memory_space<vmem>>) target_semaphore(%73 : memref<!tpu.dma_semaphore, #tpu.memory_space<semaphore_mem>>)
    %c0_58 = arith.constant 0 : index
    %c7 = arith.constant 7 : index
    %74 = memref.load %arg0[%c0_58, %c7] : memref<2x8xi32, #tpu.memory_space<smem>>
    %c14_i32 = arith.constant 14 : i32
    %c0_i32_59 = arith.constant 0 : i32
    %75 = tpu.memref_slice %arg1[%74, %c0_i32_59] : memref<40002x128xf32, #tpu.memory_space<any>> -> memref<1x128xf32, #tpu.memory_space<any>>
    %c56_i32 = arith.constant 56 : i32
    %c0_i32_60 = arith.constant 0 : i32
    %76 = tpu.memref_slice %arg5[%c56_i32, %c0_i32_60] : memref<64x128xf32, #tpu.memory_space<vmem>> -> memref<1x128xf32, #tpu.memory_space<vmem>>
    %77 = tpu.memref_slice %arg10[%c14_i32] : memref<16x!tpu.dma_semaphore, #tpu.memory_space<semaphore_mem>> -> memref<1x!tpu.dma_semaphore, #tpu.memory_space<semaphore_mem>>
    %78 = tpu.memref_squeeze %77 : memref<1x!tpu.dma_semaphore, #tpu.memory_space<semaphore_mem>> -> memref<!tpu.dma_semaphore, #tpu.memory_space<semaphore_mem>>
    tpu.enqueue_dma source(%75 : memref<1x128xf32, #tpu.memory_space<any>>) target(%76 : memref<1x128xf32, #tpu.memory_space<vmem>>) target_semaphore(%78 : memref<!tpu.dma_semaphore, #tpu.memory_space<semaphore_mem>>)
    %c1_61 = arith.constant 1 : index
    %c7_62 = arith.constant 7 : index
    %79 = memref.load %arg0[%c1_61, %c7_62] : memref<2x8xi32, #tpu.memory_space<smem>>
    %c15_i32 = arith.constant 15 : i32
    %c0_i32_63 = arith.constant 0 : i32
    %80 = tpu.memref_slice %arg1[%79, %c0_i32_63] : memref<40002x128xf32, #tpu.memory_space<any>> -> memref<1x128xf32, #tpu.memory_space<any>>
    %c57_i32 = arith.constant 57 : i32
    %c0_i32_64 = arith.constant 0 : i32
    %81 = tpu.memref_slice %arg5[%c57_i32, %c0_i32_64] : memref<64x128xf32, #tpu.memory_space<vmem>> -> memref<1x128xf32, #tpu.memory_space<vmem>>
    %82 = tpu.memref_slice %arg10[%c15_i32] : memref<16x!tpu.dma_semaphore, #tpu.memory_space<semaphore_mem>> -> memref<1x!tpu.dma_semaphore, #tpu.memory_space<semaphore_mem>>
    %83 = tpu.memref_squeeze %82 : memref<1x!tpu.dma_semaphore, #tpu.memory_space<semaphore_mem>> -> memref<!tpu.dma_semaphore, #tpu.memory_space<semaphore_mem>>
    tpu.enqueue_dma source(%80 : memref<1x128xf32, #tpu.memory_space<any>>) target(%81 : memref<1x128xf32, #tpu.memory_space<vmem>>) target_semaphore(%83 : memref<!tpu.dma_semaphore, #tpu.memory_space<semaphore_mem>>)
    %c1_i32_65 = arith.constant 1 : i32
    %c400_i32 = arith.constant 400 : i32
    %c0_i32_66 = arith.constant 0 : i32
    %84 = tpu.memref_slice %arg2[%c400_i32, %c0_i32_66] : memref<1984x256xbf16, #tpu.memory_space<any>> -> memref<528x256xbf16, #tpu.memory_space<any>>
    %c400_i32_67 = arith.constant 400 : i32
    %c0_i32_68 = arith.constant 0 : i32
    %85 = tpu.memref_slice %arg4[%c400_i32_67, %c0_i32_68] : memref<1984x256xbf16, #tpu.memory_space<vmem>> -> memref<528x256xbf16, #tpu.memory_space<vmem>>
    %86 = tpu.memref_slice %arg9[%c1_i32_65] : memref<3x!tpu.dma_semaphore, #tpu.memory_space<semaphore_mem>> -> memref<1x!tpu.dma_semaphore, #tpu.memory_space<semaphore_mem>>
    %87 = tpu.memref_squeeze %86 : memref<1x!tpu.dma_semaphore, #tpu.memory_space<semaphore_mem>> -> memref<!tpu.dma_semaphore, #tpu.memory_space<semaphore_mem>>
    tpu.enqueue_dma source(%84 : memref<528x256xbf16, #tpu.memory_space<any>>) target(%85 : memref<528x256xbf16, #tpu.memory_space<vmem>>) target_semaphore(%87 : memref<!tpu.dma_semaphore, #tpu.memory_space<semaphore_mem>>)
    %c2_i32_69 = arith.constant 2 : i32
    %c928_i32 = arith.constant 928 : i32
    %c0_i32_70 = arith.constant 0 : i32
    %88 = tpu.memref_slice %arg2[%c928_i32, %c0_i32_70] : memref<1984x256xbf16, #tpu.memory_space<any>> -> memref<1056x256xbf16, #tpu.memory_space<any>>
    %c928_i32_71 = arith.constant 928 : i32
    %c0_i32_72 = arith.constant 0 : i32
    %89 = tpu.memref_slice %arg4[%c928_i32_71, %c0_i32_72] : memref<1984x256xbf16, #tpu.memory_space<vmem>> -> memref<1056x256xbf16, #tpu.memory_space<vmem>>
    %90 = tpu.memref_slice %arg9[%c2_i32_69] : memref<3x!tpu.dma_semaphore, #tpu.memory_space<semaphore_mem>> -> memref<1x!tpu.dma_semaphore, #tpu.memory_space<semaphore_mem>>
    %91 = tpu.memref_squeeze %90 : memref<1x!tpu.dma_semaphore, #tpu.memory_space<semaphore_mem>> -> memref<!tpu.dma_semaphore, #tpu.memory_space<semaphore_mem>>
    tpu.enqueue_dma source(%88 : memref<1056x256xbf16, #tpu.memory_space<any>>) target(%89 : memref<1056x256xbf16, #tpu.memory_space<vmem>>) target_semaphore(%91 : memref<!tpu.dma_semaphore, #tpu.memory_space<semaphore_mem>>)
    %c0_i32_73 = arith.constant 0 : i32
    %c0_i32_74 = arith.constant 0 : i32
    %c0_i32_75 = arith.constant 0 : i32
    %92 = tpu.memref_slice %arg2[%c0_i32_74, %c0_i32_75] : memref<1984x256xbf16, #tpu.memory_space<any>> -> memref<400x256xbf16, #tpu.memory_space<any>>
    %c0_i32_76 = arith.constant 0 : i32
    %c0_i32_77 = arith.constant 0 : i32
    %93 = tpu.memref_slice %arg4[%c0_i32_76, %c0_i32_77] : memref<1984x256xbf16, #tpu.memory_space<vmem>> -> memref<400x256xbf16, #tpu.memory_space<vmem>>
    %94 = tpu.memref_slice %arg9[%c0_i32_73] : memref<3x!tpu.dma_semaphore, #tpu.memory_space<semaphore_mem>> -> memref<1x!tpu.dma_semaphore, #tpu.memory_space<semaphore_mem>>
    %95 = tpu.memref_squeeze %94 : memref<1x!tpu.dma_semaphore, #tpu.memory_space<semaphore_mem>> -> memref<!tpu.dma_semaphore, #tpu.memory_space<semaphore_mem>>
    tpu.wait_dma2 semaphore(%95 : memref<!tpu.dma_semaphore, #tpu.memory_space<semaphore_mem>>) src(%92 : memref<400x256xbf16, #tpu.memory_space<any>>) dst(%93 : memref<400x256xbf16, #tpu.memory_space<vmem>>)
    %c0_i32_78 = arith.constant 0 : i32
    %c0_i32_79 = arith.constant 0 : i32
    %96 = tpu.memref_slice %arg1[%4, %c0_i32_79] : memref<40002x128xf32, #tpu.memory_space<any>> -> memref<1x128xf32, #tpu.memory_space<any>>
    %c0_i32_80 = arith.constant 0 : i32
    %c0_i32_81 = arith.constant 0 : i32
    %97 = tpu.memref_slice %arg5[%c0_i32_80, %c0_i32_81] : memref<64x128xf32, #tpu.memory_space<vmem>> -> memref<1x128xf32, #tpu.memory_space<vmem>>
    %98 = tpu.memref_slice %arg10[%c0_i32_78] : memref<16x!tpu.dma_semaphore, #tpu.memory_space<semaphore_mem>> -> memref<1x!tpu.dma_semaphore, #tpu.memory_space<semaphore_mem>>
    %99 = tpu.memref_squeeze %98 : memref<1x!tpu.dma_semaphore, #tpu.memory_space<semaphore_mem>> -> memref<!tpu.dma_semaphore, #tpu.memory_space<semaphore_mem>>
    tpu.wait_dma2 semaphore(%99 : memref<!tpu.dma_semaphore, #tpu.memory_space<semaphore_mem>>) src(%96 : memref<1x128xf32, #tpu.memory_space<any>>) dst(%97 : memref<1x128xf32, #tpu.memory_space<vmem>>)
    %c1_i32_82 = arith.constant 1 : i32
    %c0_i32_83 = arith.constant 0 : i32
    %100 = tpu.memref_slice %arg1[%9, %c0_i32_83] : memref<40002x128xf32, #tpu.memory_space<any>> -> memref<1x128xf32, #tpu.memory_space<any>>
    %c1_i32_84 = arith.constant 1 : i32
    %c0_i32_85 = arith.constant 0 : i32
    %101 = tpu.memref_slice %arg5[%c1_i32_84, %c0_i32_85] : memref<64x128xf32, #tpu.memory_space<vmem>> -> memref<1x128xf32, #tpu.memory_space<vmem>>
    %102 = tpu.memref_slice %arg10[%c1_i32_82] : memref<16x!tpu.dma_semaphore, #tpu.memory_space<semaphore_mem>> -> memref<1x!tpu.dma_semaphore, #tpu.memory_space<semaphore_mem>>
    %103 = tpu.memref_squeeze %102 : memref<1x!tpu.dma_semaphore, #tpu.memory_space<semaphore_mem>> -> memref<!tpu.dma_semaphore, #tpu.memory_space<semaphore_mem>>
    tpu.wait_dma2 semaphore(%103 : memref<!tpu.dma_semaphore, #tpu.memory_space<semaphore_mem>>) src(%100 : memref<1x128xf32, #tpu.memory_space<any>>) dst(%101 : memref<1x128xf32, #tpu.memory_space<vmem>>)
    %c2_i32_86 = arith.constant 2 : i32
    %c0_i32_87 = arith.constant 0 : i32
    %104 = tpu.memref_slice %arg1[%14, %c0_i32_87] : memref<40002x128xf32, #tpu.memory_space<any>> -> memref<1x128xf32, #tpu.memory_space<any>>
    %c8_i32_88 = arith.constant 8 : i32
    %c0_i32_89 = arith.constant 0 : i32
    %105 = tpu.memref_slice %arg5[%c8_i32_88, %c0_i32_89] : memref<64x128xf32, #tpu.memory_space<vmem>> -> memref<1x128xf32, #tpu.memory_space<vmem>>
    %106 = tpu.memref_slice %arg10[%c2_i32_86] : memref<16x!tpu.dma_semaphore, #tpu.memory_space<semaphore_mem>> -> memref<1x!tpu.dma_semaphore, #tpu.memory_space<semaphore_mem>>
    %107 = tpu.memref_squeeze %106 : memref<1x!tpu.dma_semaphore, #tpu.memory_space<semaphore_mem>> -> memref<!tpu.dma_semaphore, #tpu.memory_space<semaphore_mem>>
    tpu.wait_dma2 semaphore(%107 : memref<!tpu.dma_semaphore, #tpu.memory_space<semaphore_mem>>) src(%104 : memref<1x128xf32, #tpu.memory_space<any>>) dst(%105 : memref<1x128xf32, #tpu.memory_space<vmem>>)
    %c3_i32_90 = arith.constant 3 : i32
    %c0_i32_91 = arith.constant 0 : i32
    %108 = tpu.memref_slice %arg1[%19, %c0_i32_91] : memref<40002x128xf32, #tpu.memory_space<any>> -> memref<1x128xf32, #tpu.memory_space<any>>
    %c9_i32_92 = arith.constant 9 : i32
    %c0_i32_93 = arith.constant 0 : i32
    %109 = tpu.memref_slice %arg5[%c9_i32_92, %c0_i32_93] : memref<64x128xf32, #tpu.memory_space<vmem>> -> memref<1x128xf32, #tpu.memory_space<vmem>>
    %110 = tpu.memref_slice %arg10[%c3_i32_90] : memref<16x!tpu.dma_semaphore, #tpu.memory_space<semaphore_mem>> -> memref<1x!tpu.dma_semaphore, #tpu.memory_space<semaphore_mem>>
    %111 = tpu.memref_squeeze %110 : memref<1x!tpu.dma_semaphore, #tpu.memory_space<semaphore_mem>> -> memref<!tpu.dma_semaphore, #tpu.memory_space<semaphore_mem>>
    tpu.wait_dma2 semaphore(%111 : memref<!tpu.dma_semaphore, #tpu.memory_space<semaphore_mem>>) src(%108 : memref<1x128xf32, #tpu.memory_space<any>>) dst(%109 : memref<1x128xf32, #tpu.memory_space<vmem>>)
    %c4_i32_94 = arith.constant 4 : i32
    %c0_i32_95 = arith.constant 0 : i32
    %112 = tpu.memref_slice %arg1[%24, %c0_i32_95] : memref<40002x128xf32, #tpu.memory_space<any>> -> memref<1x128xf32, #tpu.memory_space<any>>
    %c16_i32_96 = arith.constant 16 : i32
    %c0_i32_97 = arith.constant 0 : i32
    %113 = tpu.memref_slice %arg5[%c16_i32_96, %c0_i32_97] : memref<64x128xf32, #tpu.memory_space<vmem>> -> memref<1x128xf32, #tpu.memory_space<vmem>>
    %114 = tpu.memref_slice %arg10[%c4_i32_94] : memref<16x!tpu.dma_semaphore, #tpu.memory_space<semaphore_mem>> -> memref<1x!tpu.dma_semaphore, #tpu.memory_space<semaphore_mem>>
    %115 = tpu.memref_squeeze %114 : memref<1x!tpu.dma_semaphore, #tpu.memory_space<semaphore_mem>> -> memref<!tpu.dma_semaphore, #tpu.memory_space<semaphore_mem>>
    tpu.wait_dma2 semaphore(%115 : memref<!tpu.dma_semaphore, #tpu.memory_space<semaphore_mem>>) src(%112 : memref<1x128xf32, #tpu.memory_space<any>>) dst(%113 : memref<1x128xf32, #tpu.memory_space<vmem>>)
    %c5_i32_98 = arith.constant 5 : i32
    %c0_i32_99 = arith.constant 0 : i32
    %116 = tpu.memref_slice %arg1[%29, %c0_i32_99] : memref<40002x128xf32, #tpu.memory_space<any>> -> memref<1x128xf32, #tpu.memory_space<any>>
    %c17_i32_100 = arith.constant 17 : i32
    %c0_i32_101 = arith.constant 0 : i32
    %117 = tpu.memref_slice %arg5[%c17_i32_100, %c0_i32_101] : memref<64x128xf32, #tpu.memory_space<vmem>> -> memref<1x128xf32, #tpu.memory_space<vmem>>
    %118 = tpu.memref_slice %arg10[%c5_i32_98] : memref<16x!tpu.dma_semaphore, #tpu.memory_space<semaphore_mem>> -> memref<1x!tpu.dma_semaphore, #tpu.memory_space<semaphore_mem>>
    %119 = tpu.memref_squeeze %118 : memref<1x!tpu.dma_semaphore, #tpu.memory_space<semaphore_mem>> -> memref<!tpu.dma_semaphore, #tpu.memory_space<semaphore_mem>>
    tpu.wait_dma2 semaphore(%119 : memref<!tpu.dma_semaphore, #tpu.memory_space<semaphore_mem>>) src(%116 : memref<1x128xf32, #tpu.memory_space<any>>) dst(%117 : memref<1x128xf32, #tpu.memory_space<vmem>>)
    %c6_i32_102 = arith.constant 6 : i32
    %c0_i32_103 = arith.constant 0 : i32
    %120 = tpu.memref_slice %arg1[%34, %c0_i32_103] : memref<40002x128xf32, #tpu.memory_space<any>> -> memref<1x128xf32, #tpu.memory_space<any>>
    %c24_i32_104 = arith.constant 24 : i32
    %c0_i32_105 = arith.constant 0 : i32
    %121 = tpu.memref_slice %arg5[%c24_i32_104, %c0_i32_105] : memref<64x128xf32, #tpu.memory_space<vmem>> -> memref<1x128xf32, #tpu.memory_space<vmem>>
    %122 = tpu.memref_slice %arg10[%c6_i32_102] : memref<16x!tpu.dma_semaphore, #tpu.memory_space<semaphore_mem>> -> memref<1x!tpu.dma_semaphore, #tpu.memory_space<semaphore_mem>>
    %123 = tpu.memref_squeeze %122 : memref<1x!tpu.dma_semaphore, #tpu.memory_space<semaphore_mem>> -> memref<!tpu.dma_semaphore, #tpu.memory_space<semaphore_mem>>
    tpu.wait_dma2 semaphore(%123 : memref<!tpu.dma_semaphore, #tpu.memory_space<semaphore_mem>>) src(%120 : memref<1x128xf32, #tpu.memory_space<any>>) dst(%121 : memref<1x128xf32, #tpu.memory_space<vmem>>)
    %c7_i32_106 = arith.constant 7 : i32
    %c0_i32_107 = arith.constant 0 : i32
    %124 = tpu.memref_slice %arg1[%39, %c0_i32_107] : memref<40002x128xf32, #tpu.memory_space<any>> -> memref<1x128xf32, #tpu.memory_space<any>>
    %c25_i32_108 = arith.constant 25 : i32
    %c0_i32_109 = arith.constant 0 : i32
    %125 = tpu.memref_slice %arg5[%c25_i32_108, %c0_i32_109] : memref<64x128xf32, #tpu.memory_space<vmem>> -> memref<1x128xf32, #tpu.memory_space<vmem>>
    %126 = tpu.memref_slice %arg10[%c7_i32_106] : memref<16x!tpu.dma_semaphore, #tpu.memory_space<semaphore_mem>> -> memref<1x!tpu.dma_semaphore, #tpu.memory_space<semaphore_mem>>
    %127 = tpu.memref_squeeze %126 : memref<1x!tpu.dma_semaphore, #tpu.memory_space<semaphore_mem>> -> memref<!tpu.dma_semaphore, #tpu.memory_space<semaphore_mem>>
    tpu.wait_dma2 semaphore(%127 : memref<!tpu.dma_semaphore, #tpu.memory_space<semaphore_mem>>) src(%124 : memref<1x128xf32, #tpu.memory_space<any>>) dst(%125 : memref<1x128xf32, #tpu.memory_space<vmem>>)
    %c8_i32_110 = arith.constant 8 : i32
    %c0_i32_111 = arith.constant 0 : i32
    %128 = tpu.memref_slice %arg1[%44, %c0_i32_111] : memref<40002x128xf32, #tpu.memory_space<any>> -> memref<1x128xf32, #tpu.memory_space<any>>
    %c32_i32_112 = arith.constant 32 : i32
    %c0_i32_113 = arith.constant 0 : i32
    %129 = tpu.memref_slice %arg5[%c32_i32_112, %c0_i32_113] : memref<64x128xf32, #tpu.memory_space<vmem>> -> memref<1x128xf32, #tpu.memory_space<vmem>>
    %130 = tpu.memref_slice %arg10[%c8_i32_110] : memref<16x!tpu.dma_semaphore, #tpu.memory_space<semaphore_mem>> -> memref<1x!tpu.dma_semaphore, #tpu.memory_space<semaphore_mem>>
    %131 = tpu.memref_squeeze %130 : memref<1x!tpu.dma_semaphore, #tpu.memory_space<semaphore_mem>> -> memref<!tpu.dma_semaphore, #tpu.memory_space<semaphore_mem>>
    tpu.wait_dma2 semaphore(%131 : memref<!tpu.dma_semaphore, #tpu.memory_space<semaphore_mem>>) src(%128 : memref<1x128xf32, #tpu.memory_space<any>>) dst(%129 : memref<1x128xf32, #tpu.memory_space<vmem>>)
    %c9_i32_114 = arith.constant 9 : i32
    %c0_i32_115 = arith.constant 0 : i32
    %132 = tpu.memref_slice %arg1[%49, %c0_i32_115] : memref<40002x128xf32, #tpu.memory_space<any>> -> memref<1x128xf32, #tpu.memory_space<any>>
    %c33_i32_116 = arith.constant 33 : i32
    %c0_i32_117 = arith.constant 0 : i32
    %133 = tpu.memref_slice %arg5[%c33_i32_116, %c0_i32_117] : memref<64x128xf32, #tpu.memory_space<vmem>> -> memref<1x128xf32, #tpu.memory_space<vmem>>
    %134 = tpu.memref_slice %arg10[%c9_i32_114] : memref<16x!tpu.dma_semaphore, #tpu.memory_space<semaphore_mem>> -> memref<1x!tpu.dma_semaphore, #tpu.memory_space<semaphore_mem>>
    %135 = tpu.memref_squeeze %134 : memref<1x!tpu.dma_semaphore, #tpu.memory_space<semaphore_mem>> -> memref<!tpu.dma_semaphore, #tpu.memory_space<semaphore_mem>>
    tpu.wait_dma2 semaphore(%135 : memref<!tpu.dma_semaphore, #tpu.memory_space<semaphore_mem>>) src(%132 : memref<1x128xf32, #tpu.memory_space<any>>) dst(%133 : memref<1x128xf32, #tpu.memory_space<vmem>>)
    %c10_i32_118 = arith.constant 10 : i32
    %c0_i32_119 = arith.constant 0 : i32
    %136 = tpu.memref_slice %arg1[%54, %c0_i32_119] : memref<40002x128xf32, #tpu.memory_space<any>> -> memref<1x128xf32, #tpu.memory_space<any>>
    %c40_i32_120 = arith.constant 40 : i32
    %c0_i32_121 = arith.constant 0 : i32
    %137 = tpu.memref_slice %arg5[%c40_i32_120, %c0_i32_121] : memref<64x128xf32, #tpu.memory_space<vmem>> -> memref<1x128xf32, #tpu.memory_space<vmem>>
    %138 = tpu.memref_slice %arg10[%c10_i32_118] : memref<16x!tpu.dma_semaphore, #tpu.memory_space<semaphore_mem>> -> memref<1x!tpu.dma_semaphore, #tpu.memory_space<semaphore_mem>>
    %139 = tpu.memref_squeeze %138 : memref<1x!tpu.dma_semaphore, #tpu.memory_space<semaphore_mem>> -> memref<!tpu.dma_semaphore, #tpu.memory_space<semaphore_mem>>
    tpu.wait_dma2 semaphore(%139 : memref<!tpu.dma_semaphore, #tpu.memory_space<semaphore_mem>>) src(%136 : memref<1x128xf32, #tpu.memory_space<any>>) dst(%137 : memref<1x128xf32, #tpu.memory_space<vmem>>)
    %c11_i32_122 = arith.constant 11 : i32
    %c0_i32_123 = arith.constant 0 : i32
    %140 = tpu.memref_slice %arg1[%59, %c0_i32_123] : memref<40002x128xf32, #tpu.memory_space<any>> -> memref<1x128xf32, #tpu.memory_space<any>>
    %c41_i32_124 = arith.constant 41 : i32
    %c0_i32_125 = arith.constant 0 : i32
    %141 = tpu.memref_slice %arg5[%c41_i32_124, %c0_i32_125] : memref<64x128xf32, #tpu.memory_space<vmem>> -> memref<1x128xf32, #tpu.memory_space<vmem>>
    %142 = tpu.memref_slice %arg10[%c11_i32_122] : memref<16x!tpu.dma_semaphore, #tpu.memory_space<semaphore_mem>> -> memref<1x!tpu.dma_semaphore, #tpu.memory_space<semaphore_mem>>
    %143 = tpu.memref_squeeze %142 : memref<1x!tpu.dma_semaphore, #tpu.memory_space<semaphore_mem>> -> memref<!tpu.dma_semaphore, #tpu.memory_space<semaphore_mem>>
    tpu.wait_dma2 semaphore(%143 : memref<!tpu.dma_semaphore, #tpu.memory_space<semaphore_mem>>) src(%140 : memref<1x128xf32, #tpu.memory_space<any>>) dst(%141 : memref<1x128xf32, #tpu.memory_space<vmem>>)
    %c12_i32_126 = arith.constant 12 : i32
    %c0_i32_127 = arith.constant 0 : i32
    %144 = tpu.memref_slice %arg1[%64, %c0_i32_127] : memref<40002x128xf32, #tpu.memory_space<any>> -> memref<1x128xf32, #tpu.memory_space<any>>
    %c48_i32_128 = arith.constant 48 : i32
    %c0_i32_129 = arith.constant 0 : i32
    %145 = tpu.memref_slice %arg5[%c48_i32_128, %c0_i32_129] : memref<64x128xf32, #tpu.memory_space<vmem>> -> memref<1x128xf32, #tpu.memory_space<vmem>>
    %146 = tpu.memref_slice %arg10[%c12_i32_126] : memref<16x!tpu.dma_semaphore, #tpu.memory_space<semaphore_mem>> -> memref<1x!tpu.dma_semaphore, #tpu.memory_space<semaphore_mem>>
    %147 = tpu.memref_squeeze %146 : memref<1x!tpu.dma_semaphore, #tpu.memory_space<semaphore_mem>> -> memref<!tpu.dma_semaphore, #tpu.memory_space<semaphore_mem>>
    tpu.wait_dma2 semaphore(%147 : memref<!tpu.dma_semaphore, #tpu.memory_space<semaphore_mem>>) src(%144 : memref<1x128xf32, #tpu.memory_space<any>>) dst(%145 : memref<1x128xf32, #tpu.memory_space<vmem>>)
    %c13_i32_130 = arith.constant 13 : i32
    %c0_i32_131 = arith.constant 0 : i32
    %148 = tpu.memref_slice %arg1[%69, %c0_i32_131] : memref<40002x128xf32, #tpu.memory_space<any>> -> memref<1x128xf32, #tpu.memory_space<any>>
    %c49_i32_132 = arith.constant 49 : i32
    %c0_i32_133 = arith.constant 0 : i32
    %149 = tpu.memref_slice %arg5[%c49_i32_132, %c0_i32_133] : memref<64x128xf32, #tpu.memory_space<vmem>> -> memref<1x128xf32, #tpu.memory_space<vmem>>
    %150 = tpu.memref_slice %arg10[%c13_i32_130] : memref<16x!tpu.dma_semaphore, #tpu.memory_space<semaphore_mem>> -> memref<1x!tpu.dma_semaphore, #tpu.memory_space<semaphore_mem>>
    %151 = tpu.memref_squeeze %150 : memref<1x!tpu.dma_semaphore, #tpu.memory_space<semaphore_mem>> -> memref<!tpu.dma_semaphore, #tpu.memory_space<semaphore_mem>>
    tpu.wait_dma2 semaphore(%151 : memref<!tpu.dma_semaphore, #tpu.memory_space<semaphore_mem>>) src(%148 : memref<1x128xf32, #tpu.memory_space<any>>) dst(%149 : memref<1x128xf32, #tpu.memory_space<vmem>>)
    %c14_i32_134 = arith.constant 14 : i32
    %c0_i32_135 = arith.constant 0 : i32
    %152 = tpu.memref_slice %arg1[%74, %c0_i32_135] : memref<40002x128xf32, #tpu.memory_space<any>> -> memref<1x128xf32, #tpu.memory_space<any>>
    %c56_i32_136 = arith.constant 56 : i32
    %c0_i32_137 = arith.constant 0 : i32
    %153 = tpu.memref_slice %arg5[%c56_i32_136, %c0_i32_137] : memref<64x128xf32, #tpu.memory_space<vmem>> -> memref<1x128xf32, #tpu.memory_space<vmem>>
    %154 = tpu.memref_slice %arg10[%c14_i32_134] : memref<16x!tpu.dma_semaphore, #tpu.memory_space<semaphore_mem>> -> memref<1x!tpu.dma_semaphore, #tpu.memory_space<semaphore_mem>>
    %155 = tpu.memref_squeeze %154 : memref<1x!tpu.dma_semaphore, #tpu.memory_space<semaphore_mem>> -> memref<!tpu.dma_semaphore, #tpu.memory_space<semaphore_mem>>
    tpu.wait_dma2 semaphore(%155 : memref<!tpu.dma_semaphore, #tpu.memory_space<semaphore_mem>>) src(%152 : memref<1x128xf32, #tpu.memory_space<any>>) dst(%153 : memref<1x128xf32, #tpu.memory_space<vmem>>)
    %c15_i32_138 = arith.constant 15 : i32
    %c0_i32_139 = arith.constant 0 : i32
    %156 = tpu.memref_slice %arg1[%79, %c0_i32_139] : memref<40002x128xf32, #tpu.memory_space<any>> -> memref<1x128xf32, #tpu.memory_space<any>>
    %c57_i32_140 = arith.constant 57 : i32
    %c0_i32_141 = arith.constant 0 : i32
    %157 = tpu.memref_slice %arg5[%c57_i32_140, %c0_i32_141] : memref<64x128xf32, #tpu.memory_space<vmem>> -> memref<1x128xf32, #tpu.memory_space<vmem>>
    %158 = tpu.memref_slice %arg10[%c15_i32_138] : memref<16x!tpu.dma_semaphore, #tpu.memory_space<semaphore_mem>> -> memref<1x!tpu.dma_semaphore, #tpu.memory_space<semaphore_mem>>
    %159 = tpu.memref_squeeze %158 : memref<1x!tpu.dma_semaphore, #tpu.memory_space<semaphore_mem>> -> memref<!tpu.dma_semaphore, #tpu.memory_space<semaphore_mem>>
    tpu.wait_dma2 semaphore(%159 : memref<!tpu.dma_semaphore, #tpu.memory_space<semaphore_mem>>) src(%156 : memref<1x128xf32, #tpu.memory_space<any>>) dst(%157 : memref<1x128xf32, #tpu.memory_space<vmem>>)
    %c0_142 = arith.constant 0 : index
    %c0_143 = arith.constant 0 : index
    %160 = vector.load %arg5[%c0_142, %c0_143] : memref<64x128xf32, #tpu.memory_space<vmem>>, vector<64x128xf32>
    %161 = arith.truncf %160 : vector<64x128xf32> to vector<64x128xbf16>
    %c128 = arith.constant 128 : index
    %c0_144 = arith.constant 0 : index
    %162 = vector.load %arg4[%c128, %c0_144] : memref<1984x256xbf16, #tpu.memory_space<vmem>>, vector<1x256xbf16>
    %163 = arith.extf %162 : vector<1x256xbf16> to vector<1x256xf32>
    %c0_145 = arith.constant 0 : index
    %c0_146 = arith.constant 0 : index
    %164 = vector.load %arg4[%c0_145, %c0_146] : memref<1984x256xbf16, #tpu.memory_space<vmem>>, vector<128x256xbf16>
    %cst = arith.constant dense<0.000000e+00> : vector<64x256xf32>
    %165 = tpu.matmul %161, %164, %cst {dimension_numbers = #tpu.dot_dimension_numbers<[1], [0], [0], [1], [0, 0, 1, 1], [], []>} : vector<64x128xbf16>, vector<128x256xbf16>, vector<64x256xf32> -> vector<64x256xf32>
    %166 = vector.broadcast %163 : vector<1x256xf32> to vector<64x256xf32>
    %167 = arith.addf %165, %166 : vector<64x256xf32>
    %168 = vector.extract_strided_slice %167 {offsets = [0, 0], sizes = [64, 128], strides = [1, 1]} : vector<64x256xf32> to vector<64x128xf32>
    %c0_147 = arith.constant 0 : index
    %c0_148 = arith.constant 0 : index
    %169 = vector.load %arg6[%c0_147, %c0_148] : memref<64x256xf32, #tpu.memory_space<vmem>>, vector<64x128xf32>
    tpu.vector_store %arg6[%c0_147, %c0_148], %168 {strides = array<i32>} : memref<64x256xf32, #tpu.memory_space<vmem>>, vector<64x128xf32>,
    %170 = vector.extract_strided_slice %167 {offsets = [56, 128], sizes = [8, 128], strides = [1, 1]} : vector<64x256xf32> to vector<8x128xf32>
    %c0_149 = arith.constant 0 : index
    %c128_150 = arith.constant 128 : index
    %171 = vector.load %arg6[%c0_149, %c128_150] : memref<64x256xf32, #tpu.memory_space<vmem>>, vector<8x128xf32>
    tpu.vector_store %arg6[%c0_149, %c128_150], %170 {strides = array<i32>} : memref<64x256xf32, #tpu.memory_space<vmem>>, vector<8x128xf32>,
    %172 = vector.extract_strided_slice %167 {offsets = [48, 128], sizes = [8, 128], strides = [1, 1]} : vector<64x256xf32> to vector<8x128xf32>
    %c8 = arith.constant 8 : index
    %c128_151 = arith.constant 128 : index
    %173 = vector.load %arg6[%c8, %c128_151] : memref<64x256xf32, #tpu.memory_space<vmem>>, vector<8x128xf32>
    tpu.vector_store %arg6[%c8, %c128_151], %172 {strides = array<i32>} : memref<64x256xf32, #tpu.memory_space<vmem>>, vector<8x128xf32>,
    %174 = vector.extract_strided_slice %167 {offsets = [40, 128], sizes = [8, 128], strides = [1, 1]} : vector<64x256xf32> to vector<8x128xf32>
    %c16 = arith.constant 16 : index
    %c128_152 = arith.constant 128 : index
    %175 = vector.load %arg6[%c16, %c128_152] : memref<64x256xf32, #tpu.memory_space<vmem>>, vector<8x128xf32>
    tpu.vector_store %arg6[%c16, %c128_152], %174 {strides = array<i32>} : memref<64x256xf32, #tpu.memory_space<vmem>>, vector<8x128xf32>,
    %176 = vector.extract_strided_slice %167 {offsets = [32, 128], sizes = [8, 128], strides = [1, 1]} : vector<64x256xf32> to vector<8x128xf32>
    %c24 = arith.constant 24 : index
    %c128_153 = arith.constant 128 : index
    %177 = vector.load %arg6[%c24, %c128_153] : memref<64x256xf32, #tpu.memory_space<vmem>>, vector<8x128xf32>
    tpu.vector_store %arg6[%c24, %c128_153], %176 {strides = array<i32>} : memref<64x256xf32, #tpu.memory_space<vmem>>, vector<8x128xf32>,
    %178 = vector.extract_strided_slice %167 {offsets = [24, 128], sizes = [8, 128], strides = [1, 1]} : vector<64x256xf32> to vector<8x128xf32>
    %c32 = arith.constant 32 : index
    %c128_154 = arith.constant 128 : index
    %179 = vector.load %arg6[%c32, %c128_154] : memref<64x256xf32, #tpu.memory_space<vmem>>, vector<8x128xf32>
    tpu.vector_store %arg6[%c32, %c128_154], %178 {strides = array<i32>} : memref<64x256xf32, #tpu.memory_space<vmem>>, vector<8x128xf32>,
    %180 = vector.extract_strided_slice %167 {offsets = [16, 128], sizes = [8, 128], strides = [1, 1]} : vector<64x256xf32> to vector<8x128xf32>
    %c40 = arith.constant 40 : index
    %c128_155 = arith.constant 128 : index
    %181 = vector.load %arg6[%c40, %c128_155] : memref<64x256xf32, #tpu.memory_space<vmem>>, vector<8x128xf32>
    tpu.vector_store %arg6[%c40, %c128_155], %180 {strides = array<i32>} : memref<64x256xf32, #tpu.memory_space<vmem>>, vector<8x128xf32>,
    %182 = vector.extract_strided_slice %167 {offsets = [8, 128], sizes = [8, 128], strides = [1, 1]} : vector<64x256xf32> to vector<8x128xf32>
    %c48 = arith.constant 48 : index
    %c128_156 = arith.constant 128 : index
    %183 = vector.load %arg6[%c48, %c128_156] : memref<64x256xf32, #tpu.memory_space<vmem>>, vector<8x128xf32>
    tpu.vector_store %arg6[%c48, %c128_156], %182 {strides = array<i32>} : memref<64x256xf32, #tpu.memory_space<vmem>>, vector<8x128xf32>,
    %184 = vector.extract_strided_slice %167 {offsets = [0, 128], sizes = [8, 128], strides = [1, 1]} : vector<64x256xf32> to vector<8x128xf32>
    %c56 = arith.constant 56 : index
    %c128_157 = arith.constant 128 : index
    %185 = vector.load %arg6[%c56, %c128_157] : memref<64x256xf32, #tpu.memory_space<vmem>>, vector<8x128xf32>
    tpu.vector_store %arg6[%c56, %c128_157], %184 {strides = array<i32>} : memref<64x256xf32, #tpu.memory_space<vmem>>, vector<8x128xf32>,
    %cst_158 = arith.constant 0.000000e+00 : f32
    %186 = vector.broadcast %cst_158 : f32 to vector<8x256xf32>
    %c0_159 = arith.constant 0 : index
    %c0_160 = arith.constant 0 : index
    %187 = vector.load %arg6[%c0_159, %c0_160] : memref<64x256xf32, #tpu.memory_space<vmem>>, vector<8x256xf32>
    %188 = arith.truncf %186 : vector<8x256xf32> to vector<8x256xbf16>
    %c144 = arith.constant 144 : index
    %c0_161 = arith.constant 0 : index
    %189 = vector.load %arg4[%c144, %c0_161] : memref<1984x256xbf16, #tpu.memory_space<vmem>>, vector<256x256xbf16>
    %cst_162 = arith.constant dense<0.000000e+00> : vector<8x256xf32>
    %190 = tpu.matmul %188, %189, %cst_162 {dimension_numbers = #tpu.dot_dimension_numbers<[1], [0], [0], [1], [0, 0, 1, 1], [], []>} : vector<8x256xbf16>, vector<256x256xbf16>, vector<8x256xf32> -> vector<8x256xf32>
    %191 = arith.addf %187, %190 : vector<8x256xf32>
    %192 = math.tanh %191 : vector<8x256xf32>
    %193 = vector.extract_strided_slice %192 {offsets = [0, 0], sizes = [8, 128], strides = [1, 1]} : vector<8x256xf32> to vector<8x128xf32>
    %c0_163 = arith.constant 0 : index
    %c0_164 = arith.constant 0 : index
    %194 = vector.load %arg7[%c0_163, %c0_164] : memref<64x256xf32, #tpu.memory_space<vmem>>, vector<8x128xf32>
    tpu.vector_store %arg7[%c0_163, %c0_164], %193 {strides = array<i32>} : memref<64x256xf32, #tpu.memory_space<vmem>>, vector<8x128xf32>,
    %195 = vector.extract_strided_slice %192 {offsets = [0, 128], sizes = [8, 128], strides = [1, 1]} : vector<8x256xf32> to vector<8x128xf32>
    %c56_165 = arith.constant 56 : index
    %c128_166 = arith.constant 128 : index
    %196 = vector.load %arg7[%c56_165, %c128_166] : memref<64x256xf32, #tpu.memory_space<vmem>>, vector<8x128xf32>
    tpu.vector_store %arg7[%c56_165, %c128_166], %195 {strides = array<i32>} : memref<64x256xf32, #tpu.memory_space<vmem>>, vector<8x128xf32>,
    %c8_167 = arith.constant 8 : index
    %c0_168 = arith.constant 0 : index
    %197 = vector.load %arg6[%c8_167, %c0_168] : memref<64x256xf32, #tpu.memory_space<vmem>>, vector<8x256xf32>
    %198 = arith.truncf %192 : vector<8x256xf32> to vector<8x256xbf16>
    %c144_169 = arith.constant 144 : index
    %c0_170 = arith.constant 0 : index
    %199 = vector.load %arg4[%c144_169, %c0_170] : memref<1984x256xbf16, #tpu.memory_space<vmem>>, vector<256x256xbf16>
    %cst_171 = arith.constant dense<0.000000e+00> : vector<8x256xf32>
    %200 = tpu.matmul %198, %199, %cst_171 {dimension_numbers = #tpu.dot_dimension_numbers<[1], [0], [0], [1], [0, 0, 1, 1], [], []>} : vector<8x256xbf16>, vector<256x256xbf16>, vector<8x256xf32> -> vector<8x256xf32>
    %201 = arith.addf %197, %200 : vector<8x256xf32>
    %202 = math.tanh %201 : vector<8x256xf32>
    %203 = vector.extract_strided_slice %202 {offsets = [0, 0], sizes = [8, 128], strides = [1, 1]} : vector<8x256xf32> to vector<8x128xf32>
    %c8_172 = arith.constant 8 : index
    %c0_173 = arith.constant 0 : index
    %204 = vector.load %arg7[%c8_172, %c0_173] : memref<64x256xf32, #tpu.memory_space<vmem>>, vector<8x128xf32>
    tpu.vector_store %arg7[%c8_172, %c0_173], %203 {strides = array<i32>} : memref<64x256xf32, #tpu.memory_space<vmem>>, vector<8x128xf32>,
    %205 = vector.extract_strided_slice %202 {offsets = [0, 128], sizes = [8, 128], strides = [1, 1]} : vector<8x256xf32> to vector<8x128xf32>
    %c48_174 = arith.constant 48 : index
    %c128_175 = arith.constant 128 : index
    %206 = vector.load %arg7[%c48_174, %c128_175] : memref<64x256xf32, #tpu.memory_space<vmem>>, vector<8x128xf32>
    tpu.vector_store %arg7[%c48_174, %c128_175], %205 {strides = array<i32>} : memref<64x256xf32, #tpu.memory_space<vmem>>, vector<8x128xf32>,
    %c16_176 = arith.constant 16 : index
    %c0_177 = arith.constant 0 : index
    %207 = vector.load %arg6[%c16_176, %c0_177] : memref<64x256xf32, #tpu.memory_space<vmem>>, vector<8x256xf32>
    %208 = arith.truncf %202 : vector<8x256xf32> to vector<8x256xbf16>
    %c144_178 = arith.constant 144 : index
    %c0_179 = arith.constant 0 : index
    %209 = vector.load %arg4[%c144_178, %c0_179] : memref<1984x256xbf16, #tpu.memory_space<vmem>>, vector<256x256xbf16>
    %cst_180 = arith.constant dense<0.000000e+00> : vector<8x256xf32>
    %210 = tpu.matmul %208, %209, %cst_180 {dimension_numbers = #tpu.dot_dimension_numbers<[1], [0], [0], [1], [0, 0, 1, 1], [], []>} : vector<8x256xbf16>, vector<256x256xbf16>, vector<8x256xf32> -> vector<8x256xf32>
    %211 = arith.addf %207, %210 : vector<8x256xf32>
    %212 = math.tanh %211 : vector<8x256xf32>
    %213 = vector.extract_strided_slice %212 {offsets = [0, 0], sizes = [8, 128], strides = [1, 1]} : vector<8x256xf32> to vector<8x128xf32>
    %c16_181 = arith.constant 16 : index
    %c0_182 = arith.constant 0 : index
    %214 = vector.load %arg7[%c16_181, %c0_182] : memref<64x256xf32, #tpu.memory_space<vmem>>, vector<8x128xf32>
    tpu.vector_store %arg7[%c16_181, %c0_182], %213 {strides = array<i32>} : memref<64x256xf32, #tpu.memory_space<vmem>>, vector<8x128xf32>,
    %215 = vector.extract_strided_slice %212 {offsets = [0, 128], sizes = [8, 128], strides = [1, 1]} : vector<8x256xf32> to vector<8x128xf32>
    %c40_183 = arith.constant 40 : index
    %c128_184 = arith.constant 128 : index
    %216 = vector.load %arg7[%c40_183, %c128_184] : memref<64x256xf32, #tpu.memory_space<vmem>>, vector<8x128xf32>
    tpu.vector_store %arg7[%c40_183, %c128_184], %215 {strides = array<i32>} : memref<64x256xf32, #tpu.memory_space<vmem>>, vector<8x128xf32>,
    %c24_185 = arith.constant 24 : index
    %c0_186 = arith.constant 0 : index
    %217 = vector.load %arg6[%c24_185, %c0_186] : memref<64x256xf32, #tpu.memory_space<vmem>>, vector<8x256xf32>
    %218 = arith.truncf %212 : vector<8x256xf32> to vector<8x256xbf16>
    %c144_187 = arith.constant 144 : index
    %c0_188 = arith.constant 0 : index
    %219 = vector.load %arg4[%c144_187, %c0_188] : memref<1984x256xbf16, #tpu.memory_space<vmem>>, vector<256x256xbf16>
    %cst_189 = arith.constant dense<0.000000e+00> : vector<8x256xf32>
    %220 = tpu.matmul %218, %219, %cst_189 {dimension_numbers = #tpu.dot_dimension_numbers<[1], [0], [0], [1], [0, 0, 1, 1], [], []>} : vector<8x256xbf16>, vector<256x256xbf16>, vector<8x256xf32> -> vector<8x256xf32>
    %221 = arith.addf %217, %220 : vector<8x256xf32>
    %222 = math.tanh %221 : vector<8x256xf32>
    %223 = vector.extract_strided_slice %222 {offsets = [0, 0], sizes = [8, 128], strides = [1, 1]} : vector<8x256xf32> to vector<8x128xf32>
    %c24_190 = arith.constant 24 : index
    %c0_191 = arith.constant 0 : index
    %224 = vector.load %arg7[%c24_190, %c0_191] : memref<64x256xf32, #tpu.memory_space<vmem>>, vector<8x128xf32>
    tpu.vector_store %arg7[%c24_190, %c0_191], %223 {strides = array<i32>} : memref<64x256xf32, #tpu.memory_space<vmem>>, vector<8x128xf32>,
    %225 = vector.extract_strided_slice %222 {offsets = [0, 128], sizes = [8, 128], strides = [1, 1]} : vector<8x256xf32> to vector<8x128xf32>
    %c32_192 = arith.constant 32 : index
    %c128_193 = arith.constant 128 : index
    %226 = vector.load %arg7[%c32_192, %c128_193] : memref<64x256xf32, #tpu.memory_space<vmem>>, vector<8x128xf32>
    tpu.vector_store %arg7[%c32_192, %c128_193], %225 {strides = array<i32>} : memref<64x256xf32, #tpu.memory_space<vmem>>, vector<8x128xf32>,
    %c32_194 = arith.constant 32 : index
    %c0_195 = arith.constant 0 : index
    %227 = vector.load %arg6[%c32_194, %c0_195] : memref<64x256xf32, #tpu.memory_space<vmem>>, vector<8x256xf32>
    %228 = arith.truncf %222 : vector<8x256xf32> to vector<8x256xbf16>
    %c144_196 = arith.constant 144 : index
    %c0_197 = arith.constant 0 : index
    %229 = vector.load %arg4[%c144_196, %c0_197] : memref<1984x256xbf16, #tpu.memory_space<vmem>>, vector<256x256xbf16>
    %cst_198 = arith.constant dense<0.000000e+00> : vector<8x256xf32>
    %230 = tpu.matmul %228, %229, %cst_198 {dimension_numbers = #tpu.dot_dimension_numbers<[1], [0], [0], [1], [0, 0, 1, 1], [], []>} : vector<8x256xbf16>, vector<256x256xbf16>, vector<8x256xf32> -> vector<8x256xf32>
    %231 = arith.addf %227, %230 : vector<8x256xf32>
    %232 = math.tanh %231 : vector<8x256xf32>
    %233 = vector.extract_strided_slice %232 {offsets = [0, 0], sizes = [8, 128], strides = [1, 1]} : vector<8x256xf32> to vector<8x128xf32>
    %c32_199 = arith.constant 32 : index
    %c0_200 = arith.constant 0 : index
    %234 = vector.load %arg7[%c32_199, %c0_200] : memref<64x256xf32, #tpu.memory_space<vmem>>, vector<8x128xf32>
    tpu.vector_store %arg7[%c32_199, %c0_200], %233 {strides = array<i32>} : memref<64x256xf32, #tpu.memory_space<vmem>>, vector<8x128xf32>,
    %235 = vector.extract_strided_slice %232 {offsets = [0, 128], sizes = [8, 128], strides = [1, 1]} : vector<8x256xf32> to vector<8x128xf32>
    %c24_201 = arith.constant 24 : index
    %c128_202 = arith.constant 128 : index
    %236 = vector.load %arg7[%c24_201, %c128_202] : memref<64x256xf32, #tpu.memory_space<vmem>>, vector<8x128xf32>
    tpu.vector_store %arg7[%c24_201, %c128_202], %235 {strides = array<i32>} : memref<64x256xf32, #tpu.memory_space<vmem>>, vector<8x128xf32>,
    %c40_203 = arith.constant 40 : index
    %c0_204 = arith.constant 0 : index
    %237 = vector.load %arg6[%c40_203, %c0_204] : memref<64x256xf32, #tpu.memory_space<vmem>>, vector<8x256xf32>
    %238 = arith.truncf %232 : vector<8x256xf32> to vector<8x256xbf16>
    %c144_205 = arith.constant 144 : index
    %c0_206 = arith.constant 0 : index
    %239 = vector.load %arg4[%c144_205, %c0_206] : memref<1984x256xbf16, #tpu.memory_space<vmem>>, vector<256x256xbf16>
    %cst_207 = arith.constant dense<0.000000e+00> : vector<8x256xf32>
    %240 = tpu.matmul %238, %239, %cst_207 {dimension_numbers = #tpu.dot_dimension_numbers<[1], [0], [0], [1], [0, 0, 1, 1], [], []>} : vector<8x256xbf16>, vector<256x256xbf16>, vector<8x256xf32> -> vector<8x256xf32>
    %241 = arith.addf %237, %240 : vector<8x256xf32>
    %242 = math.tanh %241 : vector<8x256xf32>
    %243 = vector.extract_strided_slice %242 {offsets = [0, 0], sizes = [8, 128], strides = [1, 1]} : vector<8x256xf32> to vector<8x128xf32>
    %c40_208 = arith.constant 40 : index
    %c0_209 = arith.constant 0 : index
    %244 = vector.load %arg7[%c40_208, %c0_209] : memref<64x256xf32, #tpu.memory_space<vmem>>, vector<8x128xf32>
    tpu.vector_store %arg7[%c40_208, %c0_209], %243 {strides = array<i32>} : memref<64x256xf32, #tpu.memory_space<vmem>>, vector<8x128xf32>,
    %245 = vector.extract_strided_slice %242 {offsets = [0, 128], sizes = [8, 128], strides = [1, 1]} : vector<8x256xf32> to vector<8x128xf32>
    %c16_210 = arith.constant 16 : index
    %c128_211 = arith.constant 128 : index
    %246 = vector.load %arg7[%c16_210, %c128_211] : memref<64x256xf32, #tpu.memory_space<vmem>>, vector<8x128xf32>
    tpu.vector_store %arg7[%c16_210, %c128_211], %245 {strides = array<i32>} : memref<64x256xf32, #tpu.memory_space<vmem>>, vector<8x128xf32>,
    %c48_212 = arith.constant 48 : index
    %c0_213 = arith.constant 0 : index
    %247 = vector.load %arg6[%c48_212, %c0_213] : memref<64x256xf32, #tpu.memory_space<vmem>>, vector<8x256xf32>
    %248 = arith.truncf %242 : vector<8x256xf32> to vector<8x256xbf16>
    %c144_214 = arith.constant 144 : index
    %c0_215 = arith.constant 0 : index
    %249 = vector.load %arg4[%c144_214, %c0_215] : memref<1984x256xbf16, #tpu.memory_space<vmem>>, vector<256x256xbf16>
    %cst_216 = arith.constant dense<0.000000e+00> : vector<8x256xf32>
    %250 = tpu.matmul %248, %249, %cst_216 {dimension_numbers = #tpu.dot_dimension_numbers<[1], [0], [0], [1], [0, 0, 1, 1], [], []>} : vector<8x256xbf16>, vector<256x256xbf16>, vector<8x256xf32> -> vector<8x256xf32>
    %251 = arith.addf %247, %250 : vector<8x256xf32>
    %252 = math.tanh %251 : vector<8x256xf32>
    %253 = vector.extract_strided_slice %252 {offsets = [0, 0], sizes = [8, 128], strides = [1, 1]} : vector<8x256xf32> to vector<8x128xf32>
    %c48_217 = arith.constant 48 : index
    %c0_218 = arith.constant 0 : index
    %254 = vector.load %arg7[%c48_217, %c0_218] : memref<64x256xf32, #tpu.memory_space<vmem>>, vector<8x128xf32>
    tpu.vector_store %arg7[%c48_217, %c0_218], %253 {strides = array<i32>} : memref<64x256xf32, #tpu.memory_space<vmem>>, vector<8x128xf32>,
    %255 = vector.extract_strided_slice %252 {offsets = [0, 128], sizes = [8, 128], strides = [1, 1]} : vector<8x256xf32> to vector<8x128xf32>
    %c8_219 = arith.constant 8 : index
    %c128_220 = arith.constant 128 : index
    %256 = vector.load %arg7[%c8_219, %c128_220] : memref<64x256xf32, #tpu.memory_space<vmem>>, vector<8x128xf32>
    tpu.vector_store %arg7[%c8_219, %c128_220], %255 {strides = array<i32>} : memref<64x256xf32, #tpu.memory_space<vmem>>, vector<8x128xf32>,
    %c56_221 = arith.constant 56 : index
    %c0_222 = arith.constant 0 : index
    %257 = vector.load %arg6[%c56_221, %c0_222] : memref<64x256xf32, #tpu.memory_space<vmem>>, vector<8x256xf32>
    %258 = arith.truncf %252 : vector<8x256xf32> to vector<8x256xbf16>
    %c144_223 = arith.constant 144 : index
    %c0_224 = arith.constant 0 : index
    %259 = vector.load %arg4[%c144_223, %c0_224] : memref<1984x256xbf16, #tpu.memory_space<vmem>>, vector<256x256xbf16>
    %cst_225 = arith.constant dense<0.000000e+00> : vector<8x256xf32>
    %260 = tpu.matmul %258, %259, %cst_225 {dimension_numbers = #tpu.dot_dimension_numbers<[1], [0], [0], [1], [0, 0, 1, 1], [], []>} : vector<8x256xbf16>, vector<256x256xbf16>, vector<8x256xf32> -> vector<8x256xf32>
    %261 = arith.addf %257, %260 : vector<8x256xf32>
    %262 = math.tanh %261 : vector<8x256xf32>
    %263 = vector.extract_strided_slice %262 {offsets = [0, 0], sizes = [8, 128], strides = [1, 1]} : vector<8x256xf32> to vector<8x128xf32>
    %c56_226 = arith.constant 56 : index
    %c0_227 = arith.constant 0 : index
    %264 = vector.load %arg7[%c56_226, %c0_227] : memref<64x256xf32, #tpu.memory_space<vmem>>, vector<8x128xf32>
    tpu.vector_store %arg7[%c56_226, %c0_227], %263 {strides = array<i32>} : memref<64x256xf32, #tpu.memory_space<vmem>>, vector<8x128xf32>,
    %265 = vector.extract_strided_slice %262 {offsets = [0, 128], sizes = [8, 128], strides = [1, 1]} : vector<8x256xf32> to vector<8x128xf32>
    %c0_228 = arith.constant 0 : index
    %c128_229 = arith.constant 128 : index
    %266 = vector.load %arg7[%c0_228, %c128_229] : memref<64x256xf32, #tpu.memory_space<vmem>>, vector<8x128xf32>
    tpu.vector_store %arg7[%c0_228, %c128_229], %265 {strides = array<i32>} : memref<64x256xf32, #tpu.memory_space<vmem>>, vector<8x128xf32>,
    %c1_i32_230 = arith.constant 1 : i32
    %c400_i32_231 = arith.constant 400 : i32
    %c0_i32_232 = arith.constant 0 : i32
    %267 = tpu.memref_slice %arg2[%c400_i32_231, %c0_i32_232] : memref<1984x256xbf16, #tpu.memory_space<any>> -> memref<528x256xbf16, #tpu.memory_space<any>>
    %c400_i32_233 = arith.constant 400 : i32
    %c0_i32_234 = arith.constant 0 : i32
    %268 = tpu.memref_slice %arg4[%c400_i32_233, %c0_i32_234] : memref<1984x256xbf16, #tpu.memory_space<vmem>> -> memref<528x256xbf16, #tpu.memory_space<vmem>>
    %269 = tpu.memref_slice %arg9[%c1_i32_230] : memref<3x!tpu.dma_semaphore, #tpu.memory_space<semaphore_mem>> -> memref<1x!tpu.dma_semaphore, #tpu.memory_space<semaphore_mem>>
    %270 = tpu.memref_squeeze %269 : memref<1x!tpu.dma_semaphore, #tpu.memory_space<semaphore_mem>> -> memref<!tpu.dma_semaphore, #tpu.memory_space<semaphore_mem>>
    tpu.wait_dma2 semaphore(%270 : memref<!tpu.dma_semaphore, #tpu.memory_space<semaphore_mem>>) src(%267 : memref<528x256xbf16, #tpu.memory_space<any>>) dst(%268 : memref<528x256xbf16, #tpu.memory_space<vmem>>)
    %c0_235 = arith.constant 0 : index
    %c0_236 = arith.constant 0 : index
    %271 = vector.load %arg7[%c0_235, %c0_236] : memref<64x256xf32, #tpu.memory_space<vmem>>, vector<64x256xf32>
    %272 = arith.truncf %271 : vector<64x256xf32> to vector<64x256xbf16>
    %c656 = arith.constant 656 : index
    %c0_237 = arith.constant 0 : index
    %273 = vector.load %arg4[%c656, %c0_237] : memref<1984x256xbf16, #tpu.memory_space<vmem>>, vector<1x256xbf16>
    %274 = arith.extf %273 : vector<1x256xbf16> to vector<1x256xf32>
    %c400 = arith.constant 400 : index
    %c0_238 = arith.constant 0 : index
    %275 = vector.load %arg4[%c400, %c0_238] : memref<1984x256xbf16, #tpu.memory_space<vmem>>, vector<256x256xbf16>
    %cst_239 = arith.constant dense<0.000000e+00> : vector<64x256xf32>
    %276 = tpu.matmul %272, %275, %cst_239 {dimension_numbers = #tpu.dot_dimension_numbers<[1], [0], [0], [1], [0, 0, 1, 1], [], []>} : vector<64x256xbf16>, vector<256x256xbf16>, vector<64x256xf32> -> vector<64x256xf32>
    %277 = vector.broadcast %274 : vector<1x256xf32> to vector<64x256xf32>
    %278 = arith.addf %276, %277 : vector<64x256xf32>
    %279 = vector.extract_strided_slice %278 {offsets = [0, 0], sizes = [64, 128], strides = [1, 1]} : vector<64x256xf32> to vector<64x128xf32>
    %c0_240 = arith.constant 0 : index
    %c0_241 = arith.constant 0 : index
    %280 = vector.load %arg6[%c0_240, %c0_241] : memref<64x256xf32, #tpu.memory_space<vmem>>, vector<64x128xf32>
    tpu.vector_store %arg6[%c0_240, %c0_241], %279 {strides = array<i32>} : memref<64x256xf32, #tpu.memory_space<vmem>>, vector<64x128xf32>,
    %281 = vector.extract_strided_slice %278 {offsets = [56, 128], sizes = [8, 128], strides = [1, 1]} : vector<64x256xf32> to vector<8x128xf32>
    %c0_242 = arith.constant 0 : index
    %c128_243 = arith.constant 128 : index
    %282 = vector.load %arg6[%c0_242, %c128_243] : memref<64x256xf32, #tpu.memory_space<vmem>>, vector<8x128xf32>
    tpu.vector_store %arg6[%c0_242, %c128_243], %281 {strides = array<i32>} : memref<64x256xf32, #tpu.memory_space<vmem>>, vector<8x128xf32>,
    %283 = vector.extract_strided_slice %278 {offsets = [48, 128], sizes = [8, 128], strides = [1, 1]} : vector<64x256xf32> to vector<8x128xf32>
    %c8_244 = arith.constant 8 : index
    %c128_245 = arith.constant 128 : index
    %284 = vector.load %arg6[%c8_244, %c128_245] : memref<64x256xf32, #tpu.memory_space<vmem>>, vector<8x128xf32>
    tpu.vector_store %arg6[%c8_244, %c128_245], %283 {strides = array<i32>} : memref<64x256xf32, #tpu.memory_space<vmem>>, vector<8x128xf32>,
    %285 = vector.extract_strided_slice %278 {offsets = [40, 128], sizes = [8, 128], strides = [1, 1]} : vector<64x256xf32> to vector<8x128xf32>
    %c16_246 = arith.constant 16 : index
    %c128_247 = arith.constant 128 : index
    %286 = vector.load %arg6[%c16_246, %c128_247] : memref<64x256xf32, #tpu.memory_space<vmem>>, vector<8x128xf32>
    tpu.vector_store %arg6[%c16_246, %c128_247], %285 {strides = array<i32>} : memref<64x256xf32, #tpu.memory_space<vmem>>, vector<8x128xf32>,
    %287 = vector.extract_strided_slice %278 {offsets = [32, 128], sizes = [8, 128], strides = [1, 1]} : vector<64x256xf32> to vector<8x128xf32>
    %c24_248 = arith.constant 24 : index
    %c128_249 = arith.constant 128 : index
    %288 = vector.load %arg6[%c24_248, %c128_249] : memref<64x256xf32, #tpu.memory_space<vmem>>, vector<8x128xf32>
    tpu.vector_store %arg6[%c24_248, %c128_249], %287 {strides = array<i32>} : memref<64x256xf32, #tpu.memory_space<vmem>>, vector<8x128xf32>,
    %289 = vector.extract_strided_slice %278 {offsets = [24, 128], sizes = [8, 128], strides = [1, 1]} : vector<64x256xf32> to vector<8x128xf32>
    %c32_250 = arith.constant 32 : index
    %c128_251 = arith.constant 128 : index
    %290 = vector.load %arg6[%c32_250, %c128_251] : memref<64x256xf32, #tpu.memory_space<vmem>>, vector<8x128xf32>
    tpu.vector_store %arg6[%c32_250, %c128_251], %289 {strides = array<i32>} : memref<64x256xf32, #tpu.memory_space<vmem>>, vector<8x128xf32>,
    %291 = vector.extract_strided_slice %278 {offsets = [16, 128], sizes = [8, 128], strides = [1, 1]} : vector<64x256xf32> to vector<8x128xf32>
    %c40_252 = arith.constant 40 : index
    %c128_253 = arith.constant 128 : index
    %292 = vector.load %arg6[%c40_252, %c128_253] : memref<64x256xf32, #tpu.memory_space<vmem>>, vector<8x128xf32>
    tpu.vector_store %arg6[%c40_252, %c128_253], %291 {strides = array<i32>} : memref<64x256xf32, #tpu.memory_space<vmem>>, vector<8x128xf32>,
    %293 = vector.extract_strided_slice %278 {offsets = [8, 128], sizes = [8, 128], strides = [1, 1]} : vector<64x256xf32> to vector<8x128xf32>
    %c48_254 = arith.constant 48 : index
    %c128_255 = arith.constant 128 : index
    %294 = vector.load %arg6[%c48_254, %c128_255] : memref<64x256xf32, #tpu.memory_space<vmem>>, vector<8x128xf32>
    tpu.vector_store %arg6[%c48_254, %c128_255], %293 {strides = array<i32>} : memref<64x256xf32, #tpu.memory_space<vmem>>, vector<8x128xf32>,
    %295 = vector.extract_strided_slice %278 {offsets = [0, 128], sizes = [8, 128], strides = [1, 1]} : vector<64x256xf32> to vector<8x128xf32>
    %c56_256 = arith.constant 56 : index
    %c128_257 = arith.constant 128 : index
    %296 = vector.load %arg6[%c56_256, %c128_257] : memref<64x256xf32, #tpu.memory_space<vmem>>, vector<8x128xf32>
    tpu.vector_store %arg6[%c56_256, %c128_257], %295 {strides = array<i32>} : memref<64x256xf32, #tpu.memory_space<vmem>>, vector<8x128xf32>,
    %cst_258 = arith.constant 0.000000e+00 : f32
    %297 = vector.broadcast %cst_258 : f32 to vector<8x256xf32>
    %c0_259 = arith.constant 0 : index
    %c0_260 = arith.constant 0 : index
    %298 = vector.load %arg6[%c0_259, %c0_260] : memref<64x256xf32, #tpu.memory_space<vmem>>, vector<8x256xf32>
    %299 = arith.truncf %297 : vector<8x256xf32> to vector<8x256xbf16>
    %c672 = arith.constant 672 : index
    %c0_261 = arith.constant 0 : index
    %300 = vector.load %arg4[%c672, %c0_261] : memref<1984x256xbf16, #tpu.memory_space<vmem>>, vector<256x256xbf16>
    %cst_262 = arith.constant dense<0.000000e+00> : vector<8x256xf32>
    %301 = tpu.matmul %299, %300, %cst_262 {dimension_numbers = #tpu.dot_dimension_numbers<[1], [0], [0], [1], [0, 0, 1, 1], [], []>} : vector<8x256xbf16>, vector<256x256xbf16>, vector<8x256xf32> -> vector<8x256xf32>
    %302 = arith.addf %298, %301 : vector<8x256xf32>
    %303 = math.tanh %302 : vector<8x256xf32>
    %304 = vector.extract_strided_slice %303 {offsets = [0, 0], sizes = [8, 128], strides = [1, 1]} : vector<8x256xf32> to vector<8x128xf32>
    %c0_263 = arith.constant 0 : index
    %c0_264 = arith.constant 0 : index
    %305 = vector.load %arg8[%c0_263, %c0_264] : memref<64x256xf32, #tpu.memory_space<vmem>>, vector<8x128xf32>
    tpu.vector_store %arg8[%c0_263, %c0_264], %304 {strides = array<i32>} : memref<64x256xf32, #tpu.memory_space<vmem>>, vector<8x128xf32>,
    %306 = vector.extract_strided_slice %303 {offsets = [0, 128], sizes = [8, 128], strides = [1, 1]} : vector<8x256xf32> to vector<8x128xf32>
    %c56_265 = arith.constant 56 : index
    %c128_266 = arith.constant 128 : index
    %307 = vector.load %arg8[%c56_265, %c128_266] : memref<64x256xf32, #tpu.memory_space<vmem>>, vector<8x128xf32>
    tpu.vector_store %arg8[%c56_265, %c128_266], %306 {strides = array<i32>} : memref<64x256xf32, #tpu.memory_space<vmem>>, vector<8x128xf32>,
    %c8_267 = arith.constant 8 : index
    %c0_268 = arith.constant 0 : index
    %308 = vector.load %arg6[%c8_267, %c0_268] : memref<64x256xf32, #tpu.memory_space<vmem>>, vector<8x256xf32>
    %309 = arith.truncf %303 : vector<8x256xf32> to vector<8x256xbf16>
    %c672_269 = arith.constant 672 : index
    %c0_270 = arith.constant 0 : index
    %310 = vector.load %arg4[%c672_269, %c0_270] : memref<1984x256xbf16, #tpu.memory_space<vmem>>, vector<256x256xbf16>
    %cst_271 = arith.constant dense<0.000000e+00> : vector<8x256xf32>
    %311 = tpu.matmul %309, %310, %cst_271 {dimension_numbers = #tpu.dot_dimension_numbers<[1], [0], [0], [1], [0, 0, 1, 1], [], []>} : vector<8x256xbf16>, vector<256x256xbf16>, vector<8x256xf32> -> vector<8x256xf32>
    %312 = arith.addf %308, %311 : vector<8x256xf32>
    %313 = math.tanh %312 : vector<8x256xf32>
    %314 = vector.extract_strided_slice %313 {offsets = [0, 0], sizes = [8, 128], strides = [1, 1]} : vector<8x256xf32> to vector<8x128xf32>
    %c8_272 = arith.constant 8 : index
    %c0_273 = arith.constant 0 : index
    %315 = vector.load %arg8[%c8_272, %c0_273] : memref<64x256xf32, #tpu.memory_space<vmem>>, vector<8x128xf32>
    tpu.vector_store %arg8[%c8_272, %c0_273], %314 {strides = array<i32>} : memref<64x256xf32, #tpu.memory_space<vmem>>, vector<8x128xf32>,
    %316 = vector.extract_strided_slice %313 {offsets = [0, 128], sizes = [8, 128], strides = [1, 1]} : vector<8x256xf32> to vector<8x128xf32>
    %c48_274 = arith.constant 48 : index
    %c128_275 = arith.constant 128 : index
    %317 = vector.load %arg8[%c48_274, %c128_275] : memref<64x256xf32, #tpu.memory_space<vmem>>, vector<8x128xf32>
    tpu.vector_store %arg8[%c48_274, %c128_275], %316 {strides = array<i32>} : memref<64x256xf32, #tpu.memory_space<vmem>>, vector<8x128xf32>,
    %c16_276 = arith.constant 16 : index
    %c0_277 = arith.constant 0 : index
    %318 = vector.load %arg6[%c16_276, %c0_277] : memref<64x256xf32, #tpu.memory_space<vmem>>, vector<8x256xf32>
    %319 = arith.truncf %313 : vector<8x256xf32> to vector<8x256xbf16>
    %c672_278 = arith.constant 672 : index
    %c0_279 = arith.constant 0 : index
    %320 = vector.load %arg4[%c672_278, %c0_279] : memref<1984x256xbf16, #tpu.memory_space<vmem>>, vector<256x256xbf16>
    %cst_280 = arith.constant dense<0.000000e+00> : vector<8x256xf32>
    %321 = tpu.matmul %319, %320, %cst_280 {dimension_numbers = #tpu.dot_dimension_numbers<[1], [0], [0], [1], [0, 0, 1, 1], [], []>} : vector<8x256xbf16>, vector<256x256xbf16>, vector<8x256xf32> -> vector<8x256xf32>
    %322 = arith.addf %318, %321 : vector<8x256xf32>
    %323 = math.tanh %322 : vector<8x256xf32>
    %324 = vector.extract_strided_slice %323 {offsets = [0, 0], sizes = [8, 128], strides = [1, 1]} : vector<8x256xf32> to vector<8x128xf32>
    %c16_281 = arith.constant 16 : index
    %c0_282 = arith.constant 0 : index
    %325 = vector.load %arg8[%c16_281, %c0_282] : memref<64x256xf32, #tpu.memory_space<vmem>>, vector<8x128xf32>
    tpu.vector_store %arg8[%c16_281, %c0_282], %324 {strides = array<i32>} : memref<64x256xf32, #tpu.memory_space<vmem>>, vector<8x128xf32>,
    %326 = vector.extract_strided_slice %323 {offsets = [0, 128], sizes = [8, 128], strides = [1, 1]} : vector<8x256xf32> to vector<8x128xf32>
    %c40_283 = arith.constant 40 : index
    %c128_284 = arith.constant 128 : index
    %327 = vector.load %arg8[%c40_283, %c128_284] : memref<64x256xf32, #tpu.memory_space<vmem>>, vector<8x128xf32>
    tpu.vector_store %arg8[%c40_283, %c128_284], %326 {strides = array<i32>} : memref<64x256xf32, #tpu.memory_space<vmem>>, vector<8x128xf32>,
    %c24_285 = arith.constant 24 : index
    %c0_286 = arith.constant 0 : index
    %328 = vector.load %arg6[%c24_285, %c0_286] : memref<64x256xf32, #tpu.memory_space<vmem>>, vector<8x256xf32>
    %329 = arith.truncf %323 : vector<8x256xf32> to vector<8x256xbf16>
    %c672_287 = arith.constant 672 : index
    %c0_288 = arith.constant 0 : index
    %330 = vector.load %arg4[%c672_287, %c0_288] : memref<1984x256xbf16, #tpu.memory_space<vmem>>, vector<256x256xbf16>
    %cst_289 = arith.constant dense<0.000000e+00> : vector<8x256xf32>
    %331 = tpu.matmul %329, %330, %cst_289 {dimension_numbers = #tpu.dot_dimension_numbers<[1], [0], [0], [1], [0, 0, 1, 1], [], []>} : vector<8x256xbf16>, vector<256x256xbf16>, vector<8x256xf32> -> vector<8x256xf32>
    %332 = arith.addf %328, %331 : vector<8x256xf32>
    %333 = math.tanh %332 : vector<8x256xf32>
    %334 = vector.extract_strided_slice %333 {offsets = [0, 0], sizes = [8, 128], strides = [1, 1]} : vector<8x256xf32> to vector<8x128xf32>
    %c24_290 = arith.constant 24 : index
    %c0_291 = arith.constant 0 : index
    %335 = vector.load %arg8[%c24_290, %c0_291] : memref<64x256xf32, #tpu.memory_space<vmem>>, vector<8x128xf32>
    tpu.vector_store %arg8[%c24_290, %c0_291], %334 {strides = array<i32>} : memref<64x256xf32, #tpu.memory_space<vmem>>, vector<8x128xf32>,
    %336 = vector.extract_strided_slice %333 {offsets = [0, 128], sizes = [8, 128], strides = [1, 1]} : vector<8x256xf32> to vector<8x128xf32>
    %c32_292 = arith.constant 32 : index
    %c128_293 = arith.constant 128 : index
    %337 = vector.load %arg8[%c32_292, %c128_293] : memref<64x256xf32, #tpu.memory_space<vmem>>, vector<8x128xf32>
    tpu.vector_store %arg8[%c32_292, %c128_293], %336 {strides = array<i32>} : memref<64x256xf32, #tpu.memory_space<vmem>>, vector<8x128xf32>,
    %c32_294 = arith.constant 32 : index
    %c0_295 = arith.constant 0 : index
    %338 = vector.load %arg6[%c32_294, %c0_295] : memref<64x256xf32, #tpu.memory_space<vmem>>, vector<8x256xf32>
    %339 = arith.truncf %333 : vector<8x256xf32> to vector<8x256xbf16>
    %c672_296 = arith.constant 672 : index
    %c0_297 = arith.constant 0 : index
    %340 = vector.load %arg4[%c672_296, %c0_297] : memref<1984x256xbf16, #tpu.memory_space<vmem>>, vector<256x256xbf16>
    %cst_298 = arith.constant dense<0.000000e+00> : vector<8x256xf32>
    %341 = tpu.matmul %339, %340, %cst_298 {dimension_numbers = #tpu.dot_dimension_numbers<[1], [0], [0], [1], [0, 0, 1, 1], [], []>} : vector<8x256xbf16>, vector<256x256xbf16>, vector<8x256xf32> -> vector<8x256xf32>
    %342 = arith.addf %338, %341 : vector<8x256xf32>
    %343 = math.tanh %342 : vector<8x256xf32>
    %344 = vector.extract_strided_slice %343 {offsets = [0, 0], sizes = [8, 128], strides = [1, 1]} : vector<8x256xf32> to vector<8x128xf32>
    %c32_299 = arith.constant 32 : index
    %c0_300 = arith.constant 0 : index
    %345 = vector.load %arg8[%c32_299, %c0_300] : memref<64x256xf32, #tpu.memory_space<vmem>>, vector<8x128xf32>
    tpu.vector_store %arg8[%c32_299, %c0_300], %344 {strides = array<i32>} : memref<64x256xf32, #tpu.memory_space<vmem>>, vector<8x128xf32>,
    %346 = vector.extract_strided_slice %343 {offsets = [0, 128], sizes = [8, 128], strides = [1, 1]} : vector<8x256xf32> to vector<8x128xf32>
    %c24_301 = arith.constant 24 : index
    %c128_302 = arith.constant 128 : index
    %347 = vector.load %arg8[%c24_301, %c128_302] : memref<64x256xf32, #tpu.memory_space<vmem>>, vector<8x128xf32>
    tpu.vector_store %arg8[%c24_301, %c128_302], %346 {strides = array<i32>} : memref<64x256xf32, #tpu.memory_space<vmem>>, vector<8x128xf32>,
    %c40_303 = arith.constant 40 : index
    %c0_304 = arith.constant 0 : index
    %348 = vector.load %arg6[%c40_303, %c0_304] : memref<64x256xf32, #tpu.memory_space<vmem>>, vector<8x256xf32>
    %349 = arith.truncf %343 : vector<8x256xf32> to vector<8x256xbf16>
    %c672_305 = arith.constant 672 : index
    %c0_306 = arith.constant 0 : index
    %350 = vector.load %arg4[%c672_305, %c0_306] : memref<1984x256xbf16, #tpu.memory_space<vmem>>, vector<256x256xbf16>
    %cst_307 = arith.constant dense<0.000000e+00> : vector<8x256xf32>
    %351 = tpu.matmul %349, %350, %cst_307 {dimension_numbers = #tpu.dot_dimension_numbers<[1], [0], [0], [1], [0, 0, 1, 1], [], []>} : vector<8x256xbf16>, vector<256x256xbf16>, vector<8x256xf32> -> vector<8x256xf32>
    %352 = arith.addf %348, %351 : vector<8x256xf32>
    %353 = math.tanh %352 : vector<8x256xf32>
    %354 = vector.extract_strided_slice %353 {offsets = [0, 0], sizes = [8, 128], strides = [1, 1]} : vector<8x256xf32> to vector<8x128xf32>
    %c40_308 = arith.constant 40 : index
    %c0_309 = arith.constant 0 : index
    %355 = vector.load %arg8[%c40_308, %c0_309] : memref<64x256xf32, #tpu.memory_space<vmem>>, vector<8x128xf32>
    tpu.vector_store %arg8[%c40_308, %c0_309], %354 {strides = array<i32>} : memref<64x256xf32, #tpu.memory_space<vmem>>, vector<8x128xf32>,
    %356 = vector.extract_strided_slice %353 {offsets = [0, 128], sizes = [8, 128], strides = [1, 1]} : vector<8x256xf32> to vector<8x128xf32>
    %c16_310 = arith.constant 16 : index
    %c128_311 = arith.constant 128 : index
    %357 = vector.load %arg8[%c16_310, %c128_311] : memref<64x256xf32, #tpu.memory_space<vmem>>, vector<8x128xf32>
    tpu.vector_store %arg8[%c16_310, %c128_311], %356 {strides = array<i32>} : memref<64x256xf32, #tpu.memory_space<vmem>>, vector<8x128xf32>,
    %c48_312 = arith.constant 48 : index
    %c0_313 = arith.constant 0 : index
    %358 = vector.load %arg6[%c48_312, %c0_313] : memref<64x256xf32, #tpu.memory_space<vmem>>, vector<8x256xf32>
    %359 = arith.truncf %353 : vector<8x256xf32> to vector<8x256xbf16>
    %c672_314 = arith.constant 672 : index
    %c0_315 = arith.constant 0 : index
    %360 = vector.load %arg4[%c672_314, %c0_315] : memref<1984x256xbf16, #tpu.memory_space<vmem>>, vector<256x256xbf16>
    %cst_316 = arith.constant dense<0.000000e+00> : vector<8x256xf32>
    %361 = tpu.matmul %359, %360, %cst_316 {dimension_numbers = #tpu.dot_dimension_numbers<[1], [0], [0], [1], [0, 0, 1, 1], [], []>} : vector<8x256xbf16>, vector<256x256xbf16>, vector<8x256xf32> -> vector<8x256xf32>
    %362 = arith.addf %358, %361 : vector<8x256xf32>
    %363 = math.tanh %362 : vector<8x256xf32>
    %364 = vector.extract_strided_slice %363 {offsets = [0, 0], sizes = [8, 128], strides = [1, 1]} : vector<8x256xf32> to vector<8x128xf32>
    %c48_317 = arith.constant 48 : index
    %c0_318 = arith.constant 0 : index
    %365 = vector.load %arg8[%c48_317, %c0_318] : memref<64x256xf32, #tpu.memory_space<vmem>>, vector<8x128xf32>
    tpu.vector_store %arg8[%c48_317, %c0_318], %364 {strides = array<i32>} : memref<64x256xf32, #tpu.memory_space<vmem>>, vector<8x128xf32>,
    %366 = vector.extract_strided_slice %363 {offsets = [0, 128], sizes = [8, 128], strides = [1, 1]} : vector<8x256xf32> to vector<8x128xf32>
    %c8_319 = arith.constant 8 : index
    %c128_320 = arith.constant 128 : index
    %367 = vector.load %arg8[%c8_319, %c128_320] : memref<64x256xf32, #tpu.memory_space<vmem>>, vector<8x128xf32>
    tpu.vector_store %arg8[%c8_319, %c128_320], %366 {strides = array<i32>} : memref<64x256xf32, #tpu.memory_space<vmem>>, vector<8x128xf32>,
    %c56_321 = arith.constant 56 : index
    %c0_322 = arith.constant 0 : index
    %368 = vector.load %arg6[%c56_321, %c0_322] : memref<64x256xf32, #tpu.memory_space<vmem>>, vector<8x256xf32>
    %369 = arith.truncf %363 : vector<8x256xf32> to vector<8x256xbf16>
    %c672_323 = arith.constant 672 : index
    %c0_324 = arith.constant 0 : index
    %370 = vector.load %arg4[%c672_323, %c0_324] : memref<1984x256xbf16, #tpu.memory_space<vmem>>, vector<256x256xbf16>
    %cst_325 = arith.constant dense<0.000000e+00> : vector<8x256xf32>
    %371 = tpu.matmul %369, %370, %cst_325 {dimension_numbers = #tpu.dot_dimension_numbers<[1], [0], [0], [1], [0, 0, 1, 1], [], []>} : vector<8x256xbf16>, vector<256x256xbf16>, vector<8x256xf32> -> vector<8x256xf32>
    %372 = arith.addf %368, %371 : vector<8x256xf32>
    %373 = math.tanh %372 : vector<8x256xf32>
    %374 = vector.extract_strided_slice %373 {offsets = [0, 0], sizes = [8, 128], strides = [1, 1]} : vector<8x256xf32> to vector<8x128xf32>
    %c56_326 = arith.constant 56 : index
    %c0_327 = arith.constant 0 : index
    %375 = vector.load %arg8[%c56_326, %c0_327] : memref<64x256xf32, #tpu.memory_space<vmem>>, vector<8x128xf32>
    tpu.vector_store %arg8[%c56_326, %c0_327], %374 {strides = array<i32>} : memref<64x256xf32, #tpu.memory_space<vmem>>, vector<8x128xf32>,
    %376 = vector.extract_strided_slice %373 {offsets = [0, 128], sizes = [8, 128], strides = [1, 1]} : vector<8x256xf32> to vector<8x128xf32>
    %c0_328 = arith.constant 0 : index
    %c128_329 = arith.constant 128 : index
    %377 = vector.load %arg8[%c0_328, %c128_329] : memref<64x256xf32, #tpu.memory_space<vmem>>, vector<8x128xf32>
    tpu.vector_store %arg8[%c0_328, %c128_329], %376 {strides = array<i32>} : memref<64x256xf32, #tpu.memory_space<vmem>>, vector<8x128xf32>,
    %c2_i32_330 = arith.constant 2 : i32
    %c928_i32_331 = arith.constant 928 : i32
    %c0_i32_332 = arith.constant 0 : i32
    %378 = tpu.memref_slice %arg2[%c928_i32_331, %c0_i32_332] : memref<1984x256xbf16, #tpu.memory_space<any>> -> memref<1056x256xbf16, #tpu.memory_space<any>>
    %c928_i32_333 = arith.constant 928 : i32
    %c0_i32_334 = arith.constant 0 : i32
    %379 = tpu.memref_slice %arg4[%c928_i32_333, %c0_i32_334] : memref<1984x256xbf16, #tpu.memory_space<vmem>> -> memref<1056x256xbf16, #tpu.memory_space<vmem>>
    %380 = tpu.memref_slice %arg9[%c2_i32_330] : memref<3x!tpu.dma_semaphore, #tpu.memory_space<semaphore_mem>> -> memref<1x!tpu.dma_semaphore, #tpu.memory_space<semaphore_mem>>
    %381 = tpu.memref_squeeze %380 : memref<1x!tpu.dma_semaphore, #tpu.memory_space<semaphore_mem>> -> memref<!tpu.dma_semaphore, #tpu.memory_space<semaphore_mem>>
    tpu.wait_dma2 semaphore(%381 : memref<!tpu.dma_semaphore, #tpu.memory_space<semaphore_mem>>) src(%378 : memref<1056x256xbf16, #tpu.memory_space<any>>) dst(%379 : memref<1056x256xbf16, #tpu.memory_space<vmem>>)
    %c0_335 = arith.constant 0 : index
    %c0_336 = arith.constant 0 : index
    %382 = vector.load %arg8[%c0_335, %c0_336] : memref<64x256xf32, #tpu.memory_space<vmem>>, vector<64x256xf32>
    %383 = arith.truncf %382 : vector<64x256xf32> to vector<64x256xbf16>
    %c1184 = arith.constant 1184 : index
    %c0_337 = arith.constant 0 : index
    %384 = vector.load %arg4[%c1184, %c0_337] : memref<1984x256xbf16, #tpu.memory_space<vmem>>, vector<1x256xbf16>
    %385 = arith.extf %384 : vector<1x256xbf16> to vector<1x256xf32>
    %c928 = arith.constant 928 : index
    %c0_338 = arith.constant 0 : index
    %386 = vector.load %arg4[%c928, %c0_338] : memref<1984x256xbf16, #tpu.memory_space<vmem>>, vector<256x256xbf16>
    %cst_339 = arith.constant dense<0.000000e+00> : vector<64x256xf32>
    %387 = tpu.matmul %383, %386, %cst_339 {dimension_numbers = #tpu.dot_dimension_numbers<[1], [0], [0], [1], [0, 0, 1, 1], [], []>} : vector<64x256xbf16>, vector<256x256xbf16>, vector<64x256xf32> -> vector<64x256xf32>
    %388 = vector.broadcast %385 : vector<1x256xf32> to vector<64x256xf32>
    %389 = arith.addf %387, %388 : vector<64x256xf32>
    %390 = vector.extract_strided_slice %389 {offsets = [0, 0], sizes = [64, 128], strides = [1, 1]} : vector<64x256xf32> to vector<64x128xf32>
    %c0_340 = arith.constant 0 : index
    %c0_341 = arith.constant 0 : index
    %391 = vector.load %arg6[%c0_340, %c0_341] : memref<64x256xf32, #tpu.memory_space<vmem>>, vector<64x128xf32>
    tpu.vector_store %arg6[%c0_340, %c0_341], %390 {strides = array<i32>} : memref<64x256xf32, #tpu.memory_space<vmem>>, vector<64x128xf32>,
    %392 = vector.extract_strided_slice %389 {offsets = [56, 128], sizes = [8, 128], strides = [1, 1]} : vector<64x256xf32> to vector<8x128xf32>
    %c0_342 = arith.constant 0 : index
    %c128_343 = arith.constant 128 : index
    %393 = vector.load %arg6[%c0_342, %c128_343] : memref<64x256xf32, #tpu.memory_space<vmem>>, vector<8x128xf32>
    tpu.vector_store %arg6[%c0_342, %c128_343], %392 {strides = array<i32>} : memref<64x256xf32, #tpu.memory_space<vmem>>, vector<8x128xf32>,
    %394 = vector.extract_strided_slice %389 {offsets = [48, 128], sizes = [8, 128], strides = [1, 1]} : vector<64x256xf32> to vector<8x128xf32>
    %c8_344 = arith.constant 8 : index
    %c128_345 = arith.constant 128 : index
    %395 = vector.load %arg6[%c8_344, %c128_345] : memref<64x256xf32, #tpu.memory_space<vmem>>, vector<8x128xf32>
    tpu.vector_store %arg6[%c8_344, %c128_345], %394 {strides = array<i32>} : memref<64x256xf32, #tpu.memory_space<vmem>>, vector<8x128xf32>,
    %396 = vector.extract_strided_slice %389 {offsets = [40, 128], sizes = [8, 128], strides = [1, 1]} : vector<64x256xf32> to vector<8x128xf32>
    %c16_346 = arith.constant 16 : index
    %c128_347 = arith.constant 128 : index
    %397 = vector.load %arg6[%c16_346, %c128_347] : memref<64x256xf32, #tpu.memory_space<vmem>>, vector<8x128xf32>
    tpu.vector_store %arg6[%c16_346, %c128_347], %396 {strides = array<i32>} : memref<64x256xf32, #tpu.memory_space<vmem>>, vector<8x128xf32>,
    %398 = vector.extract_strided_slice %389 {offsets = [32, 128], sizes = [8, 128], strides = [1, 1]} : vector<64x256xf32> to vector<8x128xf32>
    %c24_348 = arith.constant 24 : index
    %c128_349 = arith.constant 128 : index
    %399 = vector.load %arg6[%c24_348, %c128_349] : memref<64x256xf32, #tpu.memory_space<vmem>>, vector<8x128xf32>
    tpu.vector_store %arg6[%c24_348, %c128_349], %398 {strides = array<i32>} : memref<64x256xf32, #tpu.memory_space<vmem>>, vector<8x128xf32>,
    %400 = vector.extract_strided_slice %389 {offsets = [24, 128], sizes = [8, 128], strides = [1, 1]} : vector<64x256xf32> to vector<8x128xf32>
    %c32_350 = arith.constant 32 : index
    %c128_351 = arith.constant 128 : index
    %401 = vector.load %arg6[%c32_350, %c128_351] : memref<64x256xf32, #tpu.memory_space<vmem>>, vector<8x128xf32>
    tpu.vector_store %arg6[%c32_350, %c128_351], %400 {strides = array<i32>} : memref<64x256xf32, #tpu.memory_space<vmem>>, vector<8x128xf32>,
    %402 = vector.extract_strided_slice %389 {offsets = [16, 128], sizes = [8, 128], strides = [1, 1]} : vector<64x256xf32> to vector<8x128xf32>
    %c40_352 = arith.constant 40 : index
    %c128_353 = arith.constant 128 : index
    %403 = vector.load %arg6[%c40_352, %c128_353] : memref<64x256xf32, #tpu.memory_space<vmem>>, vector<8x128xf32>
    tpu.vector_store %arg6[%c40_352, %c128_353], %402 {strides = array<i32>} : memref<64x256xf32, #tpu.memory_space<vmem>>, vector<8x128xf32>,
    %404 = vector.extract_strided_slice %389 {offsets = [8, 128], sizes = [8, 128], strides = [1, 1]} : vector<64x256xf32> to vector<8x128xf32>
    %c48_354 = arith.constant 48 : index
    %c128_355 = arith.constant 128 : index
    %405 = vector.load %arg6[%c48_354, %c128_355] : memref<64x256xf32, #tpu.memory_space<vmem>>, vector<8x128xf32>
    tpu.vector_store %arg6[%c48_354, %c128_355], %404 {strides = array<i32>} : memref<64x256xf32, #tpu.memory_space<vmem>>, vector<8x128xf32>,
    %406 = vector.extract_strided_slice %389 {offsets = [0, 128], sizes = [8, 128], strides = [1, 1]} : vector<64x256xf32> to vector<8x128xf32>
    %c56_356 = arith.constant 56 : index
    %c128_357 = arith.constant 128 : index
    %407 = vector.load %arg6[%c56_356, %c128_357] : memref<64x256xf32, #tpu.memory_space<vmem>>, vector<8x128xf32>
    tpu.vector_store %arg6[%c56_356, %c128_357], %406 {strides = array<i32>} : memref<64x256xf32, #tpu.memory_space<vmem>>, vector<8x128xf32>,
    %cst_358 = arith.constant 0.000000e+00 : f32
    %408 = vector.broadcast %cst_358 : f32 to vector<8x256xf32>
    %c0_359 = arith.constant 0 : index
    %c0_360 = arith.constant 0 : index
    %409 = vector.load %arg6[%c0_359, %c0_360] : memref<64x256xf32, #tpu.memory_space<vmem>>, vector<8x256xf32>
    %410 = arith.truncf %408 : vector<8x256xf32> to vector<8x256xbf16>
    %c1200 = arith.constant 1200 : index
    %c0_361 = arith.constant 0 : index
    %411 = vector.load %arg4[%c1200, %c0_361] : memref<1984x256xbf16, #tpu.memory_space<vmem>>, vector<256x256xbf16>
    %cst_362 = arith.constant dense<0.000000e+00> : vector<8x256xf32>
    %412 = tpu.matmul %410, %411, %cst_362 {dimension_numbers = #tpu.dot_dimension_numbers<[1], [0], [0], [1], [0, 0, 1, 1], [], []>} : vector<8x256xbf16>, vector<256x256xbf16>, vector<8x256xf32> -> vector<8x256xf32>
    %413 = arith.addf %409, %412 : vector<8x256xf32>
    %414 = math.tanh %413 : vector<8x256xf32>
    %c8_363 = arith.constant 8 : index
    %c0_364 = arith.constant 0 : index
    %415 = vector.load %arg6[%c8_363, %c0_364] : memref<64x256xf32, #tpu.memory_space<vmem>>, vector<8x256xf32>
    %416 = arith.truncf %414 : vector<8x256xf32> to vector<8x256xbf16>
    %c1200_365 = arith.constant 1200 : index
    %c0_366 = arith.constant 0 : index
    %417 = vector.load %arg4[%c1200_365, %c0_366] : memref<1984x256xbf16, #tpu.memory_space<vmem>>, vector<256x256xbf16>
    %cst_367 = arith.constant dense<0.000000e+00> : vector<8x256xf32>
    %418 = tpu.matmul %416, %417, %cst_367 {dimension_numbers = #tpu.dot_dimension_numbers<[1], [0], [0], [1], [0, 0, 1, 1], [], []>} : vector<8x256xbf16>, vector<256x256xbf16>, vector<8x256xf32> -> vector<8x256xf32>
    %419 = arith.addf %415, %418 : vector<8x256xf32>
    %420 = math.tanh %419 : vector<8x256xf32>
    %c16_368 = arith.constant 16 : index
    %c0_369 = arith.constant 0 : index
    %421 = vector.load %arg6[%c16_368, %c0_369] : memref<64x256xf32, #tpu.memory_space<vmem>>, vector<8x256xf32>
    %422 = arith.truncf %420 : vector<8x256xf32> to vector<8x256xbf16>
    %c1200_370 = arith.constant 1200 : index
    %c0_371 = arith.constant 0 : index
    %423 = vector.load %arg4[%c1200_370, %c0_371] : memref<1984x256xbf16, #tpu.memory_space<vmem>>, vector<256x256xbf16>
    %cst_372 = arith.constant dense<0.000000e+00> : vector<8x256xf32>
    %424 = tpu.matmul %422, %423, %cst_372 {dimension_numbers = #tpu.dot_dimension_numbers<[1], [0], [0], [1], [0, 0, 1, 1], [], []>} : vector<8x256xbf16>, vector<256x256xbf16>, vector<8x256xf32> -> vector<8x256xf32>
    %425 = arith.addf %421, %424 : vector<8x256xf32>
    %426 = math.tanh %425 : vector<8x256xf32>
    %c24_373 = arith.constant 24 : index
    %c0_374 = arith.constant 0 : index
    %427 = vector.load %arg6[%c24_373, %c0_374] : memref<64x256xf32, #tpu.memory_space<vmem>>, vector<8x256xf32>
    %428 = arith.truncf %426 : vector<8x256xf32> to vector<8x256xbf16>
    %c1200_375 = arith.constant 1200 : index
    %c0_376 = arith.constant 0 : index
    %429 = vector.load %arg4[%c1200_375, %c0_376] : memref<1984x256xbf16, #tpu.memory_space<vmem>>, vector<256x256xbf16>
    %cst_377 = arith.constant dense<0.000000e+00> : vector<8x256xf32>
    %430 = tpu.matmul %428, %429, %cst_377 {dimension_numbers = #tpu.dot_dimension_numbers<[1], [0], [0], [1], [0, 0, 1, 1], [], []>} : vector<8x256xbf16>, vector<256x256xbf16>, vector<8x256xf32> -> vector<8x256xf32>
    %431 = arith.addf %427, %430 : vector<8x256xf32>
    %432 = math.tanh %431 : vector<8x256xf32>
    %c32_378 = arith.constant 32 : index
    %c0_379 = arith.constant 0 : index
    %433 = vector.load %arg6[%c32_378, %c0_379] : memref<64x256xf32, #tpu.memory_space<vmem>>, vector<8x256xf32>
    %434 = arith.truncf %432 : vector<8x256xf32> to vector<8x256xbf16>
    %c1200_380 = arith.constant 1200 : index
    %c0_381 = arith.constant 0 : index
    %435 = vector.load %arg4[%c1200_380, %c0_381] : memref<1984x256xbf16, #tpu.memory_space<vmem>>, vector<256x256xbf16>
    %cst_382 = arith.constant dense<0.000000e+00> : vector<8x256xf32>
    %436 = tpu.matmul %434, %435, %cst_382 {dimension_numbers = #tpu.dot_dimension_numbers<[1], [0], [0], [1], [0, 0, 1, 1], [], []>} : vector<8x256xbf16>, vector<256x256xbf16>, vector<8x256xf32> -> vector<8x256xf32>
    %437 = arith.addf %433, %436 : vector<8x256xf32>
    %438 = math.tanh %437 : vector<8x256xf32>
    %c40_383 = arith.constant 40 : index
    %c0_384 = arith.constant 0 : index
    %439 = vector.load %arg6[%c40_383, %c0_384] : memref<64x256xf32, #tpu.memory_space<vmem>>, vector<8x256xf32>
    %440 = arith.truncf %438 : vector<8x256xf32> to vector<8x256xbf16>
    %c1200_385 = arith.constant 1200 : index
    %c0_386 = arith.constant 0 : index
    %441 = vector.load %arg4[%c1200_385, %c0_386] : memref<1984x256xbf16, #tpu.memory_space<vmem>>, vector<256x256xbf16>
    %cst_387 = arith.constant dense<0.000000e+00> : vector<8x256xf32>
    %442 = tpu.matmul %440, %441, %cst_387 {dimension_numbers = #tpu.dot_dimension_numbers<[1], [0], [0], [1], [0, 0, 1, 1], [], []>} : vector<8x256xbf16>, vector<256x256xbf16>, vector<8x256xf32> -> vector<8x256xf32>
    %443 = arith.addf %439, %442 : vector<8x256xf32>
    %444 = math.tanh %443 : vector<8x256xf32>
    %c48_388 = arith.constant 48 : index
    %c0_389 = arith.constant 0 : index
    %445 = vector.load %arg6[%c48_388, %c0_389] : memref<64x256xf32, #tpu.memory_space<vmem>>, vector<8x256xf32>
    %446 = arith.truncf %444 : vector<8x256xf32> to vector<8x256xbf16>
    %c1200_390 = arith.constant 1200 : index
    %c0_391 = arith.constant 0 : index
    %447 = vector.load %arg4[%c1200_390, %c0_391] : memref<1984x256xbf16, #tpu.memory_space<vmem>>, vector<256x256xbf16>
    %cst_392 = arith.constant dense<0.000000e+00> : vector<8x256xf32>
    %448 = tpu.matmul %446, %447, %cst_392 {dimension_numbers = #tpu.dot_dimension_numbers<[1], [0], [0], [1], [0, 0, 1, 1], [], []>} : vector<8x256xbf16>, vector<256x256xbf16>, vector<8x256xf32> -> vector<8x256xf32>
    %449 = arith.addf %445, %448 : vector<8x256xf32>
    %450 = math.tanh %449 : vector<8x256xf32>
    %c56_393 = arith.constant 56 : index
    %c0_394 = arith.constant 0 : index
    %451 = vector.load %arg6[%c56_393, %c0_394] : memref<64x256xf32, #tpu.memory_space<vmem>>, vector<8x256xf32>
    %452 = arith.truncf %450 : vector<8x256xf32> to vector<8x256xbf16>
    %c1200_395 = arith.constant 1200 : index
    %c0_396 = arith.constant 0 : index
    %453 = vector.load %arg4[%c1200_395, %c0_396] : memref<1984x256xbf16, #tpu.memory_space<vmem>>, vector<256x256xbf16>
    %cst_397 = arith.constant dense<0.000000e+00> : vector<8x256xf32>
    %454 = tpu.matmul %452, %453, %cst_397 {dimension_numbers = #tpu.dot_dimension_numbers<[1], [0], [0], [1], [0, 0, 1, 1], [], []>} : vector<8x256xbf16>, vector<256x256xbf16>, vector<8x256xf32> -> vector<8x256xf32>
    %455 = arith.addf %451, %454 : vector<8x256xf32>
    %456 = math.tanh %455 : vector<8x256xf32>
    %457 = tpu.concatenate %414, %456 in 1 : vector<8x256xf32>, vector<8x256xf32> -> vector<8x512xf32>
    %458 = arith.truncf %457 : vector<8x512xf32> to vector<8x512xbf16>
    %c1456 = arith.constant 1456 : index
    %c0_398 = arith.constant 0 : index
    %459 = vector.load %arg4[%c1456, %c0_398] : memref<1984x256xbf16, #tpu.memory_space<vmem>>, vector<512x256xbf16>
    %cst_399 = arith.constant dense<0.000000e+00> : vector<8x256xf32>
    %460 = tpu.matmul %458, %459, %cst_399 {dimension_numbers = #tpu.dot_dimension_numbers<[1], [0], [0], [1], [0, 0, 1, 1], [], []>} : vector<8x512xbf16>, vector<512x256xbf16>, vector<8x256xf32> -> vector<8x256xf32>
    %c1968 = arith.constant 1968 : index
    %c0_400 = arith.constant 0 : index
    %461 = vector.load %arg4[%c1968, %c0_400] : memref<1984x256xbf16, #tpu.memory_space<vmem>>, vector<1x256xbf16>
    %462 = arith.extf %461 : vector<1x256xbf16> to vector<1x256xf32>
    %463 = vector.broadcast %462 : vector<1x256xf32> to vector<8x256xf32>
    %464 = arith.addf %460, %463 : vector<8x256xf32>
    %cst_401 = arith.constant 0.000000e+00 : f32
    %465 = vector.broadcast %cst_401 : f32 to vector<8x256xf32>
    %466 = arith.maximumf %464, %465 : vector<8x256xf32>
    %c1976 = arith.constant 1976 : index
    %c0_402 = arith.constant 0 : index
    %467 = vector.load %arg4[%c1976, %c0_402] : memref<1984x256xbf16, #tpu.memory_space<vmem>>, vector<1x256xbf16>
    %468 = arith.extf %467 : vector<1x256xbf16> to vector<1x256xf32>
    %469 = vector.broadcast %468 : vector<1x256xf32> to vector<8x256xf32>
    %470 = arith.mulf %466, %469 : vector<8x256xf32>
    %cst_403 = arith.constant dense<0.000000e+00> : vector<8xf32>
    %471 = vector.multi_reduction <add>, %470, %cst_403 [1] : vector<8x256xf32> to vector<8xf32>
    %472 = vector.shape_cast %471 : vector<8xf32> to vector<8x1xf32>
    %473 = arith.negf %472 : vector<8x1xf32>
    %474 = math.exp %473 : vector<8x1xf32>
    %cst_404 = arith.constant 1.000000e+00 : f32
    %475 = vector.broadcast %cst_404 : f32 to vector<8x1xf32>
    %476 = arith.addf %475, %474 : vector<8x1xf32>
    %477 = arith.divf %475, %476 : vector<8x1xf32>
    %478 = vector.shape_cast %477 : vector<8x1xf32> to vector<8x1xf32>
    %479 = vector.broadcast %478 : vector<8x1xf32> to vector<8x128xf32>
    %c0_405 = arith.constant 0 : index
    %c0_406 = arith.constant 0 : index
    %480 = vector.load %arg3[%c0_405, %c0_406] : memref<8x128xf32, #tpu.memory_space<vmem>>, vector<8x128xf32>
    tpu.vector_store %arg3[%c0_405, %c0_406], %479 {strides = array<i32>} : memref<8x128xf32, #tpu.memory_space<vmem>>, vector<8x128xf32>,
    return
  }
}

</mosaic_0001>

<llo_original>
// kernel: rnn_forward.1
$region0: #{rnn_forward.1}
  #allocation0 [shape = 'u32[]', space=smem, size = 0x4, offset = 0x4, fixed_abs, tag = 'smem constant byte address 0x4 - core index']
  #allocation1 [shape = 'u32[144,128]{1,0:T(1,128)}', space=vmem, size = 0x12000, scoped, tag = 'internal scratch']
  #allocation2 [shape = 'bf16[1984,256]{1,0:T(16,128)(2,1)}', space=vmem, size = 0xf8000, scoped, tag = 'scratch operand']
  #allocation3 [shape = 'f32[64,128]{1,0:T(8,128)}', space=vmem, size = 0x8000, scoped, tag = 'scratch operand']
  #allocation4 [shape = 'f32[64,256]{1,0:T(8,128)}', space=vmem, size = 0x10000, scoped, tag = 'scratch operand']
  #allocation5 [shape = 'f32[64,256]{1,0:T(8,128)}', space=vmem, size = 0x10000, scoped, tag = 'scratch operand']
  #allocation6 [shape = 'f32[64,256]{1,0:T(8,128)}', space=vmem, size = 0x10000, scoped, tag = 'scratch operand']
  #allocation7 [shape = 's32[3]{0}', space=sflag, size = 0xc, scoped, tag = 'scratch operand']
  #allocation8 [shape = 's32[16]{0}', space=sflag, size = 0x40, scoped, tag = 'scratch operand']
  #allocation11 [shape = 's32[]', space=sflag, size = 0x4, offset = 0, fixed_abs, tag = 'sflag constant byte address 0x0 - dummy sync flag']
  #allocation13 [shape = 's32[]', space=sflag, size = 0x4, offset = 0, fixed_abs, tag = 'sflag constant byte address 0x0 - dummy sync flag']
  #allocation14 [shape = 's32[]', space=sflag, size = 0x4, offset = 0, fixed_abs, tag = 'sflag constant byte address 0x0 - dummy sync flag']
  #allocation15 [shape = 'u32[]', space=smem, size = 0x4, offset = 0x44, fixed_abs, tag = 'smem constant byte address 0x44 - assertion arg 0']
  #allocation16 [shape = 'u32[]', space=smem, size = 0x4, offset = 0x48, fixed_abs, tag = 'smem constant byte address 0x48 - assertion arg 1']
  #allocation17 [shape = 's32[]', space=sflag, size = 0x4, offset = 0, fixed_abs, tag = 'sflag constant byte address 0x0 - dummy sync flag']
  #allocation18 [shape = 's32[]', space=sflag, size = 0x4, offset = 0, fixed_abs, tag = 'sflag constant byte address 0x0 - dummy sync flag']
  #allocation19 [shape = 's32[]', space=sflag, size = 0x4, offset = 0, fixed_abs, tag = 'sflag constant byte address 0x0 - dummy sync flag']
  #allocation20 [shape = 's32[]', space=sflag, size = 0x4, offset = 0, fixed_abs, tag = 'sflag constant byte address 0x0 - dummy sync flag']
  #allocation21 [shape = 's32[]', space=sflag, size = 0x4, offset = 0, fixed_abs, tag = 'sflag constant byte address 0x0 - dummy sync flag']
  #allocation22 [shape = 's32[]', space=sflag, size = 0x4, offset = 0, fixed_abs, tag = 'sflag constant byte address 0x0 - dummy sync flag']
  #allocation23 [shape = 's32[]', space=sflag, size = 0x4, offset = 0, fixed_abs, tag = 'sflag constant byte address 0x0 - dummy sync flag']
  #allocation24 [shape = 's32[]', space=sflag, size = 0x4, offset = 0, fixed_abs, tag = 'sflag constant byte address 0x0 - dummy sync flag']
  #allocation25 [shape = 's32[]', space=sflag, size = 0x4, offset = 0, fixed_abs, tag = 'sflag constant byte address 0x0 - dummy sync flag']
  #allocation26 [shape = 's32[]', space=sflag, size = 0x4, offset = 0, fixed_abs, tag = 'sflag constant byte address 0x0 - dummy sync flag']
  #allocation27 [shape = 's32[]', space=sflag, size = 0x4, offset = 0, fixed_abs, tag = 'sflag constant byte address 0x0 - dummy sync flag']
  #allocation28 [shape = 's32[]', space=sflag, size = 0x4, offset = 0, fixed_abs, tag = 'sflag constant byte address 0x0 - dummy sync flag']
  #allocation29 [shape = 's32[]', space=sflag, size = 0x4, offset = 0, fixed_abs, tag = 'sflag constant byte address 0x0 - dummy sync flag']
  #allocation30 [shape = 's32[]', space=sflag, size = 0x4, offset = 0, fixed_abs, tag = 'sflag constant byte address 0x0 - dummy sync flag']
  #allocation31 [shape = 's32[]', space=sflag, size = 0x4, offset = 0, fixed_abs, tag = 'sflag constant byte address 0x0 - dummy sync flag']
  #allocation32 [shape = 's32[]', space=sflag, size = 0x4, offset = 0, fixed_abs, tag = 'sflag constant byte address 0x0 - dummy sync flag']
  #allocation33 [shape = 's32[]', space=sflag, size = 0x4, offset = 0, fixed_abs, tag = 'sflag constant byte address 0x0 - dummy sync flag']
  #allocation34 [shape = 's32[]', space=sflag, size = 0x4, offset = 0, fixed_abs, tag = 'sflag constant byte address 0x0 - dummy sync flag']
  #allocation35 [shape = 's32[]', space=sflag, size = 0x4, offset = 0, fixed_abs, tag = 'sflag constant byte address 0x0 - dummy sync flag']
  #allocation36 [shape = 's32[]', space=sflag, size = 0x4, offset = 0, fixed_abs, tag = 'sflag constant byte address 0x0 - dummy sync flag']
  #allocation37 [shape = 's32[]', space=sflag, size = 0x4, offset = 0, fixed_abs, tag = 'sflag constant byte address 0x0 - dummy sync flag']
  #allocation38 [shape = 's32[]', space=sflag, size = 0x4, offset = 0, fixed_abs, tag = 'sflag constant byte address 0x0 - dummy sync flag']
  #allocation39 [shape = 's32[]', space=sflag, size = 0x4, offset = 0, fixed_abs, tag = 'sflag constant byte address 0x0 - dummy sync flag']
  #allocation40 [shape = 's32[]', space=sflag, size = 0x4, offset = 0, fixed_abs, tag = 'sflag constant byte address 0x0 - dummy sync flag']
  #allocation41 [shape = 's32[]', space=sflag, size = 0x4, offset = 0, fixed_abs, tag = 'sflag constant byte address 0x0 - dummy sync flag']
  #allocation42 [shape = 's32[]', space=sflag, size = 0x4, offset = 0, fixed_abs, tag = 'sflag constant byte address 0x0 - dummy sync flag']
  #allocation43 [shape = 's32[]', space=sflag, size = 0x4, offset = 0, fixed_abs, tag = 'sflag constant byte address 0x0 - dummy sync flag']
  #allocation44 [shape = 's32[]', space=sflag, size = 0x4, offset = 0, fixed_abs, tag = 'sflag constant byte address 0x0 - dummy sync flag']
  #allocation45 [shape = 's32[]', space=sflag, size = 0x4, offset = 0, fixed_abs, tag = 'sflag constant byte address 0x0 - dummy sync flag']
  #allocation46 [shape = 's32[]', space=sflag, size = 0x4, offset = 0, fixed_abs, tag = 'sflag constant byte address 0x0 - dummy sync flag']
  #allocation47 [shape = 's32[]', space=sflag, size = 0x4, offset = 0, fixed_abs, tag = 'sflag constant byte address 0x0 - dummy sync flag']
  #allocation49 [shape = 's32[]', space=sflag, size = 0x4, offset = 0, fixed_abs, tag = 'sflag constant byte address 0x0 - dummy sync flag']
  %s0 = inlined_call_operand.hbm [shape: s32[2,8], index: 0, kind: input, shape index: {}]
  %s1 = inlined_call_operand.hbm [shape: f32[40002,128], index: 1, kind: input, shape index: {}]
  %s2 = inlined_call_operand.hbm [shape: bf16[1984,256], index: 2, kind: input, shape index: {}]
  %s3 = inlined_call_operand.vmem [shape: f32[8,128], index: 3, kind: output, shape index: {}]
  %s4 = sld [smem:[#allocation0]]
  $region82: #{rnn_forward.1} parent=0
    _
  %s6 = ssub.s32 1, %s4
  %s7 = scalar_select 0, %s6, %s4
  $region1: #{rnn_forward.1} parent=0
    #allocation9 [shape = 'u8[1024]{0}', space=smem, size = 0x400, scoped, tag = 'input window, operand 0, single buffered']
    #allocation10 [shape = 's32[1]{0}', space=sflag, size = 0x4, scoped, tag = 'scoped memory for rnn_forward.1']
    #allocation12 [shape = 'u32[9]{0}', space=smem, size = 0x24, scoped, tag = 'DMA stride descriptor']
    #allocation48 [shape = 'u32[9]{0}', space=smem, size = 0x24, scoped, tag = 'DMA stride descriptor']
    #allocation50 [shape = 'u32[9]{0}', space=smem, size = 0x24, scoped, tag = 'DMA stride descriptor']
    %8 = vsyncpa [#allocation10], 0
    // Predicated region
    $region2: #{rnn_forward.1} parent=1 // pred_check
      _
    $region3: #{rnn_forward.1} parent=1 // pred_check_branch
      %10 = sbr.rel (0) target = $region5
    $region4: #{rnn_forward.1} parent=1 // pred_region
      %s12 = ssub.s32 32, 32
      %13 = vsyncadd [#allocation10], %s12
      %16 = dma.hbm_to_smem %s0, 32, [#allocation9], [#allocation10]
    $region5: #{rnn_forward.1} parent=1 // pred_fallthru
      _
    // Predicated region
    $region6: #{rnn_forward.1} parent=1 // pred_check
      _
    $region7: #{rnn_forward.1} parent=1 // pred_check_branch
      %18 = sbr.rel (0) target = $region9
    $region8: #{rnn_forward.1} parent=1 // pred_region
      %19 = dma.done [#allocation10], 32
    $region9: #{rnn_forward.1} parent=1 // pred_fallthru
      _
    %20 = sfence
    %s23 = sshll.u32 1, 14
    %s24 = sxor.u32 4294967295, %s23
    %s26 = sld [smem:[#allocation0]]
    %s27 = sadd.s32 2, %s26
    %s29 = sshll.u32 7, 26
    %s30 = sxor.u32 4294967295, %s29
    %s31 = sand.u32 0, %s30
    %s32 = sshll.u32 %s27, 26
    %s33 = sor.u32 %s31, %s32
    %s34 = sshll.u32 [#allocation2], 4
    %s35 = int_to_ptr.vmem [resolvable:$true] %s34
    %38 = sst [smem:[#allocation12]] 256
    %s39 = scalar_lea.smem [#allocation12], 1
    %40 = sst [smem:[%s39]] 256
    %s41 = scalar_lea.smem [#allocation12], 2
    %42 = sst [smem:[%s41]] 2
    %s43 = scalar_lea.smem [#allocation12], 3
    %44 = sst [smem:[%s43]] 64
    %s45 = scalar_lea.smem [#allocation12], 4
    %46 = sst [smem:[%s45]] 128
    %s47 = scalar_lea.smem [#allocation12], 5
    %48 = sst [smem:[%s47]] 2
    %s49 = scalar_lea.smem [#allocation12], 6
    %50 = sst [smem:[%s49]] 128
    %s51 = scalar_lea.smem [#allocation12], 7
    %52 = sst [smem:[%s51]] 64
    %s53 = scalar_lea.smem [#allocation12], 8
    %54 = sst [smem:[%s53]] 4
    %56 = dma.general %s2, 6400, %s35, [#allocation7], [#allocation11], [#allocation12], %s33, 0
    %s57 = sld [smem:[#allocation9]]
    %s58 = smul.addr %s57, 16
    %s59 = scalar_lea.hbm %s1, %s58
    // Predicated region
    $region10: #{rnn_forward.1} parent=1 // pred_check
      _
    $region11: #{rnn_forward.1} parent=1 // pred_check_branch
      %61 = sbr.rel target = $region13
    $region12: #{rnn_forward.1} parent=1 // pred_region
      %62 = sst [smem:[#allocation15]] [#allocation14]
      %63 = sst [smem:[#allocation16]] [#allocation13]
    $region13: #{rnn_forward.1} parent=1 // pred_fallthru
      _
    %65 = shalt.err (0)
    %s67 = sshll.u32 [#allocation3], 4
    %s68 = int_to_ptr.vmem [resolvable:$true] %s67
    %70 = dma.hbm_to_vmem [thread:$0]  %s59, 16, %s68, [#allocation8]
    %s71 = sld [smem:[#allocation9 + $0x80]]
    %s72 = smul.addr %s71, 16
    %s73 = scalar_lea.hbm %s1, %s72
    %s74 = scalar_lea.vmem [#allocation3], 1
    %s75 = scalar_lea.sflag [#allocation8], 1
    // Predicated region
    $region14: #{rnn_forward.1} parent=1 // pred_check
      _
    $region15: #{rnn_forward.1} parent=1 // pred_check_branch
      %77 = sbr.rel target = $region17
    $region16: #{rnn_forward.1} parent=1 // pred_region
      %78 = sst [smem:[#allocation15]] [#allocation18]
      %79 = sst [smem:[#allocation16]] [#allocation17]
    $region17: #{rnn_forward.1} parent=1 // pred_fallthru
      _
    %81 = shalt.err (0)
    %s83 = sshll.u32 %s74, 4
    %s84 = int_to_ptr.vmem [resolvable:$true] %s83
    %86 = dma.hbm_to_vmem [thread:$0]  %s73, 16, %s84, %s75
    %s87 = sld [smem:[#allocation9 + $0x1]]
    %s88 = smul.addr %s87, 16
    %s89 = scalar_lea.hbm %s1, %s88
    %s90 = scalar_lea.vmem [#allocation3], 8
    %s91 = scalar_lea.sflag [#allocation8], 2
    // Predicated region
    $region18: #{rnn_forward.1} parent=1 // pred_check
      _
    $region19: #{rnn_forward.1} parent=1 // pred_check_branch
      %93 = sbr.rel target = $region21
    $region20: #{rnn_forward.1} parent=1 // pred_region
      %94 = sst [smem:[#allocation15]] [#allocation20]
      %95 = sst [smem:[#allocation16]] [#allocation19]
    $region21: #{rnn_forward.1} parent=1 // pred_fallthru
      _
    %97 = shalt.err (0)
    %s99 = sshll.u32 %s90, 4
    %s100 = int_to_ptr.vmem [resolvable:$true] %s99
    %102 = dma.hbm_to_vmem [thread:$0]  %s89, 16, %s100, %s91
    %s103 = sld [smem:[#allocation9 + $0x81]]
    %s104 = smul.addr %s103, 16
    %s105 = scalar_lea.hbm %s1, %s104
    %s106 = scalar_lea.vmem [#allocation3], 9
    %s107 = scalar_lea.sflag [#allocation8], 3
    // Predicated region
    $region22: #{rnn_forward.1} parent=1 // pred_check
      _
    $region23: #{rnn_forward.1} parent=1 // pred_check_branch
      %109 = sbr.rel target = $region25
    $region24: #{rnn_forward.1} parent=1 // pred_region
      %110 = sst [smem:[#allocation15]] [#allocation22]
      %111 = sst [smem:[#allocation16]] [#allocation21]
    $region25: #{rnn_forward.1} parent=1 // pred_fallthru
      _
    %113 = shalt.err (0)
    %s115 = sshll.u32 %s106, 4
    %s116 = int_to_ptr.vmem [resolvable:$true] %s115
    %118 = dma.hbm_to_vmem [thread:$0]  %s105, 16, %s116, %s107
    %s119 = sld [smem:[#allocation9 + $0x2]]
    %s120 = smul.addr %s119, 16
    %s121 = scalar_lea.hbm %s1, %s120
    %s122 = scalar_lea.vmem [#allocation3], 16
    %s123 = scalar_lea.sflag [#allocation8], 4
    // Predicated region
    $region26: #{rnn_forward.1} parent=1 // pred_check
      _
    $region27: #{rnn_forward.1} parent=1 // pred_check_branch
      %125 = sbr.rel target = $region29
    $region28: #{rnn_forward.1} parent=1 // pred_region
      %126 = sst [smem:[#allocation15]] [#allocation24]
      %127 = sst [smem:[#allocation16]] [#allocation23]
    $region29: #{rnn_forward.1} parent=1 // pred_fallthru
      _
    %129 = shalt.err (0)
    %s131 = sshll.u32 %s122, 4
    %s132 = int_to_ptr.vmem [resolvable:$true] %s131
    %134 = dma.hbm_to_vmem [thread:$0]  %s121, 16, %s132, %s123
    %s135 = sld [smem:[#allocation9 + $0x82]]
    %s136 = smul.addr %s135, 16
    %s137 = scalar_lea.hbm %s1, %s136
    %s138 = scalar_lea.vmem [#allocation3], 17
    %s139 = scalar_lea.sflag [#allocation8], 5
    // Predicated region
    $region30: #{rnn_forward.1} parent=1 // pred_check
      _
    $region31: #{rnn_forward.1} parent=1 // pred_check_branch
      %141 = sbr.rel target = $region33
    $region32: #{rnn_forward.1} parent=1 // pred_region
      %142 = sst [smem:[#allocation15]] [#allocation26]
      %143 = sst [smem:[#allocation16]] [#allocation25]
    $region33: #{rnn_forward.1} parent=1 // pred_fallthru
      _
    %145 = shalt.err (0)
    %s147 = sshll.u32 %s138, 4
    %s148 = int_to_ptr.vmem [resolvable:$true] %s147
    %150 = dma.hbm_to_vmem [thread:$0]  %s137, 16, %s148, %s139
    %s151 = sld [smem:[#allocation9 + $0x3]]
    %s152 = smul.addr %s151, 16
    %s153 = scalar_lea.hbm %s1, %s152
    %s154 = scalar_lea.vmem [#allocation3], 24
    %s155 = scalar_lea.sflag [#allocation8], 6
    // Predicated region
    $region34: #{rnn_forward.1} parent=1 // pred_check
      _
    $region35: #{rnn_forward.1} parent=1 // pred_check_branch
      %157 = sbr.rel target = $region37
    $region36: #{rnn_forward.1} parent=1 // pred_region
      %158 = sst [smem:[#allocation15]] [#allocation28]
      %159 = sst [smem:[#allocation16]] [#allocation27]
    $region37: #{rnn_forward.1} parent=1 // pred_fallthru
      _
    %161 = shalt.err (0)
    %s163 = sshll.u32 %s154, 4
    %s164 = int_to_ptr.vmem [resolvable:$true] %s163
    %166 = dma.hbm_to_vmem [thread:$0]  %s153, 16, %s164, %s155
    %s167 = sld [smem:[#allocation9 + $0x83]]
    %s168 = smul.addr %s167, 16
    %s169 = scalar_lea.hbm %s1, %s168
    %s170 = scalar_lea.vmem [#allocation3], 25
    %s171 = scalar_lea.sflag [#allocation8], 7
    // Predicated region
    $region38: #{rnn_forward.1} parent=1 // pred_check
      _
    $region39: #{rnn_forward.1} parent=1 // pred_check_branch
      %173 = sbr.rel target = $region41
    $region40: #{rnn_forward.1} parent=1 // pred_region
      %174 = sst [smem:[#allocation15]] [#allocation30]
      %175 = sst [smem:[#allocation16]] [#allocation29]
    $region41: #{rnn_forward.1} parent=1 // pred_fallthru
      _
    %177 = shalt.err (0)
    %s179 = sshll.u32 %s170, 4
    %s180 = int_to_ptr.vmem [resolvable:$true] %s179
    %182 = dma.hbm_to_vmem [thread:$0]  %s169, 16, %s180, %s171
    %s183 = sld [smem:[#allocation9 + $0x4]]
    %s184 = smul.addr %s183, 16
    %s185 = scalar_lea.hbm %s1, %s184
    %s186 = scalar_lea.vmem [#allocation3], 32
    %s187 = scalar_lea.sflag [#allocation8], 8
    // Predicated region
    $region42: #{rnn_forward.1} parent=1 // pred_check
      _
    $region43: #{rnn_forward.1} parent=1 // pred_check_branch
      %189 = sbr.rel target = $region45
    $region44: #{rnn_forward.1} parent=1 // pred_region
      %190 = sst [smem:[#allocation15]] [#allocation32]
      %191 = sst [smem:[#allocation16]] [#allocation31]
    $region45: #{rnn_forward.1} parent=1 // pred_fallthru
      _
    %193 = shalt.err (0)
    %s195 = sshll.u32 %s186, 4
    %s196 = int_to_ptr.vmem [resolvable:$true] %s195
    %198 = dma.hbm_to_vmem [thread:$0]  %s185, 16, %s196, %s187
    %s199 = sld [smem:[#allocation9 + $0x84]]
    %s200 = smul.addr %s199, 16
    %s201 = scalar_lea.hbm %s1, %s200
    %s202 = scalar_lea.vmem [#allocation3], 33
    %s203 = scalar_lea.sflag [#allocation8], 9
    // Predicated region
    $region46: #{rnn_forward.1} parent=1 // pred_check
      _
    $region47: #{rnn_forward.1} parent=1 // pred_check_branch
      %205 = sbr.rel target = $region49
    $region48: #{rnn_forward.1} parent=1 // pred_region
      %206 = sst [smem:[#allocation15]] [#allocation34]
      %207 = sst [smem:[#allocation16]] [#allocation33]
    $region49: #{rnn_forward.1} parent=1 // pred_fallthru
      _
    %209 = shalt.err (0)
    %s211 = sshll.u32 %s202, 4
    %s212 = int_to_ptr.vmem [resolvable:$true] %s211
    %214 = dma.hbm_to_vmem [thread:$0]  %s201, 16, %s212, %s203
    %s215 = sld [smem:[#allocation9 + $0x5]]
    %s216 = smul.addr %s215, 16
    %s217 = scalar_lea.hbm %s1, %s216
    %s218 = scalar_lea.vmem [#allocation3], 40
    %s219 = scalar_lea.sflag [#allocation8], 10
    // Predicated region
    $region50: #{rnn_forward.1} parent=1 // pred_check
      _
    $region51: #{rnn_forward.1} parent=1 // pred_check_branch
      %221 = sbr.rel target = $region53
    $region52: #{rnn_forward.1} parent=1 // pred_region
      %222 = sst [smem:[#allocation15]] [#allocation36]
      %223 = sst [smem:[#allocation16]] [#allocation35]
    $region53: #{rnn_forward.1} parent=1 // pred_fallthru
      _
    %225 = shalt.err (0)
    %s227 = sshll.u32 %s218, 4
    %s228 = int_to_ptr.vmem [resolvable:$true] %s227
    %230 = dma.hbm_to_vmem [thread:$0]  %s217, 16, %s228, %s219
    %s231 = sld [smem:[#allocation9 + $0x85]]
    %s232 = smul.addr %s231, 16
    %s233 = scalar_lea.hbm %s1, %s232
    %s234 = scalar_lea.vmem [#allocation3], 41
    %s235 = scalar_lea.sflag [#allocation8], 11
    // Predicated region
    $region54: #{rnn_forward.1} parent=1 // pred_check
      _
    $region55: #{rnn_forward.1} parent=1 // pred_check_branch
      %237 = sbr.rel target = $region57
    $region56: #{rnn_forward.1} parent=1 // pred_region
      %238 = sst [smem:[#allocation15]] [#allocation38]
      %239 = sst [smem:[#allocation16]] [#allocation37]
    $region57: #{rnn_forward.1} parent=1 // pred_fallthru
      _
    %241 = shalt.err (0)
    %s243 = sshll.u32 %s234, 4
    %s244 = int_to_ptr.vmem [resolvable:$true] %s243
    %246 = dma.hbm_to_vmem [thread:$0]  %s233, 16, %s244, %s235
    %s247 = sld [smem:[#allocation9 + $0x6]]
    %s248 = smul.addr %s247, 16
    %s249 = scalar_lea.hbm %s1, %s248
    %s250 = scalar_lea.vmem [#allocation3], 48
    %s251 = scalar_lea.sflag [#allocation8], 12
    // Predicated region
    $region58: #{rnn_forward.1} parent=1 // pred_check
      _
    $region59: #{rnn_forward.1} parent=1 // pred_check_branch
      %253 = sbr.rel target = $region61
    $region60: #{rnn_forward.1} parent=1 // pred_region
      %254 = sst [smem:[#allocation15]] [#allocation40]
      %255 = sst [smem:[#allocation16]] [#allocation39]
    $region61: #{rnn_forward.1} parent=1 // pred_fallthru
      _
    %257 = shalt.err (0)
    %s259 = sshll.u32 %s250, 4
    %s260 = int_to_ptr.vmem [resolvable:$true] %s259
    %262 = dma.hbm_to_vmem [thread:$0]  %s249, 16, %s260, %s251
    %s263 = sld [smem:[#allocation9 + $0x86]]
    %s264 = smul.addr %s263, 16
    %s265 = scalar_lea.hbm %s1, %s264
    %s266 = scalar_lea.vmem [#allocation3], 49
    %s267 = scalar_lea.sflag [#allocation8], 13
    // Predicated region
    $region62: #{rnn_forward.1} parent=1 // pred_check
      _
    $region63: #{rnn_forward.1} parent=1 // pred_check_branch
      %269 = sbr.rel target = $region65
    $region64: #{rnn_forward.1} parent=1 // pred_region
      %270 = sst [smem:[#allocation15]] [#allocation42]
      %271 = sst [smem:[#allocation16]] [#allocation41]
    $region65: #{rnn_forward.1} parent=1 // pred_fallthru
      _
    %273 = shalt.err (0)
    %s275 = sshll.u32 %s266, 4
    %s276 = int_to_ptr.vmem [resolvable:$true] %s275
    %278 = dma.hbm_to_vmem [thread:$0]  %s265, 16, %s276, %s267
    %s279 = sld [smem:[#allocation9 + $0x7]]
    %s280 = smul.addr %s279, 16
    %s281 = scalar_lea.hbm %s1, %s280
    %s282 = scalar_lea.vmem [#allocation3], 56
    %s283 = scalar_lea.sflag [#allocation8], 14
    // Predicated region
    $region66: #{rnn_forward.1} parent=1 // pred_check
      _
    $region67: #{rnn_forward.1} parent=1 // pred_check_branch
      %285 = sbr.rel target = $region69
    $region68: #{rnn_forward.1} parent=1 // pred_region
      %286 = sst [smem:[#allocation15]] [#allocation44]
      %287 = sst [smem:[#allocation16]] [#allocation43]
    $region69: #{rnn_forward.1} parent=1 // pred_fallthru
      _
    %289 = shalt.err (0)
    %s291 = sshll.u32 %s282, 4
    %s292 = int_to_ptr.vmem [resolvable:$true] %s291
    %294 = dma.hbm_to_vmem [thread:$0]  %s281, 16, %s292, %s283
    %s295 = sld [smem:[#allocation9 + $0x87]]
    %s296 = smul.addr %s295, 16
    %s297 = scalar_lea.hbm %s1, %s296
    %s298 = scalar_lea.vmem [#allocation3], 57
    %s299 = scalar_lea.sflag [#allocation8], 15
    // Predicated region
    $region70: #{rnn_forward.1} parent=1 // pred_check
      _
    $region71: #{rnn_forward.1} parent=1 // pred_check_branch
      %301 = sbr.rel target = $region73
    $region72: #{rnn_forward.1} parent=1 // pred_region
      %302 = sst [smem:[#allocation15]] [#allocation46]
      %303 = sst [smem:[#allocation16]] [#allocation45]
    $region73: #{rnn_forward.1} parent=1 // pred_fallthru
      _
    %305 = shalt.err (0)
    %s307 = sshll.u32 %s298, 4
    %s308 = int_to_ptr.vmem [resolvable:$true] %s307
    %310 = dma.hbm_to_vmem [thread:$0]  %s297, 16, %s308, %s299
    %s311 = scalar_lea.hbm %s2, 6400
    %s312 = scalar_lea.vmem [#allocation2], 400
    %s313 = scalar_lea.sflag [#allocation7], 1
    %s315 = sshll.u32 1, 14
    %s316 = sxor.u32 4294967295, %s315
    %s318 = sadd.s32 2, %s26
    %s320 = sshll.u32 7, 26
    %s321 = sxor.u32 4294967295, %s320
    %s322 = sand.u32 0, %s321
    %s323 = sshll.u32 %s318, 26
    %s324 = sor.u32 %s322, %s323
    %s325 = sshll.u32 %s312, 4
    %s326 = int_to_ptr.vmem [resolvable:$true] %s325
    %329 = sst [smem:[#allocation48]] 256
    %s330 = scalar_lea.smem [#allocation48], 1
    %331 = sst [smem:[%s330]] 256
    %s332 = scalar_lea.smem [#allocation48], 2
    %333 = sst [smem:[%s332]] 2
    %s334 = scalar_lea.smem [#allocation48], 3
    %335 = sst [smem:[%s334]] 64
    %s336 = scalar_lea.smem [#allocation48], 4
    %337 = sst [smem:[%s336]] 128
    %s338 = scalar_lea.smem [#allocation48], 5
    %339 = sst [smem:[%s338]] 2
    %s340 = scalar_lea.smem [#allocation48], 6
    %341 = sst [smem:[%s340]] 128
    %s342 = scalar_lea.smem [#allocation48], 7
    %343 = sst [smem:[%s342]] 64
    %s344 = scalar_lea.smem [#allocation48], 8
    %345 = sst [smem:[%s344]] 4
    %347 = dma.general %s311, 8448, %s326, %s313, [#allocation47], [#allocation48], %s324, 0
    %s348 = scalar_lea.hbm %s2, 14848
    %s349 = scalar_lea.vmem [#allocation2], 928
    %s350 = scalar_lea.sflag [#allocation7], 2
    %s352 = sshll.u32 1, 14
    %s353 = sxor.u32 4294967295, %s352
    %s355 = sadd.s32 2, %s26
    %s357 = sshll.u32 7, 26
    %s358 = sxor.u32 4294967295, %s357
    %s359 = sand.u32 0, %s358
    %s360 = sshll.u32 %s355, 26
    %s361 = sor.u32 %s359, %s360
    %s362 = sshll.u32 %s349, 4
    %s363 = int_to_ptr.vmem [resolvable:$true] %s362
    %366 = sst [smem:[#allocation50]] 256
    %s367 = scalar_lea.smem [#allocation50], 1
    %368 = sst [smem:[%s367]] 256
    %s369 = scalar_lea.smem [#allocation50], 2
    %370 = sst [smem:[%s369]] 2
    %s371 = scalar_lea.smem [#allocation50], 3
    %372 = sst [smem:[%s371]] 64
    %s373 = scalar_lea.smem [#allocation50], 4
    %374 = sst [smem:[%s373]] 128
    %s375 = scalar_lea.smem [#allocation50], 5
    %376 = sst [smem:[%s375]] 2
    %s377 = scalar_lea.smem [#allocation50], 6
    %378 = sst [smem:[%s377]] 128
    %s379 = scalar_lea.smem [#allocation50], 7
    %380 = sst [smem:[%s379]] 64
    %s381 = scalar_lea.smem [#allocation50], 8
    %382 = sst [smem:[%s381]] 4
    %384 = dma.general %s348, 16896, %s363, %s350, [#allocation49], [#allocation50], %s361, 0
    %s385 = smul.u32 4, 50
    %s386 = smul.u32 %s385, 2
    %s387 = sshll.u32 %s386, 4
    %388 = dma.done [#allocation7], %s387
    %s389 = smul.u32 1, 1
    %s390 = sshll.u32 %s389, 4
    %391 = dma.done [#allocation8], %s390
    %s392 = sshll.u32 %s389, 4
    %393 = dma.done %s75, %s392
    %s394 = sshll.u32 %s389, 4
    %395 = dma.done %s91, %s394
    %s396 = sshll.u32 %s389, 4
    %397 = dma.done %s107, %s396
    %s398 = sshll.u32 %s389, 4
    %399 = dma.done %s123, %s398
    %s400 = sshll.u32 %s389, 4
    %401 = dma.done %s139, %s400
    %s402 = sshll.u32 %s389, 4
    %403 = dma.done %s155, %s402
    %s404 = sshll.u32 %s389, 4
    %405 = dma.done %s171, %s404
    %s406 = sshll.u32 %s389, 4
    %407 = dma.done %s187, %s406
    %s408 = sshll.u32 %s389, 4
    %409 = dma.done %s203, %s408
    %s410 = sshll.u32 %s389, 4
    %411 = dma.done %s219, %s410
    %s412 = sshll.u32 %s389, 4
    %413 = dma.done %s235, %s412
    %s414 = sshll.u32 %s389, 4
    %415 = dma.done %s251, %s414
    %s416 = sshll.u32 %s389, 4
    %417 = dma.done %s267, %s416
    %s418 = sshll.u32 %s389, 4
    %419 = dma.done %s283, %s418
    %s420 = sshll.u32 %s389, 4
    %421 = dma.done %s299, %s420
    %v422 = vld [vmem:[#allocation3] sm:$0xff]
    %v423 = vld [vmem:[#allocation3 + $0x8] sm:$0xff]
    %v424 = vld [vmem:[#allocation3 + $0x10] sm:$0xff]
    %v425 = vld [vmem:[#allocation3 + $0x18] sm:$0xff]
    %v426 = vld [vmem:[#allocation3 + $0x20] sm:$0xff]
    %v427 = vld [vmem:[#allocation3 + $0x28] sm:$0xff]
    %v428 = vld [vmem:[#allocation3 + $0x30] sm:$0xff]
    %v429 = vld [vmem:[#allocation3 + $0x38] sm:$0xff]
    %v430 = vpack.c.bf16 %v423, %v422
    %v431 = vpack.c.bf16 %v425, %v424
    %v432 = vpack.c.bf16 %v427, %v426
    %v433 = vpack.c.bf16 %v429, %v428
    %v434 = vld [vmem:[#allocation2 + $0x80] sm:$0x1]
    %v435 = vld [vmem:[#allocation2 + $0x88] sm:$0x1]
    %v436 = vunpack.c.l.bf16 %v434
    %v437 = vunpack.c.l.bf16 %v435
    %v438 = vld [vmem:[#allocation2] sm:$0xff]
    %v439 = vld [vmem:[#allocation2 + $0x8] sm:$0xff]
    %v440 = vld [vmem:[#allocation2 + $0x10] sm:$0xff]
    %v441 = vld [vmem:[#allocation2 + $0x18] sm:$0xff]
    %v442 = vld [vmem:[#allocation2 + $0x20] sm:$0xff]
    %v443 = vld [vmem:[#allocation2 + $0x28] sm:$0xff]
    %v444 = vld [vmem:[#allocation2 + $0x30] sm:$0xff]
    %v445 = vld [vmem:[#allocation2 + $0x38] sm:$0xff]
    %v446 = vld [vmem:[#allocation2 + $0x40] sm:$0xff]
    %v447 = vld [vmem:[#allocation2 + $0x48] sm:$0xff]
    %v448 = vld [vmem:[#allocation2 + $0x50] sm:$0xff]
    %v449 = vld [vmem:[#allocation2 + $0x58] sm:$0xff]
    %v450 = vld [vmem:[#allocation2 + $0x60] sm:$0xff]
    %v451 = vld [vmem:[#allocation2 + $0x68] sm:$0xff]
    %v452 = vld [vmem:[#allocation2 + $0x70] sm:$0xff]
    %v453 = vld [vmem:[#allocation2 + $0x78] sm:$0xff]
    %v454 = vlaneseq
    %v455 = vshrl.u32 %v454, 7
    %v456 = vsub.s32 0, %v455
    %v457 = vrot.slane %v436, %v456
    %v458 = vlaneseq
    %v459 = vshrl.u32 %v458, 7
    %v460 = vsub.s32 0, %v459
    %v461 = vrot.slane %v437, %v460
    %462 = vmatprep.subr.bf16.mxu0 %v439
    %463 = vmatpush1.bf16.msra.mxu0 %v438
    %464 = vmatprep.subr.bf16.mxu0 %v441
    %465 = vmatpush1.bf16.msra.mxu0 %v440
    %466 = vmatprep.subr.bf16.mxu0 %v443
    %467 = vmatpush1.bf16.msra.mxu0 %v442
    %468 = vmatprep.subr.bf16.mxu0 %v445
    %469 = vmatpush1.bf16.msra.mxu0 %v444
    %470 = vmatprep.subr.bf16.mxu0 %v447
    %471 = vmatpush1.bf16.msra.mxu0 %v446
    %472 = vmatprep.subr.bf16.mxu0 %v449
    %473 = vmatpush1.bf16.msra.mxu0 %v448
    %474 = vmatprep.subr.bf16.mxu0 %v451
    %475 = vmatpush1.bf16.msra.mxu0 %v450
    %476 = vmatprep.subr.bf16.mxu0 %v453
    %477 = vmatpush1.bf16.msra.mxu0 %v452
    %478 = vmatprep.subr.bf16.mxu0 0
    %479 = vmatpush1.bf16.msra.mxu0 0
    %480 = vmatprep.subr.bf16.mxu0 0
    %481 = vmatpush1.bf16.msra.mxu0 0
    %482 = vmatprep.subr.bf16.mxu0 0
    %483 = vmatpush1.bf16.msra.mxu0 0
    %484 = vmatprep.subr.bf16.mxu0 0
    %485 = vmatpush1.bf16.msra.mxu0 0
    %486 = vmatprep.subr.bf16.mxu0 0
    %487 = vmatpush1.bf16.msra.mxu0 0
    %488 = vmatprep.subr.bf16.mxu0 0
    %489 = vmatpush1.bf16.msra.mxu0 0
    %490 = vmatprep.subr.bf16.mxu0 0
    %491 = vmatpush1.bf16.msra.mxu0 0
    %492 = vmatprep.subr.bf16.mxu0 0
    %493 = vmatpush1.bf16.msra.mxu0 0
    %494 = vmatprep.mubr.bf16.mxu0 0
    %495 = vmatmul.mubr.bf16.gmra.mrb[0].mxu0 %v430
    %v496 = vpop.f32.mrb[0].mxu0
    %v497 = vadd.f32 %v457, %v496
    %v498 = vpop.f32.mrb[0].mxu0
    %v499 = vadd.f32 %v461, %v498
    %v500 = vpop.f32.mrb[0].mxu0
    %v501 = vadd.f32 %v457, %v500
    %v502 = vpop.f32.mrb[0].mxu0
    %v503 = vadd.f32 %v461, %v502
    %504 = vmatprep.mubr.bf16.mxu0 0
    %505 = vmatmul.mubr.bf16.gmra.mrb[0].mxu0 %v431
    %v506 = vpop.f32.mrb[0].mxu0
    %v507 = vadd.f32 %v457, %v506
    %v508 = vpop.f32.mrb[0].mxu0
    %v509 = vadd.f32 %v461, %v508
    %v510 = vpop.f32.mrb[0].mxu0
    %v511 = vadd.f32 %v457, %v510
    %v512 = vpop.f32.mrb[0].mxu0
    %v513 = vadd.f32 %v461, %v512
    %514 = vmatprep.mubr.bf16.mxu0 0
    %515 = vmatmul.mubr.bf16.gmra.mrb[0].mxu0 %v432
    %v516 = vpop.f32.mrb[0].mxu0
    %v517 = vadd.f32 %v457, %v516
    %v518 = vpop.f32.mrb[0].mxu0
    %v519 = vadd.f32 %v461, %v518
    %v520 = vpop.f32.mrb[0].mxu0
    %v521 = vadd.f32 %v457, %v520
    %v522 = vpop.f32.mrb[0].mxu0
    %v523 = vadd.f32 %v461, %v522
    %524 = vmatprep.mubr.bf16.mxu0 0
    %525 = vmatmul.mubr.bf16.gmra.mrb[0].mxu0 %v433
    %v526 = vpop.f32.mrb[0].mxu0
    %v527 = vadd.f32 %v457, %v526
    %v528 = vpop.f32.mrb[0].mxu0
    %v529 = vadd.f32 %v461, %v528
    %v530 = vpop.f32.mrb[0].mxu0
    %v531 = vadd.f32 %v457, %v530
    %v532 = vpop.f32.mrb[0].mxu0
    %v533 = vadd.f32 %v461, %v532
    %534 = vdwg.mxu0
    %535 = vst [vmem:[#allocation4] sm:$0xff] %v497
    %536 = vst [vmem:[#allocation4 + $0x10] sm:$0xff] %v501
    %537 = vst [vmem:[#allocation4 + $0x20] sm:$0xff] %v507
    %538 = vst [vmem:[#allocation4 + $0x30] sm:$0xff] %v511
    %539 = vst [vmem:[#allocation4 + $0x40] sm:$0xff] %v517
    %540 = vst [vmem:[#allocation4 + $0x50] sm:$0xff] %v521
    %541 = vst [vmem:[#allocation4 + $0x60] sm:$0xff] %v527
    %542 = vst [vmem:[#allocation4 + $0x70] sm:$0xff] %v531
    %543 = vst [vmem:[#allocation4 + $0x8] sm:$0xff] %v533
    %544 = vst [vmem:[#allocation4 + $0x18] sm:$0xff] %v529
    %545 = vst [vmem:[#allocation4 + $0x28] sm:$0xff] %v523
    %546 = vst [vmem:[#allocation4 + $0x38] sm:$0xff] %v519
    %547 = vst [vmem:[#allocation4 + $0x48] sm:$0xff] %v513
    %548 = vst [vmem:[#allocation4 + $0x58] sm:$0xff] %v509
    %549 = vst [vmem:[#allocation4 + $0x68] sm:$0xff] %v503
    %550 = vst [vmem:[#allocation4 + $0x78] sm:$0xff] %v499
    %v551 = vld [vmem:[#allocation4] sm:$0xff]
    %v552 = vld [vmem:[#allocation4 + $0x8] sm:$0xff]
    %v553 = vld [vmem:[#allocation2 + $0x90] sm:$0xff]
    %v554 = vld [vmem:[#allocation2 + $0x98] sm:$0xff]
    %v555 = vld [vmem:[#allocation2 + $0xa0] sm:$0xff]
    %v556 = vld [vmem:[#allocation2 + $0xa8] sm:$0xff]
    %v557 = vld [vmem:[#allocation2 + $0xb0] sm:$0xff]
    %v558 = vld [vmem:[#allocation2 + $0xb8] sm:$0xff]
    %v559 = vld [vmem:[#allocation2 + $0xc0] sm:$0xff]
    %v560 = vld [vmem:[#allocation2 + $0xc8] sm:$0xff]
    %v561 = vld [vmem:[#allocation2 + $0xd0] sm:$0xff]
    %v562 = vld [vmem:[#allocation2 + $0xd8] sm:$0xff]
    %v563 = vld [vmem:[#allocation2 + $0xe0] sm:$0xff]
    %v564 = vld [vmem:[#allocation2 + $0xe8] sm:$0xff]
    %v565 = vld [vmem:[#allocation2 + $0xf0] sm:$0xff]
    %v566 = vld [vmem:[#allocation2 + $0xf8] sm:$0xff]
    %v567 = vld [vmem:[#allocation2 + $0x100] sm:$0xff]
    %v568 = vld [vmem:[#allocation2 + $0x108] sm:$0xff]
    %v569 = vld [vmem:[#allocation2 + $0x110] sm:$0xff]
    %v570 = vld [vmem:[#allocation2 + $0x118] sm:$0xff]
    %v571 = vld [vmem:[#allocation2 + $0x120] sm:$0xff]
    %v572 = vld [vmem:[#allocation2 + $0x128] sm:$0xff]
    %v573 = vld [vmem:[#allocation2 + $0x130] sm:$0xff]
    %v574 = vld [vmem:[#allocation2 + $0x138] sm:$0xff]
    %v575 = vld [vmem:[#allocation2 + $0x140] sm:$0xff]
    %v576 = vld [vmem:[#allocation2 + $0x148] sm:$0xff]
    %v577 = vld [vmem:[#allocation2 + $0x150] sm:$0xff]
    %v578 = vld [vmem:[#allocation2 + $0x158] sm:$0xff]
    %v579 = vld [vmem:[#allocation2 + $0x160] sm:$0xff]
    %v580 = vld [vmem:[#allocation2 + $0x168] sm:$0xff]
    %v581 = vld [vmem:[#allocation2 + $0x170] sm:$0xff]
    %v582 = vld [vmem:[#allocation2 + $0x178] sm:$0xff]
    %v583 = vld [vmem:[#allocation2 + $0x180] sm:$0xff]
    %v584 = vld [vmem:[#allocation2 + $0x188] sm:$0xff]
    %585 = vmatprep.subr.bf16.mxu0 %v554
    %586 = vmatpush1.bf16.msra.mxu0 %v553
    %587 = vmatprep.subr.bf16.mxu0 %v556
    %588 = vmatpush1.bf16.msra.mxu0 %v555
    %589 = vmatprep.subr.bf16.mxu0 %v558
    %590 = vmatpush1.bf16.msra.mxu0 %v557
    %591 = vmatprep.subr.bf16.mxu0 %v560
    %592 = vmatpush1.bf16.msra.mxu0 %v559
    %593 = vmatprep.subr.bf16.mxu0 %v562
    %594 = vmatpush1.bf16.msra.mxu0 %v561
    %595 = vmatprep.subr.bf16.mxu0 %v564
    %596 = vmatpush1.bf16.msra.mxu0 %v563
    %597 = vmatprep.subr.bf16.mxu0 %v566
    %598 = vmatpush1.bf16.msra.mxu0 %v565
    %599 = vmatprep.subr.bf16.mxu0 %v568
    %600 = vmatpush1.bf16.msra.mxu0 %v567
    %601 = vmatprep.subr.bf16.mxu0 %v570
    %602 = vmatpush1.bf16.msra.mxu0 %v569
    %603 = vmatprep.subr.bf16.mxu0 %v572
    %604 = vmatpush1.bf16.msra.mxu0 %v571
    %605 = vmatprep.subr.bf16.mxu0 %v574
    %606 = vmatpush1.bf16.msra.mxu0 %v573
    %607 = vmatprep.subr.bf16.mxu0 %v576
    %608 = vmatpush1.bf16.msra.mxu0 %v575
    %609 = vmatprep.subr.bf16.mxu0 %v578
    %610 = vmatpush1.bf16.msra.mxu0 %v577
    %611 = vmatprep.subr.bf16.mxu0 %v580
    %612 = vmatpush1.bf16.msra.mxu0 %v579
    %613 = vmatprep.subr.bf16.mxu0 %v582
    %614 = vmatpush1.bf16.msra.mxu0 %v581
    %615 = vmatprep.subr.bf16.mxu0 %v584
    %616 = vmatpush1.bf16.msra.mxu0 %v583
    %617 = vmatprep.mubr.bf16.mxu0 0
    %618 = vmatmul.mubr.bf16.gmra.mrb[0].mxu0 0
    %v619 = vpop.f32.mrb[0].mxu0
    %v620 = vadd.f32 0.0, %v619
    %v621 = vpop.f32.mrb[0].mxu0
    %v622 = vadd.f32 0.0, %v621
    %v623 = vpop.f32.mrb[0].mxu0
    %v624 = vpop.f32.mrb[0].mxu0
    %625 = vdwg.mxu0
    %v626 = vadd.f32 %v551, %v620
    %v627 = vadd.f32 %v552, %v622
    %v628 = vtanh.pop %v626
    %v629 = vtanh.pop %v627
    %630 = vst [vmem:[#allocation5] sm:$0xff] %v628
    %631 = vst [vmem:[#allocation5 + $0x78] sm:$0xff] %v629
    %v632 = vld [vmem:[#allocation4 + $0x10] sm:$0xff]
    %v633 = vld [vmem:[#allocation4 + $0x18] sm:$0xff]
    %v634 = vpack.c.bf16 %v628, %v628
    %v635 = vpack.c.bf16 %v629, %v629
    %v636 = vld [vmem:[#allocation2 + $0x90] sm:$0xff]
    %v637 = vld [vmem:[#allocation2 + $0x98] sm:$0xff]
    %v638 = vld [vmem:[#allocation2 + $0xa0] sm:$0xff]
    %v639 = vld [vmem:[#allocation2 + $0xa8] sm:$0xff]
    %v640 = vld [vmem:[#allocation2 + $0xb0] sm:$0xff]
    %v641 = vld [vmem:[#allocation2 + $0xb8] sm:$0xff]
    %v642 = vld [vmem:[#allocation2 + $0xc0] sm:$0xff]
    %v643 = vld [vmem:[#allocation2 + $0xc8] sm:$0xff]
    %v644 = vld [vmem:[#allocation2 + $0xd0] sm:$0xff]
    %v645 = vld [vmem:[#allocation2 + $0xd8] sm:$0xff]
    %v646 = vld [vmem:[#allocation2 + $0xe0] sm:$0xff]
    %v647 = vld [vmem:[#allocation2 + $0xe8] sm:$0xff]
    %v648 = vld [vmem:[#allocation2 + $0xf0] sm:$0xff]
    %v649 = vld [vmem:[#allocation2 + $0xf8] sm:$0xff]
    %v650 = vld [vmem:[#allocation2 + $0x100] sm:$0xff]
    %v651 = vld [vmem:[#allocation2 + $0x108] sm:$0xff]
    %v652 = vld [vmem:[#allocation2 + $0x110] sm:$0xff]
    %v653 = vld [vmem:[#allocation2 + $0x118] sm:$0xff]
    %v654 = vld [vmem:[#allocation2 + $0x120] sm:$0xff]
    %v655 = vld [vmem:[#allocation2 + $0x128] sm:$0xff]
    %v656 = vld [vmem:[#allocation2 + $0x130] sm:$0xff]
    %v657 = vld [vmem:[#allocation2 + $0x138] sm:$0xff]
    %v658 = vld [vmem:[#allocation2 + $0x140] sm:$0xff]
    %v659 = vld [vmem:[#allocation2 + $0x148] sm:$0xff]
    %v660 = vld [vmem:[#allocation2 + $0x150] sm:$0xff]
    %v661 = vld [vmem:[#allocation2 + $0x158] sm:$0xff]
    %v662 = vld [vmem:[#allocation2 + $0x160] sm:$0xff]
    %v663 = vld [vmem:[#allocation2 + $0x168] sm:$0xff]
    %v664 = vld [vmem:[#allocation2 + $0x170] sm:$0xff]
    %v665 = vld [vmem:[#allocation2 + $0x178] sm:$0xff]
    %v666 = vld [vmem:[#allocation2 + $0x180] sm:$0xff]
    %v667 = vld [vmem:[#allocation2 + $0x188] sm:$0xff]
    %668 = vmatprep.subr.bf16.mxu0 %v637
    %669 = vmatpush1.bf16.msra.mxu0 %v636
    %670 = vmatprep.subr.bf16.mxu0 %v639
    %671 = vmatpush1.bf16.msra.mxu0 %v638
    %672 = vmatprep.subr.bf16.mxu0 %v641
    %673 = vmatpush1.bf16.msra.mxu0 %v640
    %674 = vmatprep.subr.bf16.mxu0 %v643
    %675 = vmatpush1.bf16.msra.mxu0 %v642
    %676 = vmatprep.subr.bf16.mxu0 %v645
    %677 = vmatpush1.bf16.msra.mxu0 %v644
    %678 = vmatprep.subr.bf16.mxu0 %v647
    %679 = vmatpush1.bf16.msra.mxu0 %v646
    %680 = vmatprep.subr.bf16.mxu0 %v649
    %681 = vmatpush1.bf16.msra.mxu0 %v648
    %682 = vmatprep.subr.bf16.mxu0 %v651
    %683 = vmatpush1.bf16.msra.mxu0 %v650
    %684 = vmatprep.subr.bf16.mxu0 %v653
    %685 = vmatpush1.bf16.msra.mxu0 %v652
    %686 = vmatprep.subr.bf16.mxu0 %v655
    %687 = vmatpush1.bf16.msra.mxu0 %v654
    %688 = vmatprep.subr.bf16.mxu0 %v657
    %689 = vmatpush1.bf16.msra.mxu0 %v656
    %690 = vmatprep.subr.bf16.mxu0 %v659
    %691 = vmatpush1.bf16.msra.mxu0 %v658
    %692 = vmatprep.subr.bf16.mxu0 %v661
    %693 = vmatpush1.bf16.msra.mxu0 %v660
    %694 = vmatprep.subr.bf16.mxu0 %v663
    %695 = vmatpush1.bf16.msra.mxu0 %v662
    %696 = vmatprep.subr.bf16.mxu0 %v665
    %697 = vmatpush1.bf16.msra.mxu0 %v664
    %698 = vmatprep.subr.bf16.mxu0 %v667
    %699 = vmatpush1.bf16.msra.mxu0 %v666
    %700 = vmatprep.mubr.bf16.mxu0 %v635
    %701 = vmatmul.mubr.bf16.gmra.mrb[0].mxu0 %v634
    %v702 = vpop.f32.mrb[0].mxu0
    %v703 = vadd.f32 0.0, %v702
    %v704 = vpop.f32.mrb[0].mxu0
    %v705 = vadd.f32 0.0, %v704
    %v706 = vpop.f32.mrb[0].mxu0
    %v707 = vpop.f32.mrb[0].mxu0
    %708 = vdwg.mxu0
    %v709 = vadd.f32 %v632, %v703
    %v710 = vadd.f32 %v633, %v705
    %v711 = vtanh.pop %v709
    %v712 = vtanh.pop %v710
    %713 = vst [vmem:[#allocation5 + $0x10] sm:$0xff] %v711
    %714 = vst [vmem:[#allocation5 + $0x68] sm:$0xff] %v712
    %v715 = vld [vmem:[#allocation4 + $0x20] sm:$0xff]
    %v716 = vld [vmem:[#allocation4 + $0x28] sm:$0xff]
    %v717 = vpack.c.bf16 %v711, %v711
    %v718 = vpack.c.bf16 %v712, %v712
    %v719 = vld [vmem:[#allocation2 + $0x90] sm:$0xff]
    %v720 = vld [vmem:[#allocation2 + $0x98] sm:$0xff]
    %v721 = vld [vmem:[#allocation2 + $0xa0] sm:$0xff]
    %v722 = vld [vmem:[#allocation2 + $0xa8] sm:$0xff]
    %v723 = vld [vmem:[#allocation2 + $0xb0] sm:$0xff]
    %v724 = vld [vmem:[#allocation2 + $0xb8] sm:$0xff]
    %v725 = vld [vmem:[#allocation2 + $0xc0] sm:$0xff]
    %v726 = vld [vmem:[#allocation2 + $0xc8] sm:$0xff]
    %v727 = vld [vmem:[#allocation2 + $0xd0] sm:$0xff]
    %v728 = vld [vmem:[#allocation2 + $0xd8] sm:$0xff]
    %v729 = vld [vmem:[#allocation2 + $0xe0] sm:$0xff]
    %v730 = vld [vmem:[#allocation2 + $0xe8] sm:$0xff]
    %v731 = vld [vmem:[#allocation2 + $0xf0] sm:$0xff]
    %v732 = vld [vmem:[#allocation2 + $0xf8] sm:$0xff]
    %v733 = vld [vmem:[#allocation2 + $0x100] sm:$0xff]
    %v734 = vld [vmem:[#allocation2 + $0x108] sm:$0xff]
    %v735 = vld [vmem:[#allocation2 + $0x110] sm:$0xff]
    %v736 = vld [vmem:[#allocation2 + $0x118] sm:$0xff]
    %v737 = vld [vmem:[#allocation2 + $0x120] sm:$0xff]
    %v738 = vld [vmem:[#allocation2 + $0x128] sm:$0xff]
    %v739 = vld [vmem:[#allocation2 + $0x130] sm:$0xff]
    %v740 = vld [vmem:[#allocation2 + $0x138] sm:$0xff]
    %v741 = vld [vmem:[#allocation2 + $0x140] sm:$0xff]
    %v742 = vld [vmem:[#allocation2 + $0x148] sm:$0xff]
    %v743 = vld [vmem:[#allocation2 + $0x150] sm:$0xff]
    %v744 = vld [vmem:[#allocation2 + $0x158] sm:$0xff]
    %v745 = vld [vmem:[#allocation2 + $0x160] sm:$0xff]
    %v746 = vld [vmem:[#allocation2 + $0x168] sm:$0xff]
    %v747 = vld [vmem:[#allocation2 + $0x170] sm:$0xff]
    %v748 = vld [vmem:[#allocation2 + $0x178] sm:$0xff]
    %v749 = vld [vmem:[#allocation2 + $0x180] sm:$0xff]
    %v750 = vld [vmem:[#allocation2 + $0x188] sm:$0xff]
    %751 = vmatprep.subr.bf16.mxu0 %v720
    %752 = vmatpush1.bf16.msra.mxu0 %v719
    %753 = vmatprep.subr.bf16.mxu0 %v722
    %754 = vmatpush1.bf16.msra.mxu0 %v721
    %755 = vmatprep.subr.bf16.mxu0 %v724
    %756 = vmatpush1.bf16.msra.mxu0 %v723
    %757 = vmatprep.subr.bf16.mxu0 %v726
    %758 = vmatpush1.bf16.msra.mxu0 %v725
    %759 = vmatprep.subr.bf16.mxu0 %v728
    %760 = vmatpush1.bf16.msra.mxu0 %v727
    %761 = vmatprep.subr.bf16.mxu0 %v730
    %762 = vmatpush1.bf16.msra.mxu0 %v729
    %763 = vmatprep.subr.bf16.mxu0 %v732
    %764 = vmatpush1.bf16.msra.mxu0 %v731
    %765 = vmatprep.subr.bf16.mxu0 %v734
    %766 = vmatpush1.bf16.msra.mxu0 %v733
    %767 = vmatprep.subr.bf16.mxu0 %v736
    %768 = vmatpush1.bf16.msra.mxu0 %v735
    %769 = vmatprep.subr.bf16.mxu0 %v738
    %770 = vmatpush1.bf16.msra.mxu0 %v737
    %771 = vmatprep.subr.bf16.mxu0 %v740
    %772 = vmatpush1.bf16.msra.mxu0 %v739
    %773 = vmatprep.subr.bf16.mxu0 %v742
    %774 = vmatpush1.bf16.msra.mxu0 %v741
    %775 = vmatprep.subr.bf16.mxu0 %v744
    %776 = vmatpush1.bf16.msra.mxu0 %v743
    %777 = vmatprep.subr.bf16.mxu0 %v746
    %778 = vmatpush1.bf16.msra.mxu0 %v745
    %779 = vmatprep.subr.bf16.mxu0 %v748
    %780 = vmatpush1.bf16.msra.mxu0 %v747
    %781 = vmatprep.subr.bf16.mxu0 %v750
    %782 = vmatpush1.bf16.msra.mxu0 %v749
    %783 = vmatprep.mubr.bf16.mxu0 %v718
    %784 = vmatmul.mubr.bf16.gmra.mrb[0].mxu0 %v717
    %v785 = vpop.f32.mrb[0].mxu0
    %v786 = vadd.f32 0.0, %v785
    %v787 = vpop.f32.mrb[0].mxu0
    %v788 = vadd.f32 0.0, %v787
    %v789 = vpop.f32.mrb[0].mxu0
    %v790 = vpop.f32.mrb[0].mxu0
    %791 = vdwg.mxu0
    %v792 = vadd.f32 %v715, %v786
    %v793 = vadd.f32 %v716, %v788
    %v794 = vtanh.pop %v792
    %v795 = vtanh.pop %v793
    %796 = vst [vmem:[#allocation5 + $0x20] sm:$0xff] %v794
    %797 = vst [vmem:[#allocation5 + $0x58] sm:$0xff] %v795
    %v798 = vld [vmem:[#allocation4 + $0x30] sm:$0xff]
    %v799 = vld [vmem:[#allocation4 + $0x38] sm:$0xff]
    %v800 = vpack.c.bf16 %v794, %v794
    %v801 = vpack.c.bf16 %v795, %v795
    %v802 = vld [vmem:[#allocation2 + $0x90] sm:$0xff]
    %v803 = vld [vmem:[#allocation2 + $0x98] sm:$0xff]
    %v804 = vld [vmem:[#allocation2 + $0xa0] sm:$0xff]
    %v805 = vld [vmem:[#allocation2 + $0xa8] sm:$0xff]
    %v806 = vld [vmem:[#allocation2 + $0xb0] sm:$0xff]
    %v807 = vld [vmem:[#allocation2 + $0xb8] sm:$0xff]
    %v808 = vld [vmem:[#allocation2 + $0xc0] sm:$0xff]
    %v809 = vld [vmem:[#allocation2 + $0xc8] sm:$0xff]
    %v810 = vld [vmem:[#allocation2 + $0xd0] sm:$0xff]
    %v811 = vld [vmem:[#allocation2 + $0xd8] sm:$0xff]
    %v812 = vld [vmem:[#allocation2 + $0xe0] sm:$0xff]
    %v813 = vld [vmem:[#allocation2 + $0xe8] sm:$0xff]
    %v814 = vld [vmem:[#allocation2 + $0xf0] sm:$0xff]
    %v815 = vld [vmem:[#allocation2 + $0xf8] sm:$0xff]
    %v816 = vld [vmem:[#allocation2 + $0x100] sm:$0xff]
    %v817 = vld [vmem:[#allocation2 + $0x108] sm:$0xff]
    %v818 = vld [vmem:[#allocation2 + $0x110] sm:$0xff]
    %v819 = vld [vmem:[#allocation2 + $0x118] sm:$0xff]
    %v820 = vld [vmem:[#allocation2 + $0x120] sm:$0xff]
    %v821 = vld [vmem:[#allocation2 + $0x128] sm:$0xff]
    %v822 = vld [vmem:[#allocation2 + $0x130] sm:$0xff]
    %v823 = vld [vmem:[#allocation2 + $0x138] sm:$0xff]
    %v824 = vld [vmem:[#allocation2 + $0x140] sm:$0xff]
    %v825 = vld [vmem:[#allocation2 + $0x148] sm:$0xff]
    %v826 = vld [vmem:[#allocation2 + $0x150] sm:$0xff]
    %v827 = vld [vmem:[#allocation2 + $0x158] sm:$0xff]
    %v828 = vld [vmem:[#allocation2 + $0x160] sm:$0xff]
    %v829 = vld [vmem:[#allocation2 + $0x168] sm:$0xff]
    %v830 = vld [vmem:[#allocation2 + $0x170] sm:$0xff]
    %v831 = vld [vmem:[#allocation2 + $0x178] sm:$0xff]
    %v832 = vld [vmem:[#allocation2 + $0x180] sm:$0xff]
    %v833 = vld [vmem:[#allocation2 + $0x188] sm:$0xff]
    %834 = vmatprep.subr.bf16.mxu0 %v803
    %835 = vmatpush1.bf16.msra.mxu0 %v802
    %836 = vmatprep.subr.bf16.mxu0 %v805
    %837 = vmatpush1.bf16.msra.mxu0 %v804
    %838 = vmatprep.subr.bf16.mxu0 %v807
    %839 = vmatpush1.bf16.msra.mxu0 %v806
    %840 = vmatprep.subr.bf16.mxu0 %v809
    %841 = vmatpush1.bf16.msra.mxu0 %v808
    %842 = vmatprep.subr.bf16.mxu0 %v811
    %843 = vmatpush1.bf16.msra.mxu0 %v810
    %844 = vmatprep.subr.bf16.mxu0 %v813
    %845 = vmatpush1.bf16.msra.mxu0 %v812
    %846 = vmatprep.subr.bf16.mxu0 %v815
    %847 = vmatpush1.bf16.msra.mxu0 %v814
    %848 = vmatprep.subr.bf16.mxu0 %v817
    %849 = vmatpush1.bf16.msra.mxu0 %v816
    %850 = vmatprep.subr.bf16.mxu0 %v819
    %851 = vmatpush1.bf16.msra.mxu0 %v818
    %852 = vmatprep.subr.bf16.mxu0 %v821
    %853 = vmatpush1.bf16.msra.mxu0 %v820
    %854 = vmatprep.subr.bf16.mxu0 %v823
    %855 = vmatpush1.bf16.msra.mxu0 %v822
    %856 = vmatprep.subr.bf16.mxu0 %v825
    %857 = vmatpush1.bf16.msra.mxu0 %v824
    %858 = vmatprep.subr.bf16.mxu0 %v827
    %859 = vmatpush1.bf16.msra.mxu0 %v826
    %860 = vmatprep.subr.bf16.mxu0 %v829
    %861 = vmatpush1.bf16.msra.mxu0 %v828
    %862 = vmatprep.subr.bf16.mxu0 %v831
    %863 = vmatpush1.bf16.msra.mxu0 %v830
    %864 = vmatprep.subr.bf16.mxu0 %v833
    %865 = vmatpush1.bf16.msra.mxu0 %v832
    %866 = vmatprep.mubr.bf16.mxu0 %v801
    %867 = vmatmul.mubr.bf16.gmra.mrb[0].mxu0 %v800
    %v868 = vpop.f32.mrb[0].mxu0
    %v869 = vadd.f32 0.0, %v868
    %v870 = vpop.f32.mrb[0].mxu0
    %v871 = vadd.f32 0.0, %v870
    %v872 = vpop.f32.mrb[0].mxu0
    %v873 = vpop.f32.mrb[0].mxu0
    %874 = vdwg.mxu0
    %v875 = vadd.f32 %v798, %v869
    %v876 = vadd.f32 %v799, %v871
    %v877 = vtanh.pop %v875
    %v878 = vtanh.pop %v876
    %879 = vst [vmem:[#allocation5 + $0x30] sm:$0xff] %v877
    %880 = vst [vmem:[#allocation5 + $0x48] sm:$0xff] %v878
    %v881 = vld [vmem:[#allocation4 + $0x40] sm:$0xff]
    %v882 = vld [vmem:[#allocation4 + $0x48] sm:$0xff]
    %v883 = vpack.c.bf16 %v877, %v877
    %v884 = vpack.c.bf16 %v878, %v878
    %v885 = vld [vmem:[#allocation2 + $0x90] sm:$0xff]
    %v886 = vld [vmem:[#allocation2 + $0x98] sm:$0xff]
    %v887 = vld [vmem:[#allocation2 + $0xa0] sm:$0xff]
    %v888 = vld [vmem:[#allocation2 + $0xa8] sm:$0xff]
    %v889 = vld [vmem:[#allocation2 + $0xb0] sm:$0xff]
    %v890 = vld [vmem:[#allocation2 + $0xb8] sm:$0xff]
    %v891 = vld [vmem:[#allocation2 + $0xc0] sm:$0xff]
    %v892 = vld [vmem:[#allocation2 + $0xc8] sm:$0xff]
    %v893 = vld [vmem:[#allocation2 + $0xd0] sm:$0xff]
    %v894 = vld [vmem:[#allocation2 + $0xd8] sm:$0xff]
    %v895 = vld [vmem:[#allocation2 + $0xe0] sm:$0xff]
    %v896 = vld [vmem:[#allocation2 + $0xe8] sm:$0xff]
    %v897 = vld [vmem:[#allocation2 + $0xf0] sm:$0xff]
    %v898 = vld [vmem:[#allocation2 + $0xf8] sm:$0xff]
    %v899 = vld [vmem:[#allocation2 + $0x100] sm:$0xff]
    %v900 = vld [vmem:[#allocation2 + $0x108] sm:$0xff]
    %v901 = vld [vmem:[#allocation2 + $0x110] sm:$0xff]
    %v902 = vld [vmem:[#allocation2 + $0x118] sm:$0xff]
    %v903 = vld [vmem:[#allocation2 + $0x120] sm:$0xff]
    %v904 = vld [vmem:[#allocation2 + $0x128] sm:$0xff]
    %v905 = vld [vmem:[#allocation2 + $0x130] sm:$0xff]
    %v906 = vld [vmem:[#allocation2 + $0x138] sm:$0xff]
    %v907 = vld [vmem:[#allocation2 + $0x140] sm:$0xff]
    %v908 = vld [vmem:[#allocation2 + $0x148] sm:$0xff]
    %v909 = vld [vmem:[#allocation2 + $0x150] sm:$0xff]
    %v910 = vld [vmem:[#allocation2 + $0x158] sm:$0xff]
    %v911 = vld [vmem:[#allocation2 + $0x160] sm:$0xff]
    %v912 = vld [vmem:[#allocation2 + $0x168] sm:$0xff]
    %v913 = vld [vmem:[#allocation2 + $0x170] sm:$0xff]
    %v914 = vld [vmem:[#allocation2 + $0x178] sm:$0xff]
    %v915 = vld [vmem:[#allocation2 + $0x180] sm:$0xff]
    %v916 = vld [vmem:[#allocation2 + $0x188] sm:$0xff]
    %917 = vmatprep.subr.bf16.mxu0 %v886
    %918 = vmatpush1.bf16.msra.mxu0 %v885
    %919 = vmatprep.subr.bf16.mxu0 %v888
    %920 = vmatpush1.bf16.msra.mxu0 %v887
    %921 = vmatprep.subr.bf16.mxu0 %v890
    %922 = vmatpush1.bf16.msra.mxu0 %v889
    %923 = vmatprep.subr.bf16.mxu0 %v892
    %924 = vmatpush1.bf16.msra.mxu0 %v891
    %925 = vmatprep.subr.bf16.mxu0 %v894
    %926 = vmatpush1.bf16.msra.mxu0 %v893
    %927 = vmatprep.subr.bf16.mxu0 %v896
    %928 = vmatpush1.bf16.msra.mxu0 %v895
    %929 = vmatprep.subr.bf16.mxu0 %v898
    %930 = vmatpush1.bf16.msra.mxu0 %v897
    %931 = vmatprep.subr.bf16.mxu0 %v900
    %932 = vmatpush1.bf16.msra.mxu0 %v899
    %933 = vmatprep.subr.bf16.mxu0 %v902
    %934 = vmatpush1.bf16.msra.mxu0 %v901
    %935 = vmatprep.subr.bf16.mxu0 %v904
    %936 = vmatpush1.bf16.msra.mxu0 %v903
    %937 = vmatprep.subr.bf16.mxu0 %v906
    %938 = vmatpush1.bf16.msra.mxu0 %v905
    %939 = vmatprep.subr.bf16.mxu0 %v908
    %940 = vmatpush1.bf16.msra.mxu0 %v907
    %941 = vmatprep.subr.bf16.mxu0 %v910
    %942 = vmatpush1.bf16.msra.mxu0 %v909
    %943 = vmatprep.subr.bf16.mxu0 %v912
    %944 = vmatpush1.bf16.msra.mxu0 %v911
    %945 = vmatprep.subr.bf16.mxu0 %v914
    %946 = vmatpush1.bf16.msra.mxu0 %v913
    %947 = vmatprep.subr.bf16.mxu0 %v916
    %948 = vmatpush1.bf16.msra.mxu0 %v915
    %949 = vmatprep.mubr.bf16.mxu0 %v884
    %950 = vmatmul.mubr.bf16.gmra.mrb[0].mxu0 %v883
    %v951 = vpop.f32.mrb[0].mxu0
    %v952 = vadd.f32 0.0, %v951
    %v953 = vpop.f32.mrb[0].mxu0
    %v954 = vadd.f32 0.0, %v953
    %v955 = vpop.f32.mrb[0].mxu0
    %v956 = vpop.f32.mrb[0].mxu0
    %957 = vdwg.mxu0
    %v958 = vadd.f32 %v881, %v952
    %v959 = vadd.f32 %v882, %v954
    %v960 = vtanh.pop %v958
    %v961 = vtanh.pop %v959
    %962 = vst [vmem:[#allocation5 + $0x40] sm:$0xff] %v960
    %963 = vst [vmem:[#allocation5 + $0x38] sm:$0xff] %v961
    %v964 = vld [vmem:[#allocation4 + $0x50] sm:$0xff]
    %v965 = vld [vmem:[#allocation4 + $0x58] sm:$0xff]
    %v966 = vpack.c.bf16 %v960, %v960
    %v967 = vpack.c.bf16 %v961, %v961
    %v968 = vld [vmem:[#allocation2 + $0x90] sm:$0xff]
    %v969 = vld [vmem:[#allocation2 + $0x98] sm:$0xff]
    %v970 = vld [vmem:[#allocation2 + $0xa0] sm:$0xff]
    %v971 = vld [vmem:[#allocation2 + $0xa8] sm:$0xff]
    %v972 = vld [vmem:[#allocation2 + $0xb0] sm:$0xff]
    %v973 = vld [vmem:[#allocation2 + $0xb8] sm:$0xff]
    %v974 = vld [vmem:[#allocation2 + $0xc0] sm:$0xff]
    %v975 = vld [vmem:[#allocation2 + $0xc8] sm:$0xff]
    %v976 = vld [vmem:[#allocation2 + $0xd0] sm:$0xff]
    %v977 = vld [vmem:[#allocation2 + $0xd8] sm:$0xff]
    %v978 = vld [vmem:[#allocation2 + $0xe0] sm:$0xff]
    %v979 = vld [vmem:[#allocation2 + $0xe8] sm:$0xff]
    %v980 = vld [vmem:[#allocation2 + $0xf0] sm:$0xff]
    %v981 = vld [vmem:[#allocation2 + $0xf8] sm:$0xff]
    %v982 = vld [vmem:[#allocation2 + $0x100] sm:$0xff]
    %v983 = vld [vmem:[#allocation2 + $0x108] sm:$0xff]
    %v984 = vld [vmem:[#allocation2 + $0x110] sm:$0xff]
    %v985 = vld [vmem:[#allocation2 + $0x118] sm:$0xff]
    %v986 = vld [vmem:[#allocation2 + $0x120] sm:$0xff]
    %v987 = vld [vmem:[#allocation2 + $0x128] sm:$0xff]
    %v988 = vld [vmem:[#allocation2 + $0x130] sm:$0xff]
    %v989 = vld [vmem:[#allocation2 + $0x138] sm:$0xff]
    %v990 = vld [vmem:[#allocation2 + $0x140] sm:$0xff]
    %v991 = vld [vmem:[#allocation2 + $0x148] sm:$0xff]
    %v992 = vld [vmem:[#allocation2 + $0x150] sm:$0xff]
    %v993 = vld [vmem:[#allocation2 + $0x158] sm:$0xff]
    %v994 = vld [vmem:[#allocation2 + $0x160] sm:$0xff]
    %v995 = vld [vmem:[#allocation2 + $0x168] sm:$0xff]
    %v996 = vld [vmem:[#allocation2 + $0x170] sm:$0xff]
    %v997 = vld [vmem:[#allocation2 + $0x178] sm:$0xff]
    %v998 = vld [vmem:[#allocation2 + $0x180] sm:$0xff]
    %v999 = vld [vmem:[#allocation2 + $0x188] sm:$0xff]
    %1000 = vmatprep.subr.bf16.mxu0 %v969
    %1001 = vmatpush1.bf16.msra.mxu0 %v968
    %1002 = vmatprep.subr.bf16.mxu0 %v971
    %1003 = vmatpush1.bf16.msra.mxu0 %v970
    %1004 = vmatprep.subr.bf16.mxu0 %v973
    %1005 = vmatpush1.bf16.msra.mxu0 %v972
    %1006 = vmatprep.subr.bf16.mxu0 %v975
    %1007 = vmatpush1.bf16.msra.mxu0 %v974
    %1008 = vmatprep.subr.bf16.mxu0 %v977
    %1009 = vmatpush1.bf16.msra.mxu0 %v976
    %1010 = vmatprep.subr.bf16.mxu0 %v979
    %1011 = vmatpush1.bf16.msra.mxu0 %v978
    %1012 = vmatprep.subr.bf16.mxu0 %v981
    %1013 = vmatpush1.bf16.msra.mxu0 %v980
    %1014 = vmatprep.subr.bf16.mxu0 %v983
    %1015 = vmatpush1.bf16.msra.mxu0 %v982
    %1016 = vmatprep.subr.bf16.mxu0 %v985
    %1017 = vmatpush1.bf16.msra.mxu0 %v984
    %1018 = vmatprep.subr.bf16.mxu0 %v987
    %1019 = vmatpush1.bf16.msra.mxu0 %v986
    %1020 = vmatprep.subr.bf16.mxu0 %v989
    %1021 = vmatpush1.bf16.msra.mxu0 %v988
    %1022 = vmatprep.subr.bf16.mxu0 %v991
    %1023 = vmatpush1.bf16.msra.mxu0 %v990
    %1024 = vmatprep.subr.bf16.mxu0 %v993
    %1025 = vmatpush1.bf16.msra.mxu0 %v992
    %1026 = vmatprep.subr.bf16.mxu0 %v995
    %1027 = vmatpush1.bf16.msra.mxu0 %v994
    %1028 = vmatprep.subr.bf16.mxu0 %v997
    %1029 = vmatpush1.bf16.msra.mxu0 %v996
    %1030 = vmatprep.subr.bf16.mxu0 %v999
    %1031 = vmatpush1.bf16.msra.mxu0 %v998
    %1032 = vmatprep.mubr.bf16.mxu0 %v967
    %1033 = vmatmul.mubr.bf16.gmra.mrb[0].mxu0 %v966
    %v1034 = vpop.f32.mrb[0].mxu0
    %v1035 = vadd.f32 0.0, %v1034
    %v1036 = vpop.f32.mrb[0].mxu0
    %v1037 = vadd.f32 0.0, %v1036
    %v1038 = vpop.f32.mrb[0].mxu0
    %v1039 = vpop.f32.mrb[0].mxu0
    %1040 = vdwg.mxu0
    %v1041 = vadd.f32 %v964, %v1035
    %v1042 = vadd.f32 %v965, %v1037
    %v1043 = vtanh.pop %v1041
    %v1044 = vtanh.pop %v1042
    %1045 = vst [vmem:[#allocation5 + $0x50] sm:$0xff] %v1043
    %1046 = vst [vmem:[#allocation5 + $0x28] sm:$0xff] %v1044
    %v1047 = vld [vmem:[#allocation4 + $0x60] sm:$0xff]
    %v1048 = vld [vmem:[#allocation4 + $0x68] sm:$0xff]
    %v1049 = vpack.c.bf16 %v1043, %v1043
    %v1050 = vpack.c.bf16 %v1044, %v1044
    %v1051 = vld [vmem:[#allocation2 + $0x90] sm:$0xff]
    %v1052 = vld [vmem:[#allocation2 + $0x98] sm:$0xff]
    %v1053 = vld [vmem:[#allocation2 + $0xa0] sm:$0xff]
    %v1054 = vld [vmem:[#allocation2 + $0xa8] sm:$0xff]
    %v1055 = vld [vmem:[#allocation2 + $0xb0] sm:$0xff]
    %v1056 = vld [vmem:[#allocation2 + $0xb8] sm:$0xff]
    %v1057 = vld [vmem:[#allocation2 + $0xc0] sm:$0xff]
    %v1058 = vld [vmem:[#allocation2 + $0xc8] sm:$0xff]
    %v1059 = vld [vmem:[#allocation2 + $0xd0] sm:$0xff]
    %v1060 = vld [vmem:[#allocation2 + $0xd8] sm:$0xff]
    %v1061 = vld [vmem:[#allocation2 + $0xe0] sm:$0xff]
    %v1062 = vld [vmem:[#allocation2 + $0xe8] sm:$0xff]
    %v1063 = vld [vmem:[#allocation2 + $0xf0] sm:$0xff]
    %v1064 = vld [vmem:[#allocation2 + $0xf8] sm:$0xff]
    %v1065 = vld [vmem:[#allocation2 + $0x100] sm:$0xff]
    %v1066 = vld [vmem:[#allocation2 + $0x108] sm:$0xff]
    %v1067 = vld [vmem:[#allocation2 + $0x110] sm:$0xff]
    %v1068 = vld [vmem:[#allocation2 + $0x118] sm:$0xff]
    %v1069 = vld [vmem:[#allocation2 + $0x120] sm:$0xff]
    %v1070 = vld [vmem:[#allocation2 + $0x128] sm:$0xff]
    %v1071 = vld [vmem:[#allocation2 + $0x130] sm:$0xff]
    %v1072 = vld [vmem:[#allocation2 + $0x138] sm:$0xff]
    %v1073 = vld [vmem:[#allocation2 + $0x140] sm:$0xff]
    %v1074 = vld [vmem:[#allocation2 + $0x148] sm:$0xff]
    %v1075 = vld [vmem:[#allocation2 + $0x150] sm:$0xff]
    %v1076 = vld [vmem:[#allocation2 + $0x158] sm:$0xff]
    %v1077 = vld [vmem:[#allocation2 + $0x160] sm:$0xff]
    %v1078 = vld [vmem:[#allocation2 + $0x168] sm:$0xff]
    %v1079 = vld [vmem:[#allocation2 + $0x170] sm:$0xff]
    %v1080 = vld [vmem:[#allocation2 + $0x178] sm:$0xff]
    %v1081 = vld [vmem:[#allocation2 + $0x180] sm:$0xff]
    %v1082 = vld [vmem:[#allocation2 + $0x188] sm:$0xff]
    %1083 = vmatprep.subr.bf16.mxu0 %v1052
    %1084 = vmatpush1.bf16.msra.mxu0 %v1051
    %1085 = vmatprep.subr.bf16.mxu0 %v1054
    %1086 = vmatpush1.bf16.msra.mxu0 %v1053
    %1087 = vmatprep.subr.bf16.mxu0 %v1056
    %1088 = vmatpush1.bf16.msra.mxu0 %v1055
    %1089 = vmatprep.subr.bf16.mxu0 %v1058
    %1090 = vmatpush1.bf16.msra.mxu0 %v1057
    %1091 = vmatprep.subr.bf16.mxu0 %v1060
    %1092 = vmatpush1.bf16.msra.mxu0 %v1059
    %1093 = vmatprep.subr.bf16.mxu0 %v1062
    %1094 = vmatpush1.bf16.msra.mxu0 %v1061
    %1095 = vmatprep.subr.bf16.mxu0 %v1064
    %1096 = vmatpush1.bf16.msra.mxu0 %v1063
    %1097 = vmatprep.subr.bf16.mxu0 %v1066
    %1098 = vmatpush1.bf16.msra.mxu0 %v1065
    %1099 = vmatprep.subr.bf16.mxu0 %v1068
    %1100 = vmatpush1.bf16.msra.mxu0 %v1067
    %1101 = vmatprep.subr.bf16.mxu0 %v1070
    %1102 = vmatpush1.bf16.msra.mxu0 %v1069
    %1103 = vmatprep.subr.bf16.mxu0 %v1072
    %1104 = vmatpush1.bf16.msra.mxu0 %v1071
    %1105 = vmatprep.subr.bf16.mxu0 %v1074
    %1106 = vmatpush1.bf16.msra.mxu0 %v1073
    %1107 = vmatprep.subr.bf16.mxu0 %v1076
    %1108 = vmatpush1.bf16.msra.mxu0 %v1075
    %1109 = vmatprep.subr.bf16.mxu0 %v1078
    %1110 = vmatpush1.bf16.msra.mxu0 %v1077
    %1111 = vmatprep.subr.bf16.mxu0 %v1080
    %1112 = vmatpush1.bf16.msra.mxu0 %v1079
    %1113 = vmatprep.subr.bf16.mxu0 %v1082
    %1114 = vmatpush1.bf16.msra.mxu0 %v1081
    %1115 = vmatprep.mubr.bf16.mxu0 %v1050
    %1116 = vmatmul.mubr.bf16.gmra.mrb[0].mxu0 %v1049
    %v1117 = vpop.f32.mrb[0].mxu0
    %v1118 = vadd.f32 0.0, %v1117
    %v1119 = vpop.f32.mrb[0].mxu0
    %v1120 = vadd.f32 0.0, %v1119
    %v1121 = vpop.f32.mrb[0].mxu0
    %v1122 = vpop.f32.mrb[0].mxu0
    %1123 = vdwg.mxu0
    %v1124 = vadd.f32 %v1047, %v1118
    %v1125 = vadd.f32 %v1048, %v1120
    %v1126 = vtanh.pop %v1124
    %v1127 = vtanh.pop %v1125
    %1128 = vst [vmem:[#allocation5 + $0x60] sm:$0xff] %v1126
    %1129 = vst [vmem:[#allocation5 + $0x18] sm:$0xff] %v1127
    %v1130 = vld [vmem:[#allocation4 + $0x70] sm:$0xff]
    %v1131 = vld [vmem:[#allocation4 + $0x78] sm:$0xff]
    %v1132 = vpack.c.bf16 %v1126, %v1126
    %v1133 = vpack.c.bf16 %v1127, %v1127
    %v1134 = vld [vmem:[#allocation2 + $0x90] sm:$0xff]
    %v1135 = vld [vmem:[#allocation2 + $0x98] sm:$0xff]
    %v1136 = vld [vmem:[#allocation2 + $0xa0] sm:$0xff]
    %v1137 = vld [vmem:[#allocation2 + $0xa8] sm:$0xff]
    %v1138 = vld [vmem:[#allocation2 + $0xb0] sm:$0xff]
    %v1139 = vld [vmem:[#allocation2 + $0xb8] sm:$0xff]
    %v1140 = vld [vmem:[#allocation2 + $0xc0] sm:$0xff]
    %v1141 = vld [vmem:[#allocation2 + $0xc8] sm:$0xff]
    %v1142 = vld [vmem:[#allocation2 + $0xd0] sm:$0xff]
    %v1143 = vld [vmem:[#allocation2 + $0xd8] sm:$0xff]
    %v1144 = vld [vmem:[#allocation2 + $0xe0] sm:$0xff]
    %v1145 = vld [vmem:[#allocation2 + $0xe8] sm:$0xff]
    %v1146 = vld [vmem:[#allocation2 + $0xf0] sm:$0xff]
    %v1147 = vld [vmem:[#allocation2 + $0xf8] sm:$0xff]
    %v1148 = vld [vmem:[#allocation2 + $0x100] sm:$0xff]
    %v1149 = vld [vmem:[#allocation2 + $0x108] sm:$0xff]
    %v1150 = vld [vmem:[#allocation2 + $0x110] sm:$0xff]
    %v1151 = vld [vmem:[#allocation2 + $0x118] sm:$0xff]
    %v1152 = vld [vmem:[#allocation2 + $0x120] sm:$0xff]
    %v1153 = vld [vmem:[#allocation2 + $0x128] sm:$0xff]
    %v1154 = vld [vmem:[#allocation2 + $0x130] sm:$0xff]
    %v1155 = vld [vmem:[#allocation2 + $0x138] sm:$0xff]
    %v1156 = vld [vmem:[#allocation2 + $0x140] sm:$0xff]
    %v1157 = vld [vmem:[#allocation2 + $0x148] sm:$0xff]
    %v1158 = vld [vmem:[#allocation2 + $0x150] sm:$0xff]
    %v1159 = vld [vmem:[#allocation2 + $0x158] sm:$0xff]
    %v1160 = vld [vmem:[#allocation2 + $0x160] sm:$0xff]
    %v1161 = vld [vmem:[#allocation2 + $0x168] sm:$0xff]
    %v1162 = vld [vmem:[#allocation2 + $0x170] sm:$0xff]
    %v1163 = vld [vmem:[#allocation2 + $0x178] sm:$0xff]
    %v1164 = vld [vmem:[#allocation2 + $0x180] sm:$0xff]
    %v1165 = vld [vmem:[#allocation2 + $0x188] sm:$0xff]
    %1166 = vmatprep.subr.bf16.mxu0 %v1135
    %1167 = vmatpush1.bf16.msra.mxu0 %v1134
    %1168 = vmatprep.subr.bf16.mxu0 %v1137
    %1169 = vmatpush1.bf16.msra.mxu0 %v1136
    %1170 = vmatprep.subr.bf16.mxu0 %v1139
    %1171 = vmatpush1.bf16.msra.mxu0 %v1138
    %1172 = vmatprep.subr.bf16.mxu0 %v1141
    %1173 = vmatpush1.bf16.msra.mxu0 %v1140
    %1174 = vmatprep.subr.bf16.mxu0 %v1143
    %1175 = vmatpush1.bf16.msra.mxu0 %v1142
    %1176 = vmatprep.subr.bf16.mxu0 %v1145
    %1177 = vmatpush1.bf16.msra.mxu0 %v1144
    %1178 = vmatprep.subr.bf16.mxu0 %v1147
    %1179 = vmatpush1.bf16.msra.mxu0 %v1146
    %1180 = vmatprep.subr.bf16.mxu0 %v1149
    %1181 = vmatpush1.bf16.msra.mxu0 %v1148
    %1182 = vmatprep.subr.bf16.mxu0 %v1151
    %1183 = vmatpush1.bf16.msra.mxu0 %v1150
    %1184 = vmatprep.subr.bf16.mxu0 %v1153
    %1185 = vmatpush1.bf16.msra.mxu0 %v1152
    %1186 = vmatprep.subr.bf16.mxu0 %v1155
    %1187 = vmatpush1.bf16.msra.mxu0 %v1154
    %1188 = vmatprep.subr.bf16.mxu0 %v1157
    %1189 = vmatpush1.bf16.msra.mxu0 %v1156
    %1190 = vmatprep.subr.bf16.mxu0 %v1159
    %1191 = vmatpush1.bf16.msra.mxu0 %v1158
    %1192 = vmatprep.subr.bf16.mxu0 %v1161
    %1193 = vmatpush1.bf16.msra.mxu0 %v1160
    %1194 = vmatprep.subr.bf16.mxu0 %v1163
    %1195 = vmatpush1.bf16.msra.mxu0 %v1162
    %1196 = vmatprep.subr.bf16.mxu0 %v1165
    %1197 = vmatpush1.bf16.msra.mxu0 %v1164
    %1198 = vmatprep.mubr.bf16.mxu0 %v1133
    %1199 = vmatmul.mubr.bf16.gmra.mrb[0].mxu0 %v1132
    %v1200 = vpop.f32.mrb[0].mxu0
    %v1201 = vadd.f32 0.0, %v1200
    %v1202 = vpop.f32.mrb[0].mxu0
    %v1203 = vadd.f32 0.0, %v1202
    %v1204 = vpop.f32.mrb[0].mxu0
    %v1205 = vpop.f32.mrb[0].mxu0
    %1206 = vdwg.mxu0
    %v1207 = vadd.f32 %v1130, %v1201
    %v1208 = vadd.f32 %v1131, %v1203
    %v1209 = vtanh.pop %v1207
    %v1210 = vtanh.pop %v1208
    %1211 = vst [vmem:[#allocation5 + $0x70] sm:$0xff] %v1209
    %1212 = vst [vmem:[#allocation5 + $0x8] sm:$0xff] %v1210
    %s1213 = smul.u32 4, 66
    %s1214 = smul.u32 %s1213, 2
    %s1215 = sshll.u32 %s1214, 4
    %1216 = dma.done %s313, %s1215
    %v1217 = vld [vmem:[#allocation5] sm:$0xff]
    %v1218 = vld [vmem:[#allocation5 + $0x8] sm:$0xff]
    %v1219 = vld [vmem:[#allocation5 + $0x10] sm:$0xff]
    %v1220 = vld [vmem:[#allocation5 + $0x18] sm:$0xff]
    %v1221 = vld [vmem:[#allocation5 + $0x20] sm:$0xff]
    %v1222 = vld [vmem:[#allocation5 + $0x28] sm:$0xff]
    %v1223 = vld [vmem:[#allocation5 + $0x30] sm:$0xff]
    %v1224 = vld [vmem:[#allocation5 + $0x38] sm:$0xff]
    %v1225 = vld [vmem:[#allocation5 + $0x40] sm:$0xff]
    %v1226 = vld [vmem:[#allocation5 + $0x48] sm:$0xff]
    %v1227 = vld [vmem:[#allocation5 + $0x50] sm:$0xff]
    %v1228 = vld [vmem:[#allocation5 + $0x58] sm:$0xff]
    %v1229 = vld [vmem:[#allocation5 + $0x60] sm:$0xff]
    %v1230 = vld [vmem:[#allocation5 + $0x68] sm:$0xff]
    %v1231 = vld [vmem:[#allocation5 + $0x70] sm:$0xff]
    %v1232 = vld [vmem:[#allocation5 + $0x78] sm:$0xff]
    %v1233 = vpack.c.bf16 %v1219, %v1217
    %v1234 = vpack.c.bf16 %v1220, %v1218
    %v1235 = vpack.c.bf16 %v1223, %v1221
    %v1236 = vpack.c.bf16 %v1224, %v1222
    %v1237 = vpack.c.bf16 %v1227, %v1225
    %v1238 = vpack.c.bf16 %v1228, %v1226
    %v1239 = vpack.c.bf16 %v1231, %v1229
    %v1240 = vpack.c.bf16 %v1232, %v1230
    %v1241 = vld [vmem:[#allocation2 + $0x290] sm:$0x1]
    %v1242 = vld [vmem:[#allocation2 + $0x298] sm:$0x1]
    %v1243 = vunpack.c.l.bf16 %v1241
    %v1244 = vunpack.c.l.bf16 %v1242
    %v1245 = vld [vmem:[#allocation2 + $0x190] sm:$0xff]
    %v1246 = vld [vmem:[#allocation2 + $0x198] sm:$0xff]
    %v1247 = vld [vmem:[#allocation2 + $0x1a0] sm:$0xff]
    %v1248 = vld [vmem:[#allocation2 + $0x1a8] sm:$0xff]
    %v1249 = vld [vmem:[#allocation2 + $0x1b0] sm:$0xff]
    %v1250 = vld [vmem:[#allocation2 + $0x1b8] sm:$0xff]
    %v1251 = vld [vmem:[#allocation2 + $0x1c0] sm:$0xff]
    %v1252 = vld [vmem:[#allocation2 + $0x1c8] sm:$0xff]
    %v1253 = vld [vmem:[#allocation2 + $0x1d0] sm:$0xff]
    %v1254 = vld [vmem:[#allocation2 + $0x1d8] sm:$0xff]
    %v1255 = vld [vmem:[#allocation2 + $0x1e0] sm:$0xff]
    %v1256 = vld [vmem:[#allocation2 + $0x1e8] sm:$0xff]
    %v1257 = vld [vmem:[#allocation2 + $0x1f0] sm:$0xff]
    %v1258 = vld [vmem:[#allocation2 + $0x1f8] sm:$0xff]
    %v1259 = vld [vmem:[#allocation2 + $0x200] sm:$0xff]
    %v1260 = vld [vmem:[#allocation2 + $0x208] sm:$0xff]
    %v1261 = vld [vmem:[#allocation2 + $0x210] sm:$0xff]
    %v1262 = vld [vmem:[#allocation2 + $0x218] sm:$0xff]
    %v1263 = vld [vmem:[#allocation2 + $0x220] sm:$0xff]
    %v1264 = vld [vmem:[#allocation2 + $0x228] sm:$0xff]
    %v1265 = vld [vmem:[#allocation2 + $0x230] sm:$0xff]
    %v1266 = vld [vmem:[#allocation2 + $0x238] sm:$0xff]
    %v1267 = vld [vmem:[#allocation2 + $0x240] sm:$0xff]
    %v1268 = vld [vmem:[#allocation2 + $0x248] sm:$0xff]
    %v1269 = vld [vmem:[#allocation2 + $0x250] sm:$0xff]
    %v1270 = vld [vmem:[#allocation2 + $0x258] sm:$0xff]
    %v1271 = vld [vmem:[#allocation2 + $0x260] sm:$0xff]
    %v1272 = vld [vmem:[#allocation2 + $0x268] sm:$0xff]
    %v1273 = vld [vmem:[#allocation2 + $0x270] sm:$0xff]
    %v1274 = vld [vmem:[#allocation2 + $0x278] sm:$0xff]
    %v1275 = vld [vmem:[#allocation2 + $0x280] sm:$0xff]
    %v1276 = vld [vmem:[#allocation2 + $0x288] sm:$0xff]
    %v1277 = vlaneseq
    %v1278 = vshrl.u32 %v1277, 7
    %v1279 = vsub.s32 0, %v1278
    %v1280 = vrot.slane %v1243, %v1279
    %v1281 = vlaneseq
    %v1282 = vshrl.u32 %v1281, 7
    %v1283 = vsub.s32 0, %v1282
    %v1284 = vrot.slane %v1244, %v1283
    %1285 = vmatprep.subr.bf16.mxu0 %v1246
    %1286 = vmatpush1.bf16.msra.mxu0 %v1245
    %1287 = vmatprep.subr.bf16.mxu0 %v1248
    %1288 = vmatpush1.bf16.msra.mxu0 %v1247
    %1289 = vmatprep.subr.bf16.mxu0 %v1250
    %1290 = vmatpush1.bf16.msra.mxu0 %v1249
    %1291 = vmatprep.subr.bf16.mxu0 %v1252
    %1292 = vmatpush1.bf16.msra.mxu0 %v1251
    %1293 = vmatprep.subr.bf16.mxu0 %v1254
    %1294 = vmatpush1.bf16.msra.mxu0 %v1253
    %1295 = vmatprep.subr.bf16.mxu0 %v1256
    %1296 = vmatpush1.bf16.msra.mxu0 %v1255
    %1297 = vmatprep.subr.bf16.mxu0 %v1258
    %1298 = vmatpush1.bf16.msra.mxu0 %v1257
    %1299 = vmatprep.subr.bf16.mxu0 %v1260
    %1300 = vmatpush1.bf16.msra.mxu0 %v1259
    %1301 = vmatprep.subr.bf16.mxu0 %v1262
    %1302 = vmatpush1.bf16.msra.mxu0 %v1261
    %1303 = vmatprep.subr.bf16.mxu0 %v1264
    %1304 = vmatpush1.bf16.msra.mxu0 %v1263
    %1305 = vmatprep.subr.bf16.mxu0 %v1266
    %1306 = vmatpush1.bf16.msra.mxu0 %v1265
    %1307 = vmatprep.subr.bf16.mxu0 %v1268
    %1308 = vmatpush1.bf16.msra.mxu0 %v1267
    %1309 = vmatprep.subr.bf16.mxu0 %v1270
    %1310 = vmatpush1.bf16.msra.mxu0 %v1269
    %1311 = vmatprep.subr.bf16.mxu0 %v1272
    %1312 = vmatpush1.bf16.msra.mxu0 %v1271
    %1313 = vmatprep.subr.bf16.mxu0 %v1274
    %1314 = vmatpush1.bf16.msra.mxu0 %v1273
    %1315 = vmatprep.subr.bf16.mxu0 %v1276
    %1316 = vmatpush1.bf16.msra.mxu0 %v1275
    %1317 = vmatprep.mubr.bf16.mxu0 %v1234
    %1318 = vmatmul.mubr.bf16.gmra.mrb[0].mxu0 %v1233
    %v1319 = vpop.f32.mrb[0].mxu0
    %v1320 = vadd.f32 %v1280, %v1319
    %v1321 = vpop.f32.mrb[0].mxu0
    %v1322 = vadd.f32 %v1284, %v1321
    %v1323 = vpop.f32.mrb[0].mxu0
    %v1324 = vadd.f32 %v1280, %v1323
    %v1325 = vpop.f32.mrb[0].mxu0
    %v1326 = vadd.f32 %v1284, %v1325
    %1327 = vmatprep.mubr.bf16.mxu0 %v1236
    %1328 = vmatmul.mubr.bf16.gmra.mrb[0].mxu0 %v1235
    %v1329 = vpop.f32.mrb[0].mxu0
    %v1330 = vadd.f32 %v1280, %v1329
    %v1331 = vpop.f32.mrb[0].mxu0
    %v1332 = vadd.f32 %v1284, %v1331
    %v1333 = vpop.f32.mrb[0].mxu0
    %v1334 = vadd.f32 %v1280, %v1333
    %v1335 = vpop.f32.mrb[0].mxu0
    %v1336 = vadd.f32 %v1284, %v1335
    %1337 = vmatprep.mubr.bf16.mxu0 %v1238
    %1338 = vmatmul.mubr.bf16.gmra.mrb[0].mxu0 %v1237
    %v1339 = vpop.f32.mrb[0].mxu0
    %v1340 = vadd.f32 %v1280, %v1339
    %v1341 = vpop.f32.mrb[0].mxu0
    %v1342 = vadd.f32 %v1284, %v1341
    %v1343 = vpop.f32.mrb[0].mxu0
    %v1344 = vadd.f32 %v1280, %v1343
    %v1345 = vpop.f32.mrb[0].mxu0
    %v1346 = vadd.f32 %v1284, %v1345
    %1347 = vmatprep.mubr.bf16.mxu0 %v1240
    %1348 = vmatmul.mubr.bf16.gmra.mrb[0].mxu0 %v1239
    %v1349 = vpop.f32.mrb[0].mxu0
    %v1350 = vadd.f32 %v1280, %v1349
    %v1351 = vpop.f32.mrb[0].mxu0
    %v1352 = vadd.f32 %v1284, %v1351
    %v1353 = vpop.f32.mrb[0].mxu0
    %v1354 = vadd.f32 %v1280, %v1353
    %v1355 = vpop.f32.mrb[0].mxu0
    %v1356 = vadd.f32 %v1284, %v1355
    %1357 = vdwg.mxu0
    %1358 = vst [vmem:[#allocation4] sm:$0xff] %v1320
    %1359 = vst [vmem:[#allocation4 + $0x10] sm:$0xff] %v1324
    %1360 = vst [vmem:[#allocation4 + $0x20] sm:$0xff] %v1330
    %1361 = vst [vmem:[#allocation4 + $0x30] sm:$0xff] %v1334
    %1362 = vst [vmem:[#allocation4 + $0x40] sm:$0xff] %v1340
    %1363 = vst [vmem:[#allocation4 + $0x50] sm:$0xff] %v1344
    %1364 = vst [vmem:[#allocation4 + $0x60] sm:$0xff] %v1350
    %1365 = vst [vmem:[#allocation4 + $0x70] sm:$0xff] %v1354
    %1366 = vst [vmem:[#allocation4 + $0x8] sm:$0xff] %v1356
    %1367 = vst [vmem:[#allocation4 + $0x18] sm:$0xff] %v1352
    %1368 = vst [vmem:[#allocation4 + $0x28] sm:$0xff] %v1346
    %1369 = vst [vmem:[#allocation4 + $0x38] sm:$0xff] %v1342
    %1370 = vst [vmem:[#allocation4 + $0x48] sm:$0xff] %v1336
    %1371 = vst [vmem:[#allocation4 + $0x58] sm:$0xff] %v1332
    %1372 = vst [vmem:[#allocation4 + $0x68] sm:$0xff] %v1326
    %1373 = vst [vmem:[#allocation4 + $0x78] sm:$0xff] %v1322
    %v1374 = vld [vmem:[#allocation4] sm:$0xff]
    %v1375 = vld [vmem:[#allocation4 + $0x8] sm:$0xff]
    %v1376 = vld [vmem:[#allocation2 + $0x2a0] sm:$0xff]
    %v1377 = vld [vmem:[#allocation2 + $0x2a8] sm:$0xff]
    %v1378 = vld [vmem:[#allocation2 + $0x2b0] sm:$0xff]
    %v1379 = vld [vmem:[#allocation2 + $0x2b8] sm:$0xff]
    %v1380 = vld [vmem:[#allocation2 + $0x2c0] sm:$0xff]
    %v1381 = vld [vmem:[#allocation2 + $0x2c8] sm:$0xff]
    %v1382 = vld [vmem:[#allocation2 + $0x2d0] sm:$0xff]
    %v1383 = vld [vmem:[#allocation2 + $0x2d8] sm:$0xff]
    %v1384 = vld [vmem:[#allocation2 + $0x2e0] sm:$0xff]
    %v1385 = vld [vmem:[#allocation2 + $0x2e8] sm:$0xff]
    %v1386 = vld [vmem:[#allocation2 + $0x2f0] sm:$0xff]
    %v1387 = vld [vmem:[#allocation2 + $0x2f8] sm:$0xff]
    %v1388 = vld [vmem:[#allocation2 + $0x300] sm:$0xff]
    %v1389 = vld [vmem:[#allocation2 + $0x308] sm:$0xff]
    %v1390 = vld [vmem:[#allocation2 + $0x310] sm:$0xff]
    %v1391 = vld [vmem:[#allocation2 + $0x318] sm:$0xff]
    %v1392 = vld [vmem:[#allocation2 + $0x320] sm:$0xff]
    %v1393 = vld [vmem:[#allocation2 + $0x328] sm:$0xff]
    %v1394 = vld [vmem:[#allocation2 + $0x330] sm:$0xff]
    %v1395 = vld [vmem:[#allocation2 + $0x338] sm:$0xff]
    %v1396 = vld [vmem:[#allocation2 + $0x340] sm:$0xff]
    %v1397 = vld [vmem:[#allocation2 + $0x348] sm:$0xff]
    %v1398 = vld [vmem:[#allocation2 + $0x350] sm:$0xff]
    %v1399 = vld [vmem:[#allocation2 + $0x358] sm:$0xff]
    %v1400 = vld [vmem:[#allocation2 + $0x360] sm:$0xff]
    %v1401 = vld [vmem:[#allocation2 + $0x368] sm:$0xff]
    %v1402 = vld [vmem:[#allocation2 + $0x370] sm:$0xff]
    %v1403 = vld [vmem:[#allocation2 + $0x378] sm:$0xff]
    %v1404 = vld [vmem:[#allocation2 + $0x380] sm:$0xff]
    %v1405 = vld [vmem:[#allocation2 + $0x388] sm:$0xff]
    %v1406 = vld [vmem:[#allocation2 + $0x390] sm:$0xff]
    %v1407 = vld [vmem:[#allocation2 + $0x398] sm:$0xff]
    %1408 = vmatprep.subr.bf16.mxu0 %v1377
    %1409 = vmatpush1.bf16.msra.mxu0 %v1376
    %1410 = vmatprep.subr.bf16.mxu0 %v1379
    %1411 = vmatpush1.bf16.msra.mxu0 %v1378
    %1412 = vmatprep.subr.bf16.mxu0 %v1381
    %1413 = vmatpush1.bf16.msra.mxu0 %v1380
    %1414 = vmatprep.subr.bf16.mxu0 %v1383
    %1415 = vmatpush1.bf16.msra.mxu0 %v1382
    %1416 = vmatprep.subr.bf16.mxu0 %v1385
    %1417 = vmatpush1.bf16.msra.mxu0 %v1384
    %1418 = vmatprep.subr.bf16.mxu0 %v1387
    %1419 = vmatpush1.bf16.msra.mxu0 %v1386
    %1420 = vmatprep.subr.bf16.mxu0 %v1389
    %1421 = vmatpush1.bf16.msra.mxu0 %v1388
    %1422 = vmatprep.subr.bf16.mxu0 %v1391
    %1423 = vmatpush1.bf16.msra.mxu0 %v1390
    %1424 = vmatprep.subr.bf16.mxu0 %v1393
    %1425 = vmatpush1.bf16.msra.mxu0 %v1392
    %1426 = vmatprep.subr.bf16.mxu0 %v1395
    %1427 = vmatpush1.bf16.msra.mxu0 %v1394
    %1428 = vmatprep.subr.bf16.mxu0 %v1397
    %1429 = vmatpush1.bf16.msra.mxu0 %v1396
    %1430 = vmatprep.subr.bf16.mxu0 %v1399
    %1431 = vmatpush1.bf16.msra.mxu0 %v1398
    %1432 = vmatprep.subr.bf16.mxu0 %v1401
    %1433 = vmatpush1.bf16.msra.mxu0 %v1400
    %1434 = vmatprep.subr.bf16.mxu0 %v1403
    %1435 = vmatpush1.bf16.msra.mxu0 %v1402
    %1436 = vmatprep.subr.bf16.mxu0 %v1405
    %1437 = vmatpush1.bf16.msra.mxu0 %v1404
    %1438 = vmatprep.subr.bf16.mxu0 %v1407
    %1439 = vmatpush1.bf16.msra.mxu0 %v1406
    %1440 = vmatprep.mubr.bf16.mxu0 0
    %1441 = vmatmul.mubr.bf16.gmra.mrb[0].mxu0 0
    %v1442 = vpop.f32.mrb[0].mxu0
    %v1443 = vadd.f32 0.0, %v1442
    %v1444 = vpop.f32.mrb[0].mxu0
    %v1445 = vadd.f32 0.0, %v1444
    %v1446 = vpop.f32.mrb[0].mxu0
    %v1447 = vpop.f32.mrb[0].mxu0
    %1448 = vdwg.mxu0
    %v1449 = vadd.f32 %v1374, %v1443
    %v1450 = vadd.f32 %v1375, %v1445
    %v1451 = vtanh.pop %v1449
    %v1452 = vtanh.pop %v1450
    %1453 = vst [vmem:[#allocation6] sm:$0xff] %v1451
    %1454 = vst [vmem:[#allocation6 + $0x78] sm:$0xff] %v1452
    %v1455 = vld [vmem:[#allocation4 + $0x10] sm:$0xff]
    %v1456 = vld [vmem:[#allocation4 + $0x18] sm:$0xff]
    %v1457 = vpack.c.bf16 %v1451, %v1451
    %v1458 = vpack.c.bf16 %v1452, %v1452
    %v1459 = vld [vmem:[#allocation2 + $0x2a0] sm:$0xff]
    %v1460 = vld [vmem:[#allocation2 + $0x2a8] sm:$0xff]
    %v1461 = vld [vmem:[#allocation2 + $0x2b0] sm:$0xff]
    %v1462 = vld [vmem:[#allocation2 + $0x2b8] sm:$0xff]
    %v1463 = vld [vmem:[#allocation2 + $0x2c0] sm:$0xff]
    %v1464 = vld [vmem:[#allocation2 + $0x2c8] sm:$0xff]
    %v1465 = vld [vmem:[#allocation2 + $0x2d0] sm:$0xff]
    %v1466 = vld [vmem:[#allocation2 + $0x2d8] sm:$0xff]
    %v1467 = vld [vmem:[#allocation2 + $0x2e0] sm:$0xff]
    %v1468 = vld [vmem:[#allocation2 + $0x2e8] sm:$0xff]
    %v1469 = vld [vmem:[#allocation2 + $0x2f0] sm:$0xff]
    %v1470 = vld [vmem:[#allocation2 + $0x2f8] sm:$0xff]
    %v1471 = vld [vmem:[#allocation2 + $0x300] sm:$0xff]
    %v1472 = vld [vmem:[#allocation2 + $0x308] sm:$0xff]
    %v1473 = vld [vmem:[#allocation2 + $0x310] sm:$0xff]
    %v1474 = vld [vmem:[#allocation2 + $0x318] sm:$0xff]
    %v1475 = vld [vmem:[#allocation2 + $0x320] sm:$0xff]
    %v1476 = vld [vmem:[#allocation2 + $0x328] sm:$0xff]
    %v1477 = vld [vmem:[#allocation2 + $0x330] sm:$0xff]
    %v1478 = vld [vmem:[#allocation2 + $0x338] sm:$0xff]
    %v1479 = vld [vmem:[#allocation2 + $0x340] sm:$0xff]
    %v1480 = vld [vmem:[#allocation2 + $0x348] sm:$0xff]
    %v1481 = vld [vmem:[#allocation2 + $0x350] sm:$0xff]
    %v1482 = vld [vmem:[#allocation2 + $0x358] sm:$0xff]
    %v1483 = vld [vmem:[#allocation2 + $0x360] sm:$0xff]
    %v1484 = vld [vmem:[#allocation2 + $0x368] sm:$0xff]
    %v1485 = vld [vmem:[#allocation2 + $0x370] sm:$0xff]
    %v1486 = vld [vmem:[#allocation2 + $0x378] sm:$0xff]
    %v1487 = vld [vmem:[#allocation2 + $0x380] sm:$0xff]
    %v1488 = vld [vmem:[#allocation2 + $0x388] sm:$0xff]
    %v1489 = vld [vmem:[#allocation2 + $0x390] sm:$0xff]
    %v1490 = vld [vmem:[#allocation2 + $0x398] sm:$0xff]
    %1491 = vmatprep.subr.bf16.mxu0 %v1460
    %1492 = vmatpush1.bf16.msra.mxu0 %v1459
    %1493 = vmatprep.subr.bf16.mxu0 %v1462
    %1494 = vmatpush1.bf16.msra.mxu0 %v1461
    %1495 = vmatprep.subr.bf16.mxu0 %v1464
    %1496 = vmatpush1.bf16.msra.mxu0 %v1463
    %1497 = vmatprep.subr.bf16.mxu0 %v1466
    %1498 = vmatpush1.bf16.msra.mxu0 %v1465
    %1499 = vmatprep.subr.bf16.mxu0 %v1468
    %1500 = vmatpush1.bf16.msra.mxu0 %v1467
    %1501 = vmatprep.subr.bf16.mxu0 %v1470
    %1502 = vmatpush1.bf16.msra.mxu0 %v1469
    %1503 = vmatprep.subr.bf16.mxu0 %v1472
    %1504 = vmatpush1.bf16.msra.mxu0 %v1471
    %1505 = vmatprep.subr.bf16.mxu0 %v1474
    %1506 = vmatpush1.bf16.msra.mxu0 %v1473
    %1507 = vmatprep.subr.bf16.mxu0 %v1476
    %1508 = vmatpush1.bf16.msra.mxu0 %v1475
    %1509 = vmatprep.subr.bf16.mxu0 %v1478
    %1510 = vmatpush1.bf16.msra.mxu0 %v1477
    %1511 = vmatprep.subr.bf16.mxu0 %v1480
    %1512 = vmatpush1.bf16.msra.mxu0 %v1479
    %1513 = vmatprep.subr.bf16.mxu0 %v1482
    %1514 = vmatpush1.bf16.msra.mxu0 %v1481
    %1515 = vmatprep.subr.bf16.mxu0 %v1484
    %1516 = vmatpush1.bf16.msra.mxu0 %v1483
    %1517 = vmatprep.subr.bf16.mxu0 %v1486
    %1518 = vmatpush1.bf16.msra.mxu0 %v1485
    %1519 = vmatprep.subr.bf16.mxu0 %v1488
    %1520 = vmatpush1.bf16.msra.mxu0 %v1487
    %1521 = vmatprep.subr.bf16.mxu0 %v1490
    %1522 = vmatpush1.bf16.msra.mxu0 %v1489
    %1523 = vmatprep.mubr.bf16.mxu0 %v1458
    %1524 = vmatmul.mubr.bf16.gmra.mrb[0].mxu0 %v1457
    %v1525 = vpop.f32.mrb[0].mxu0
    %v1526 = vadd.f32 0.0, %v1525
    %v1527 = vpop.f32.mrb[0].mxu0
    %v1528 = vadd.f32 0.0, %v1527
    %v1529 = vpop.f32.mrb[0].mxu0
    %v1530 = vpop.f32.mrb[0].mxu0
    %1531 = vdwg.mxu0
    %v1532 = vadd.f32 %v1455, %v1526
    %v1533 = vadd.f32 %v1456, %v1528
    %v1534 = vtanh.pop %v1532
    %v1535 = vtanh.pop %v1533
    %1536 = vst [vmem:[#allocation6 + $0x10] sm:$0xff] %v1534
    %1537 = vst [vmem:[#allocation6 + $0x68] sm:$0xff] %v1535
    %v1538 = vld [vmem:[#allocation4 + $0x20] sm:$0xff]
    %v1539 = vld [vmem:[#allocation4 + $0x28] sm:$0xff]
    %v1540 = vpack.c.bf16 %v1534, %v1534
    %v1541 = vpack.c.bf16 %v1535, %v1535
    %v1542 = vld [vmem:[#allocation2 + $0x2a0] sm:$0xff]
    %v1543 = vld [vmem:[#allocation2 + $0x2a8] sm:$0xff]
    %v1544 = vld [vmem:[#allocation2 + $0x2b0] sm:$0xff]
    %v1545 = vld [vmem:[#allocation2 + $0x2b8] sm:$0xff]
    %v1546 = vld [vmem:[#allocation2 + $0x2c0] sm:$0xff]
    %v1547 = vld [vmem:[#allocation2 + $0x2c8] sm:$0xff]
    %v1548 = vld [vmem:[#allocation2 + $0x2d0] sm:$0xff]
    %v1549 = vld [vmem:[#allocation2 + $0x2d8] sm:$0xff]
    %v1550 = vld [vmem:[#allocation2 + $0x2e0] sm:$0xff]
    %v1551 = vld [vmem:[#allocation2 + $0x2e8] sm:$0xff]
    %v1552 = vld [vmem:[#allocation2 + $0x2f0] sm:$0xff]
    %v1553 = vld [vmem:[#allocation2 + $0x2f8] sm:$0xff]
    %v1554 = vld [vmem:[#allocation2 + $0x300] sm:$0xff]
    %v1555 = vld [vmem:[#allocation2 + $0x308] sm:$0xff]
    %v1556 = vld [vmem:[#allocation2 + $0x310] sm:$0xff]
    %v1557 = vld [vmem:[#allocation2 + $0x318] sm:$0xff]
    %v1558 = vld [vmem:[#allocation2 + $0x320] sm:$0xff]
    %v1559 = vld [vmem:[#allocation2 + $0x328] sm:$0xff]
    %v1560 = vld [vmem:[#allocation2 + $0x330] sm:$0xff]
    %v1561 = vld [vmem:[#allocation2 + $0x338] sm:$0xff]
    %v1562 = vld [vmem:[#allocation2 + $0x340] sm:$0xff]
    %v1563 = vld [vmem:[#allocation2 + $0x348] sm:$0xff]
    %v1564 = vld [vmem:[#allocation2 + $0x350] sm:$0xff]
    %v1565 = vld [vmem:[#allocation2 + $0x358] sm:$0xff]
    %v1566 = vld [vmem:[#allocation2 + $0x360] sm:$0xff]
    %v1567 = vld [vmem:[#allocation2 + $0x368] sm:$0xff]
    %v1568 = vld [vmem:[#allocation2 + $0x370] sm:$0xff]
    %v1569 = vld [vmem:[#allocation2 + $0x378] sm:$0xff]
    %v1570 = vld [vmem:[#allocation2 + $0x380] sm:$0xff]
    %v1571 = vld [vmem:[#allocation2 + $0x388] sm:$0xff]
    %v1572 = vld [vmem:[#allocation2 + $0x390] sm:$0xff]
    %v1573 = vld [vmem:[#allocation2 + $0x398] sm:$0xff]
    %1574 = vmatprep.subr.bf16.mxu0 %v1543
    %1575 = vmatpush1.bf16.msra.mxu0 %v1542
    %1576 = vmatprep.subr.bf16.mxu0 %v1545
    %1577 = vmatpush1.bf16.msra.mxu0 %v1544
    %1578 = vmatprep.subr.bf16.mxu0 %v1547
    %1579 = vmatpush1.bf16.msra.mxu0 %v1546
    %1580 = vmatprep.subr.bf16.mxu0 %v1549
    %1581 = vmatpush1.bf16.msra.mxu0 %v1548
    %1582 = vmatprep.subr.bf16.mxu0 %v1551
    %1583 = vmatpush1.bf16.msra.mxu0 %v1550
    %1584 = vmatprep.subr.bf16.mxu0 %v1553
    %1585 = vmatpush1.bf16.msra.mxu0 %v1552
    %1586 = vmatprep.subr.bf16.mxu0 %v1555
    %1587 = vmatpush1.bf16.msra.mxu0 %v1554
    %1588 = vmatprep.subr.bf16.mxu0 %v1557
    %1589 = vmatpush1.bf16.msra.mxu0 %v1556
    %1590 = vmatprep.subr.bf16.mxu0 %v1559
    %1591 = vmatpush1.bf16.msra.mxu0 %v1558
    %1592 = vmatprep.subr.bf16.mxu0 %v1561
    %1593 = vmatpush1.bf16.msra.mxu0 %v1560
    %1594 = vmatprep.subr.bf16.mxu0 %v1563
    %1595 = vmatpush1.bf16.msra.mxu0 %v1562
    %1596 = vmatprep.subr.bf16.mxu0 %v1565
    %1597 = vmatpush1.bf16.msra.mxu0 %v1564
    %1598 = vmatprep.subr.bf16.mxu0 %v1567
    %1599 = vmatpush1.bf16.msra.mxu0 %v1566
    %1600 = vmatprep.subr.bf16.mxu0 %v1569
    %1601 = vmatpush1.bf16.msra.mxu0 %v1568
    %1602 = vmatprep.subr.bf16.mxu0 %v1571
    %1603 = vmatpush1.bf16.msra.mxu0 %v1570
    %1604 = vmatprep.subr.bf16.mxu0 %v1573
    %1605 = vmatpush1.bf16.msra.mxu0 %v1572
    %1606 = vmatprep.mubr.bf16.mxu0 %v1541
    %1607 = vmatmul.mubr.bf16.gmra.mrb[0].mxu0 %v1540
    %v1608 = vpop.f32.mrb[0].mxu0
    %v1609 = vadd.f32 0.0, %v1608
    %v1610 = vpop.f32.mrb[0].mxu0
    %v1611 = vadd.f32 0.0, %v1610
    %v1612 = vpop.f32.mrb[0].mxu0
    %v1613 = vpop.f32.mrb[0].mxu0
    %1614 = vdwg.mxu0
    %v1615 = vadd.f32 %v1538, %v1609
    %v1616 = vadd.f32 %v1539, %v1611
    %v1617 = vtanh.pop %v1615
    %v1618 = vtanh.pop %v1616
    %1619 = vst [vmem:[#allocation6 + $0x20] sm:$0xff] %v1617
    %1620 = vst [vmem:[#allocation6 + $0x58] sm:$0xff] %v1618
    %v1621 = vld [vmem:[#allocation4 + $0x30] sm:$0xff]
    %v1622 = vld [vmem:[#allocation4 + $0x38] sm:$0xff]
    %v1623 = vpack.c.bf16 %v1617, %v1617
    %v1624 = vpack.c.bf16 %v1618, %v1618
    %v1625 = vld [vmem:[#allocation2 + $0x2a0] sm:$0xff]
    %v1626 = vld [vmem:[#allocation2 + $0x2a8] sm:$0xff]
    %v1627 = vld [vmem:[#allocation2 + $0x2b0] sm:$0xff]
    %v1628 = vld [vmem:[#allocation2 + $0x2b8] sm:$0xff]
    %v1629 = vld [vmem:[#allocation2 + $0x2c0] sm:$0xff]
    %v1630 = vld [vmem:[#allocation2 + $0x2c8] sm:$0xff]
    %v1631 = vld [vmem:[#allocation2 + $0x2d0] sm:$0xff]
    %v1632 = vld [vmem:[#allocation2 + $0x2d8] sm:$0xff]
    %v1633 = vld [vmem:[#allocation2 + $0x2e0] sm:$0xff]
    %v1634 = vld [vmem:[#allocation2 + $0x2e8] sm:$0xff]
    %v1635 = vld [vmem:[#allocation2 + $0x2f0] sm:$0xff]
    %v1636 = vld [vmem:[#allocation2 + $0x2f8] sm:$0xff]
    %v1637 = vld [vmem:[#allocation2 + $0x300] sm:$0xff]
    %v1638 = vld [vmem:[#allocation2 + $0x308] sm:$0xff]
    %v1639 = vld [vmem:[#allocation2 + $0x310] sm:$0xff]
    %v1640 = vld [vmem:[#allocation2 + $0x318] sm:$0xff]
    %v1641 = vld [vmem:[#allocation2 + $0x320] sm:$0xff]
    %v1642 = vld [vmem:[#allocation2 + $0x328] sm:$0xff]
    %v1643 = vld [vmem:[#allocation2 + $0x330] sm:$0xff]
    %v1644 = vld [vmem:[#allocation2 + $0x338] sm:$0xff]
    %v1645 = vld [vmem:[#allocation2 + $0x340] sm:$0xff]
    %v1646 = vld [vmem:[#allocation2 + $0x348] sm:$0xff]
    %v1647 = vld [vmem:[#allocation2 + $0x350] sm:$0xff]
    %v1648 = vld [vmem:[#allocation2 + $0x358] sm:$0xff]
    %v1649 = vld [vmem:[#allocation2 + $0x360] sm:$0xff]
    %v1650 = vld [vmem:[#allocation2 + $0x368] sm:$0xff]
    %v1651 = vld [vmem:[#allocation2 + $0x370] sm:$0xff]
    %v1652 = vld [vmem:[#allocation2 + $0x378] sm:$0xff]
    %v1653 = vld [vmem:[#allocation2 + $0x380] sm:$0xff]
    %v1654 = vld [vmem:[#allocation2 + $0x388] sm:$0xff]
    %v1655 = vld [vmem:[#allocation2 + $0x390] sm:$0xff]
    %v1656 = vld [vmem:[#allocation2 + $0x398] sm:$0xff]
    %1657 = vmatprep.subr.bf16.mxu0 %v1626
    %1658 = vmatpush1.bf16.msra.mxu0 %v1625
    %1659 = vmatprep.subr.bf16.mxu0 %v1628
    %1660 = vmatpush1.bf16.msra.mxu0 %v1627
    %1661 = vmatprep.subr.bf16.mxu0 %v1630
    %1662 = vmatpush1.bf16.msra.mxu0 %v1629
    %1663 = vmatprep.subr.bf16.mxu0 %v1632
    %1664 = vmatpush1.bf16.msra.mxu0 %v1631
    %1665 = vmatprep.subr.bf16.mxu0 %v1634
    %1666 = vmatpush1.bf16.msra.mxu0 %v1633
    %1667 = vmatprep.subr.bf16.mxu0 %v1636
    %1668 = vmatpush1.bf16.msra.mxu0 %v1635
    %1669 = vmatprep.subr.bf16.mxu0 %v1638
    %1670 = vmatpush1.bf16.msra.mxu0 %v1637
    %1671 = vmatprep.subr.bf16.mxu0 %v1640
    %1672 = vmatpush1.bf16.msra.mxu0 %v1639
    %1673 = vmatprep.subr.bf16.mxu0 %v1642
    %1674 = vmatpush1.bf16.msra.mxu0 %v1641
    %1675 = vmatprep.subr.bf16.mxu0 %v1644
    %1676 = vmatpush1.bf16.msra.mxu0 %v1643
    %1677 = vmatprep.subr.bf16.mxu0 %v1646
    %1678 = vmatpush1.bf16.msra.mxu0 %v1645
    %1679 = vmatprep.subr.bf16.mxu0 %v1648
    %1680 = vmatpush1.bf16.msra.mxu0 %v1647
    %1681 = vmatprep.subr.bf16.mxu0 %v1650
    %1682 = vmatpush1.bf16.msra.mxu0 %v1649
    %1683 = vmatprep.subr.bf16.mxu0 %v1652
    %1684 = vmatpush1.bf16.msra.mxu0 %v1651
    %1685 = vmatprep.subr.bf16.mxu0 %v1654
    %1686 = vmatpush1.bf16.msra.mxu0 %v1653
    %1687 = vmatprep.subr.bf16.mxu0 %v1656
    %1688 = vmatpush1.bf16.msra.mxu0 %v1655
    %1689 = vmatprep.mubr.bf16.mxu0 %v1624
    %1690 = vmatmul.mubr.bf16.gmra.mrb[0].mxu0 %v1623
    %v1691 = vpop.f32.mrb[0].mxu0
    %v1692 = vadd.f32 0.0, %v1691
    %v1693 = vpop.f32.mrb[0].mxu0
    %v1694 = vadd.f32 0.0, %v1693
    %v1695 = vpop.f32.mrb[0].mxu0
    %v1696 = vpop.f32.mrb[0].mxu0
    %1697 = vdwg.mxu0
    %v1698 = vadd.f32 %v1621, %v1692
    %v1699 = vadd.f32 %v1622, %v1694
    %v1700 = vtanh.pop %v1698
    %v1701 = vtanh.pop %v1699
    %1702 = vst [vmem:[#allocation6 + $0x30] sm:$0xff] %v1700
    %1703 = vst [vmem:[#allocation6 + $0x48] sm:$0xff] %v1701
    %v1704 = vld [vmem:[#allocation4 + $0x40] sm:$0xff]
    %v1705 = vld [vmem:[#allocation4 + $0x48] sm:$0xff]
    %v1706 = vpack.c.bf16 %v1700, %v1700
    %v1707 = vpack.c.bf16 %v1701, %v1701
    %v1708 = vld [vmem:[#allocation2 + $0x2a0] sm:$0xff]
    %v1709 = vld [vmem:[#allocation2 + $0x2a8] sm:$0xff]
    %v1710 = vld [vmem:[#allocation2 + $0x2b0] sm:$0xff]
    %v1711 = vld [vmem:[#allocation2 + $0x2b8] sm:$0xff]
    %v1712 = vld [vmem:[#allocation2 + $0x2c0] sm:$0xff]
    %v1713 = vld [vmem:[#allocation2 + $0x2c8] sm:$0xff]
    %v1714 = vld [vmem:[#allocation2 + $0x2d0] sm:$0xff]
    %v1715 = vld [vmem:[#allocation2 + $0x2d8] sm:$0xff]
    %v1716 = vld [vmem:[#allocation2 + $0x2e0] sm:$0xff]
    %v1717 = vld [vmem:[#allocation2 + $0x2e8] sm:$0xff]
    %v1718 = vld [vmem:[#allocation2 + $0x2f0] sm:$0xff]
    %v1719 = vld [vmem:[#allocation2 + $0x2f8] sm:$0xff]
    %v1720 = vld [vmem:[#allocation2 + $0x300] sm:$0xff]
    %v1721 = vld [vmem:[#allocation2 + $0x308] sm:$0xff]
    %v1722 = vld [vmem:[#allocation2 + $0x310] sm:$0xff]
    %v1723 = vld [vmem:[#allocation2 + $0x318] sm:$0xff]
    %v1724 = vld [vmem:[#allocation2 + $0x320] sm:$0xff]
    %v1725 = vld [vmem:[#allocation2 + $0x328] sm:$0xff]
    %v1726 = vld [vmem:[#allocation2 + $0x330] sm:$0xff]
    %v1727 = vld [vmem:[#allocation2 + $0x338] sm:$0xff]
    %v1728 = vld [vmem:[#allocation2 + $0x340] sm:$0xff]
    %v1729 = vld [vmem:[#allocation2 + $0x348] sm:$0xff]
    %v1730 = vld [vmem:[#allocation2 + $0x350] sm:$0xff]
    %v1731 = vld [vmem:[#allocation2 + $0x358] sm:$0xff]
    %v1732 = vld [vmem:[#allocation2 + $0x360] sm:$0xff]
    %v1733 = vld [vmem:[#allocation2 + $0x368] sm:$0xff]
    %v1734 = vld [vmem:[#allocation2 + $0x370] sm:$0xff]
    %v1735 = vld [vmem:[#allocation2 + $0x378] sm:$0xff]
    %v1736 = vld [vmem:[#allocation2 + $0x380] sm:$0xff]
    %v1737 = vld [vmem:[#allocation2 + $0x388] sm:$0xff]
    %v1738 = vld [vmem:[#allocation2 + $0x390] sm:$0xff]
    %v1739 = vld [vmem:[#allocation2 + $0x398] sm:$0xff]
    %1740 = vmatprep.subr.bf16.mxu0 %v1709
    %1741 = vmatpush1.bf16.msra.mxu0 %v1708
    %1742 = vmatprep.subr.bf16.mxu0 %v1711
    %1743 = vmatpush1.bf16.msra.mxu0 %v1710
    %1744 = vmatprep.subr.bf16.mxu0 %v1713
    %1745 = vmatpush1.bf16.msra.mxu0 %v1712
    %1746 = vmatprep.subr.bf16.mxu0 %v1715
    %1747 = vmatpush1.bf16.msra.mxu0 %v1714
    %1748 = vmatprep.subr.bf16.mxu0 %v1717
    %1749 = vmatpush1.bf16.msra.mxu0 %v1716
    %1750 = vmatprep.subr.bf16.mxu0 %v1719
    %1751 = vmatpush1.bf16.msra.mxu0 %v1718
    %1752 = vmatprep.subr.bf16.mxu0 %v1721
    %1753 = vmatpush1.bf16.msra.mxu0 %v1720
    %1754 = vmatprep.subr.bf16.mxu0 %v1723
    %1755 = vmatpush1.bf16.msra.mxu0 %v1722
    %1756 = vmatprep.subr.bf16.mxu0 %v1725
    %1757 = vmatpush1.bf16.msra.mxu0 %v1724
    %1758 = vmatprep.subr.bf16.mxu0 %v1727
    %1759 = vmatpush1.bf16.msra.mxu0 %v1726
    %1760 = vmatprep.subr.bf16.mxu0 %v1729
    %1761 = vmatpush1.bf16.msra.mxu0 %v1728
    %1762 = vmatprep.subr.bf16.mxu0 %v1731
    %1763 = vmatpush1.bf16.msra.mxu0 %v1730
    %1764 = vmatprep.subr.bf16.mxu0 %v1733
    %1765 = vmatpush1.bf16.msra.mxu0 %v1732
    %1766 = vmatprep.subr.bf16.mxu0 %v1735
    %1767 = vmatpush1.bf16.msra.mxu0 %v1734
    %1768 = vmatprep.subr.bf16.mxu0 %v1737
    %1769 = vmatpush1.bf16.msra.mxu0 %v1736
    %1770 = vmatprep.subr.bf16.mxu0 %v1739
    %1771 = vmatpush1.bf16.msra.mxu0 %v1738
    %1772 = vmatprep.mubr.bf16.mxu0 %v1707
    %1773 = vmatmul.mubr.bf16.gmra.mrb[0].mxu0 %v1706
    %v1774 = vpop.f32.mrb[0].mxu0
    %v1775 = vadd.f32 0.0, %v1774
    %v1776 = vpop.f32.mrb[0].mxu0
    %v1777 = vadd.f32 0.0, %v1776
    %v1778 = vpop.f32.mrb[0].mxu0
    %v1779 = vpop.f32.mrb[0].mxu0
    %1780 = vdwg.mxu0
    %v1781 = vadd.f32 %v1704, %v1775
    %v1782 = vadd.f32 %v1705, %v1777
    %v1783 = vtanh.pop %v1781
    %v1784 = vtanh.pop %v1782
    %1785 = vst [vmem:[#allocation6 + $0x40] sm:$0xff] %v1783
    %1786 = vst [vmem:[#allocation6 + $0x38] sm:$0xff] %v1784
    %v1787 = vld [vmem:[#allocation4 + $0x50] sm:$0xff]
    %v1788 = vld [vmem:[#allocation4 + $0x58] sm:$0xff]
    %v1789 = vpack.c.bf16 %v1783, %v1783
    %v1790 = vpack.c.bf16 %v1784, %v1784
    %v1791 = vld [vmem:[#allocation2 + $0x2a0] sm:$0xff]
    %v1792 = vld [vmem:[#allocation2 + $0x2a8] sm:$0xff]
    %v1793 = vld [vmem:[#allocation2 + $0x2b0] sm:$0xff]
    %v1794 = vld [vmem:[#allocation2 + $0x2b8] sm:$0xff]
    %v1795 = vld [vmem:[#allocation2 + $0x2c0] sm:$0xff]
    %v1796 = vld [vmem:[#allocation2 + $0x2c8] sm:$0xff]
    %v1797 = vld [vmem:[#allocation2 + $0x2d0] sm:$0xff]
    %v1798 = vld [vmem:[#allocation2 + $0x2d8] sm:$0xff]
    %v1799 = vld [vmem:[#allocation2 + $0x2e0] sm:$0xff]
    %v1800 = vld [vmem:[#allocation2 + $0x2e8] sm:$0xff]
    %v1801 = vld [vmem:[#allocation2 + $0x2f0] sm:$0xff]
    %v1802 = vld [vmem:[#allocation2 + $0x2f8] sm:$0xff]
    %v1803 = vld [vmem:[#allocation2 + $0x300] sm:$0xff]
    %v1804 = vld [vmem:[#allocation2 + $0x308] sm:$0xff]
    %v1805 = vld [vmem:[#allocation2 + $0x310] sm:$0xff]
    %v1806 = vld [vmem:[#allocation2 + $0x318] sm:$0xff]
    %v1807 = vld [vmem:[#allocation2 + $0x320] sm:$0xff]
    %v1808 = vld [vmem:[#allocation2 + $0x328] sm:$0xff]
    %v1809 = vld [vmem:[#allocation2 + $0x330] sm:$0xff]
    %v1810 = vld [vmem:[#allocation2 + $0x338] sm:$0xff]
    %v1811 = vld [vmem:[#allocation2 + $0x340] sm:$0xff]
    %v1812 = vld [vmem:[#allocation2 + $0x348] sm:$0xff]
    %v1813 = vld [vmem:[#allocation2 + $0x350] sm:$0xff]
    %v1814 = vld [vmem:[#allocation2 + $0x358] sm:$0xff]
    %v1815 = vld [vmem:[#allocation2 + $0x360] sm:$0xff]
    %v1816 = vld [vmem:[#allocation2 + $0x368] sm:$0xff]
    %v1817 = vld [vmem:[#allocation2 + $0x370] sm:$0xff]
    %v1818 = vld [vmem:[#allocation2 + $0x378] sm:$0xff]
    %v1819 = vld [vmem:[#allocation2 + $0x380] sm:$0xff]
    %v1820 = vld [vmem:[#allocation2 + $0x388] sm:$0xff]
    %v1821 = vld [vmem:[#allocation2 + $0x390] sm:$0xff]
    %v1822 = vld [vmem:[#allocation2 + $0x398] sm:$0xff]
    %1823 = vmatprep.subr.bf16.mxu0 %v1792
    %1824 = vmatpush1.bf16.msra.mxu0 %v1791
    %1825 = vmatprep.subr.bf16.mxu0 %v1794
    %1826 = vmatpush1.bf16.msra.mxu0 %v1793
    %1827 = vmatprep.subr.bf16.mxu0 %v1796
    %1828 = vmatpush1.bf16.msra.mxu0 %v1795
    %1829 = vmatprep.subr.bf16.mxu0 %v1798
    %1830 = vmatpush1.bf16.msra.mxu0 %v1797
    %1831 = vmatprep.subr.bf16.mxu0 %v1800
    %1832 = vmatpush1.bf16.msra.mxu0 %v1799
    %1833 = vmatprep.subr.bf16.mxu0 %v1802
    %1834 = vmatpush1.bf16.msra.mxu0 %v1801
    %1835 = vmatprep.subr.bf16.mxu0 %v1804
    %1836 = vmatpush1.bf16.msra.mxu0 %v1803
    %1837 = vmatprep.subr.bf16.mxu0 %v1806
    %1838 = vmatpush1.bf16.msra.mxu0 %v1805
    %1839 = vmatprep.subr.bf16.mxu0 %v1808
    %1840 = vmatpush1.bf16.msra.mxu0 %v1807
    %1841 = vmatprep.subr.bf16.mxu0 %v1810
    %1842 = vmatpush1.bf16.msra.mxu0 %v1809
    %1843 = vmatprep.subr.bf16.mxu0 %v1812
    %1844 = vmatpush1.bf16.msra.mxu0 %v1811
    %1845 = vmatprep.subr.bf16.mxu0 %v1814
    %1846 = vmatpush1.bf16.msra.mxu0 %v1813
    %1847 = vmatprep.subr.bf16.mxu0 %v1816
    %1848 = vmatpush1.bf16.msra.mxu0 %v1815
    %1849 = vmatprep.subr.bf16.mxu0 %v1818
    %1850 = vmatpush1.bf16.msra.mxu0 %v1817
    %1851 = vmatprep.subr.bf16.mxu0 %v1820
    %1852 = vmatpush1.bf16.msra.mxu0 %v1819
    %1853 = vmatprep.subr.bf16.mxu0 %v1822
    %1854 = vmatpush1.bf16.msra.mxu0 %v1821
    %1855 = vmatprep.mubr.bf16.mxu0 %v1790
    %1856 = vmatmul.mubr.bf16.gmra.mrb[0].mxu0 %v1789
    %v1857 = vpop.f32.mrb[0].mxu0
    %v1858 = vadd.f32 0.0, %v1857
    %v1859 = vpop.f32.mrb[0].mxu0
    %v1860 = vadd.f32 0.0, %v1859
    %v1861 = vpop.f32.mrb[0].mxu0
    %v1862 = vpop.f32.mrb[0].mxu0
    %1863 = vdwg.mxu0
    %v1864 = vadd.f32 %v1787, %v1858
    %v1865 = vadd.f32 %v1788, %v1860
    %v1866 = vtanh.pop %v1864
    %v1867 = vtanh.pop %v1865
    %1868 = vst [vmem:[#allocation6 + $0x50] sm:$0xff] %v1866
    %1869 = vst [vmem:[#allocation6 + $0x28] sm:$0xff] %v1867
    %v1870 = vld [vmem:[#allocation4 + $0x60] sm:$0xff]
    %v1871 = vld [vmem:[#allocation4 + $0x68] sm:$0xff]
    %v1872 = vpack.c.bf16 %v1866, %v1866
    %v1873 = vpack.c.bf16 %v1867, %v1867
    %v1874 = vld [vmem:[#allocation2 + $0x2a0] sm:$0xff]
    %v1875 = vld [vmem:[#allocation2 + $0x2a8] sm:$0xff]
    %v1876 = vld [vmem:[#allocation2 + $0x2b0] sm:$0xff]
    %v1877 = vld [vmem:[#allocation2 + $0x2b8] sm:$0xff]
    %v1878 = vld [vmem:[#allocation2 + $0x2c0] sm:$0xff]
    %v1879 = vld [vmem:[#allocation2 + $0x2c8] sm:$0xff]
    %v1880 = vld [vmem:[#allocation2 + $0x2d0] sm:$0xff]
    %v1881 = vld [vmem:[#allocation2 + $0x2d8] sm:$0xff]
    %v1882 = vld [vmem:[#allocation2 + $0x2e0] sm:$0xff]
    %v1883 = vld [vmem:[#allocation2 + $0x2e8] sm:$0xff]
    %v1884 = vld [vmem:[#allocation2 + $0x2f0] sm:$0xff]
    %v1885 = vld [vmem:[#allocation2 + $0x2f8] sm:$0xff]
    %v1886 = vld [vmem:[#allocation2 + $0x300] sm:$0xff]
    %v1887 = vld [vmem:[#allocation2 + $0x308] sm:$0xff]
    %v1888 = vld [vmem:[#allocation2 + $0x310] sm:$0xff]
    %v1889 = vld [vmem:[#allocation2 + $0x318] sm:$0xff]
    %v1890 = vld [vmem:[#allocation2 + $0x320] sm:$0xff]
    %v1891 = vld [vmem:[#allocation2 + $0x328] sm:$0xff]
    %v1892 = vld [vmem:[#allocation2 + $0x330] sm:$0xff]
    %v1893 = vld [vmem:[#allocation2 + $0x338] sm:$0xff]
    %v1894 = vld [vmem:[#allocation2 + $0x340] sm:$0xff]
    %v1895 = vld [vmem:[#allocation2 + $0x348] sm:$0xff]
    %v1896 = vld [vmem:[#allocation2 + $0x350] sm:$0xff]
    %v1897 = vld [vmem:[#allocation2 + $0x358] sm:$0xff]
    %v1898 = vld [vmem:[#allocation2 + $0x360] sm:$0xff]
    %v1899 = vld [vmem:[#allocation2 + $0x368] sm:$0xff]
    %v1900 = vld [vmem:[#allocation2 + $0x370] sm:$0xff]
    %v1901 = vld [vmem:[#allocation2 + $0x378] sm:$0xff]
    %v1902 = vld [vmem:[#allocation2 + $0x380] sm:$0xff]
    %v1903 = vld [vmem:[#allocation2 + $0x388] sm:$0xff]
    %v1904 = vld [vmem:[#allocation2 + $0x390] sm:$0xff]
    %v1905 = vld [vmem:[#allocation2 + $0x398] sm:$0xff]
    %1906 = vmatprep.subr.bf16.mxu0 %v1875
    %1907 = vmatpush1.bf16.msra.mxu0 %v1874
    %1908 = vmatprep.subr.bf16.mxu0 %v1877
    %1909 = vmatpush1.bf16.msra.mxu0 %v1876
    %1910 = vmatprep.subr.bf16.mxu0 %v1879
    %1911 = vmatpush1.bf16.msra.mxu0 %v1878
    %1912 = vmatprep.subr.bf16.mxu0 %v1881
    %1913 = vmatpush1.bf16.msra.mxu0 %v1880
    %1914 = vmatprep.subr.bf16.mxu0 %v1883
    %1915 = vmatpush1.bf16.msra.mxu0 %v1882
    %1916 = vmatprep.subr.bf16.mxu0 %v1885
    %1917 = vmatpush1.bf16.msra.mxu0 %v1884
    %1918 = vmatprep.subr.bf16.mxu0 %v1887
    %1919 = vmatpush1.bf16.msra.mxu0 %v1886
    %1920 = vmatprep.subr.bf16.mxu0 %v1889
    %1921 = vmatpush1.bf16.msra.mxu0 %v1888
    %1922 = vmatprep.subr.bf16.mxu0 %v1891
    %1923 = vmatpush1.bf16.msra.mxu0 %v1890
    %1924 = vmatprep.subr.bf16.mxu0 %v1893
    %1925 = vmatpush1.bf16.msra.mxu0 %v1892
    %1926 = vmatprep.subr.bf16.mxu0 %v1895
    %1927 = vmatpush1.bf16.msra.mxu0 %v1894
    %1928 = vmatprep.subr.bf16.mxu0 %v1897
    %1929 = vmatpush1.bf16.msra.mxu0 %v1896
    %1930 = vmatprep.subr.bf16.mxu0 %v1899
    %1931 = vmatpush1.bf16.msra.mxu0 %v1898
    %1932 = vmatprep.subr.bf16.mxu0 %v1901
    %1933 = vmatpush1.bf16.msra.mxu0 %v1900
    %1934 = vmatprep.subr.bf16.mxu0 %v1903
    %1935 = vmatpush1.bf16.msra.mxu0 %v1902
    %1936 = vmatprep.subr.bf16.mxu0 %v1905
    %1937 = vmatpush1.bf16.msra.mxu0 %v1904
    %1938 = vmatprep.mubr.bf16.mxu0 %v1873
    %1939 = vmatmul.mubr.bf16.gmra.mrb[0].mxu0 %v1872
    %v1940 = vpop.f32.mrb[0].mxu0
    %v1941 = vadd.f32 0.0, %v1940
    %v1942 = vpop.f32.mrb[0].mxu0
    %v1943 = vadd.f32 0.0, %v1942
    %v1944 = vpop.f32.mrb[0].mxu0
    %v1945 = vpop.f32.mrb[0].mxu0
    %1946 = vdwg.mxu0
    %v1947 = vadd.f32 %v1870, %v1941
    %v1948 = vadd.f32 %v1871, %v1943
    %v1949 = vtanh.pop %v1947
    %v1950 = vtanh.pop %v1948
    %1951 = vst [vmem:[#allocation6 + $0x60] sm:$0xff] %v1949
    %1952 = vst [vmem:[#allocation6 + $0x18] sm:$0xff] %v1950
    %v1953 = vld [vmem:[#allocation4 + $0x70] sm:$0xff]
    %v1954 = vld [vmem:[#allocation4 + $0x78] sm:$0xff]
    %v1955 = vpack.c.bf16 %v1949, %v1949
    %v1956 = vpack.c.bf16 %v1950, %v1950
    %v1957 = vld [vmem:[#allocation2 + $0x2a0] sm:$0xff]
    %v1958 = vld [vmem:[#allocation2 + $0x2a8] sm:$0xff]
    %v1959 = vld [vmem:[#allocation2 + $0x2b0] sm:$0xff]
    %v1960 = vld [vmem:[#allocation2 + $0x2b8] sm:$0xff]
    %v1961 = vld [vmem:[#allocation2 + $0x2c0] sm:$0xff]
    %v1962 = vld [vmem:[#allocation2 + $0x2c8] sm:$0xff]
    %v1963 = vld [vmem:[#allocation2 + $0x2d0] sm:$0xff]
    %v1964 = vld [vmem:[#allocation2 + $0x2d8] sm:$0xff]
    %v1965 = vld [vmem:[#allocation2 + $0x2e0] sm:$0xff]
    %v1966 = vld [vmem:[#allocation2 + $0x2e8] sm:$0xff]
    %v1967 = vld [vmem:[#allocation2 + $0x2f0] sm:$0xff]
    %v1968 = vld [vmem:[#allocation2 + $0x2f8] sm:$0xff]
    %v1969 = vld [vmem:[#allocation2 + $0x300] sm:$0xff]
    %v1970 = vld [vmem:[#allocation2 + $0x308] sm:$0xff]
    %v1971 = vld [vmem:[#allocation2 + $0x310] sm:$0xff]
    %v1972 = vld [vmem:[#allocation2 + $0x318] sm:$0xff]
    %v1973 = vld [vmem:[#allocation2 + $0x320] sm:$0xff]
    %v1974 = vld [vmem:[#allocation2 + $0x328] sm:$0xff]
    %v1975 = vld [vmem:[#allocation2 + $0x330] sm:$0xff]
    %v1976 = vld [vmem:[#allocation2 + $0x338] sm:$0xff]
    %v1977 = vld [vmem:[#allocation2 + $0x340] sm:$0xff]
    %v1978 = vld [vmem:[#allocation2 + $0x348] sm:$0xff]
    %v1979 = vld [vmem:[#allocation2 + $0x350] sm:$0xff]
    %v1980 = vld [vmem:[#allocation2 + $0x358] sm:$0xff]
    %v1981 = vld [vmem:[#allocation2 + $0x360] sm:$0xff]
    %v1982 = vld [vmem:[#allocation2 + $0x368] sm:$0xff]
    %v1983 = vld [vmem:[#allocation2 + $0x370] sm:$0xff]
    %v1984 = vld [vmem:[#allocation2 + $0x378] sm:$0xff]
    %v1985 = vld [vmem:[#allocation2 + $0x380] sm:$0xff]
    %v1986 = vld [vmem:[#allocation2 + $0x388] sm:$0xff]
    %v1987 = vld [vmem:[#allocation2 + $0x390] sm:$0xff]
    %v1988 = vld [vmem:[#allocation2 + $0x398] sm:$0xff]
    %1989 = vmatprep.subr.bf16.mxu0 %v1958
    %1990 = vmatpush1.bf16.msra.mxu0 %v1957
    %1991 = vmatprep.subr.bf16.mxu0 %v1960
    %1992 = vmatpush1.bf16.msra.mxu0 %v1959
    %1993 = vmatprep.subr.bf16.mxu0 %v1962
    %1994 = vmatpush1.bf16.msra.mxu0 %v1961
    %1995 = vmatprep.subr.bf16.mxu0 %v1964
    %1996 = vmatpush1.bf16.msra.mxu0 %v1963
    %1997 = vmatprep.subr.bf16.mxu0 %v1966
    %1998 = vmatpush1.bf16.msra.mxu0 %v1965
    %1999 = vmatprep.subr.bf16.mxu0 %v1968
    %2000 = vmatpush1.bf16.msra.mxu0 %v1967
    %2001 = vmatprep.subr.bf16.mxu0 %v1970
    %2002 = vmatpush1.bf16.msra.mxu0 %v1969
    %2003 = vmatprep.subr.bf16.mxu0 %v1972
    %2004 = vmatpush1.bf16.msra.mxu0 %v1971
    %2005 = vmatprep.subr.bf16.mxu0 %v1974
    %2006 = vmatpush1.bf16.msra.mxu0 %v1973
    %2007 = vmatprep.subr.bf16.mxu0 %v1976
    %2008 = vmatpush1.bf16.msra.mxu0 %v1975
    %2009 = vmatprep.subr.bf16.mxu0 %v1978
    %2010 = vmatpush1.bf16.msra.mxu0 %v1977
    %2011 = vmatprep.subr.bf16.mxu0 %v1980
    %2012 = vmatpush1.bf16.msra.mxu0 %v1979
    %2013 = vmatprep.subr.bf16.mxu0 %v1982
    %2014 = vmatpush1.bf16.msra.mxu0 %v1981
    %2015 = vmatprep.subr.bf16.mxu0 %v1984
    %2016 = vmatpush1.bf16.msra.mxu0 %v1983
    %2017 = vmatprep.subr.bf16.mxu0 %v1986
    %2018 = vmatpush1.bf16.msra.mxu0 %v1985
    %2019 = vmatprep.subr.bf16.mxu0 %v1988
    %2020 = vmatpush1.bf16.msra.mxu0 %v1987
    %2021 = vmatprep.mubr.bf16.mxu0 %v1956
    %2022 = vmatmul.mubr.bf16.gmra.mrb[0].mxu0 %v1955
    %v2023 = vpop.f32.mrb[0].mxu0
    %v2024 = vadd.f32 0.0, %v2023
    %v2025 = vpop.f32.mrb[0].mxu0
    %v2026 = vadd.f32 0.0, %v2025
    %v2027 = vpop.f32.mrb[0].mxu0
    %v2028 = vpop.f32.mrb[0].mxu0
    %2029 = vdwg.mxu0
    %v2030 = vadd.f32 %v1953, %v2024
    %v2031 = vadd.f32 %v1954, %v2026
    %v2032 = vtanh.pop %v2030
    %v2033 = vtanh.pop %v2031
    %2034 = vst [vmem:[#allocation6 + $0x70] sm:$0xff] %v2032
    %2035 = vst [vmem:[#allocation6 + $0x8] sm:$0xff] %v2033
    %s2036 = smul.u32 4, 132
    %s2037 = smul.u32 %s2036, 2
    %s2038 = sshll.u32 %s2037, 4
    %2039 = dma.done %s350, %s2038
    %v2040 = vld [vmem:[#allocation6] sm:$0xff]
    %v2041 = vld [vmem:[#allocation6 + $0x8] sm:$0xff]
    %v2042 = vld [vmem:[#allocation6 + $0x10] sm:$0xff]
    %v2043 = vld [vmem:[#allocation6 + $0x18] sm:$0xff]
    %v2044 = vld [vmem:[#allocation6 + $0x20] sm:$0xff]
    %v2045 = vld [vmem:[#allocation6 + $0x28] sm:$0xff]
    %v2046 = vld [vmem:[#allocation6 + $0x30] sm:$0xff]
    %v2047 = vld [vmem:[#allocation6 + $0x38] sm:$0xff]
    %v2048 = vld [vmem:[#allocation6 + $0x40] sm:$0xff]
    %v2049 = vld [vmem:[#allocation6 + $0x48] sm:$0xff]
    %v2050 = vld [vmem:[#allocation6 + $0x50] sm:$0xff]
    %v2051 = vld [vmem:[#allocation6 + $0x58] sm:$0xff]
    %v2052 = vld [vmem:[#allocation6 + $0x60] sm:$0xff]
    %v2053 = vld [vmem:[#allocation6 + $0x68] sm:$0xff]
    %v2054 = vld [vmem:[#allocation6 + $0x70] sm:$0xff]
    %v2055 = vld [vmem:[#allocation6 + $0x78] sm:$0xff]
    %v2056 = vpack.c.bf16 %v2042, %v2040
    %v2057 = vpack.c.bf16 %v2043, %v2041
    %v2058 = vpack.c.bf16 %v2046, %v2044
    %v2059 = vpack.c.bf16 %v2047, %v2045
    %v2060 = vpack.c.bf16 %v2050, %v2048
    %v2061 = vpack.c.bf16 %v2051, %v2049
    %v2062 = vpack.c.bf16 %v2054, %v2052
    %v2063 = vpack.c.bf16 %v2055, %v2053
    %v2064 = vld [vmem:[#allocation2 + $0x4a0] sm:$0x1]
    %v2065 = vld [vmem:[#allocation2 + $0x4a8] sm:$0x1]
    %v2066 = vunpack.c.l.bf16 %v2064
    %v2067 = vunpack.c.l.bf16 %v2065
    %v2068 = vld [vmem:[#allocation2 + $0x3a0] sm:$0xff]
    %v2069 = vld [vmem:[#allocation2 + $0x3a8] sm:$0xff]
    %v2070 = vld [vmem:[#allocation2 + $0x3b0] sm:$0xff]
    %v2071 = vld [vmem:[#allocation2 + $0x3b8] sm:$0xff]
    %v2072 = vld [vmem:[#allocation2 + $0x3c0] sm:$0xff]
    %v2073 = vld [vmem:[#allocation2 + $0x3c8] sm:$0xff]
    %v2074 = vld [vmem:[#allocation2 + $0x3d0] sm:$0xff]
    %v2075 = vld [vmem:[#allocation2 + $0x3d8] sm:$0xff]
    %v2076 = vld [vmem:[#allocation2 + $0x3e0] sm:$0xff]
    %v2077 = vld [vmem:[#allocation2 + $0x3e8] sm:$0xff]
    %v2078 = vld [vmem:[#allocation2 + $0x3f0] sm:$0xff]
    %v2079 = vld [vmem:[#allocation2 + $0x3f8] sm:$0xff]
    %v2080 = vld [vmem:[#allocation2 + $0x400] sm:$0xff]
    %v2081 = vld [vmem:[#allocation2 + $0x408] sm:$0xff]
    %v2082 = vld [vmem:[#allocation2 + $0x410] sm:$0xff]
    %v2083 = vld [vmem:[#allocation2 + $0x418] sm:$0xff]
    %v2084 = vld [vmem:[#allocation2 + $0x420] sm:$0xff]
    %v2085 = vld [vmem:[#allocation2 + $0x428] sm:$0xff]
    %v2086 = vld [vmem:[#allocation2 + $0x430] sm:$0xff]
    %v2087 = vld [vmem:[#allocation2 + $0x438] sm:$0xff]
    %v2088 = vld [vmem:[#allocation2 + $0x440] sm:$0xff]
    %v2089 = vld [vmem:[#allocation2 + $0x448] sm:$0xff]
    %v2090 = vld [vmem:[#allocation2 + $0x450] sm:$0xff]
    %v2091 = vld [vmem:[#allocation2 + $0x458] sm:$0xff]
    %v2092 = vld [vmem:[#allocation2 + $0x460] sm:$0xff]
    %v2093 = vld [vmem:[#allocation2 + $0x468] sm:$0xff]
    %v2094 = vld [vmem:[#allocation2 + $0x470] sm:$0xff]
    %v2095 = vld [vmem:[#allocation2 + $0x478] sm:$0xff]
    %v2096 = vld [vmem:[#allocation2 + $0x480] sm:$0xff]
    %v2097 = vld [vmem:[#allocation2 + $0x488] sm:$0xff]
    %v2098 = vld [vmem:[#allocation2 + $0x490] sm:$0xff]
    %v2099 = vld [vmem:[#allocation2 + $0x498] sm:$0xff]
    %v2100 = vlaneseq
    %v2101 = vshrl.u32 %v2100, 7
    %v2102 = vsub.s32 0, %v2101
    %v2103 = vrot.slane %v2066, %v2102
    %v2104 = vlaneseq
    %v2105 = vshrl.u32 %v2104, 7
    %v2106 = vsub.s32 0, %v2105
    %v2107 = vrot.slane %v2067, %v2106
    %2108 = vmatprep.subr.bf16.mxu0 %v2069
    %2109 = vmatpush1.bf16.msra.mxu0 %v2068
    %2110 = vmatprep.subr.bf16.mxu0 %v2071
    %2111 = vmatpush1.bf16.msra.mxu0 %v2070
    %2112 = vmatprep.subr.bf16.mxu0 %v2073
    %2113 = vmatpush1.bf16.msra.mxu0 %v2072
    %2114 = vmatprep.subr.bf16.mxu0 %v2075
    %2115 = vmatpush1.bf16.msra.mxu0 %v2074
    %2116 = vmatprep.subr.bf16.mxu0 %v2077
    %2117 = vmatpush1.bf16.msra.mxu0 %v2076
    %2118 = vmatprep.subr.bf16.mxu0 %v2079
    %2119 = vmatpush1.bf16.msra.mxu0 %v2078
    %2120 = vmatprep.subr.bf16.mxu0 %v2081
    %2121 = vmatpush1.bf16.msra.mxu0 %v2080
    %2122 = vmatprep.subr.bf16.mxu0 %v2083
    %2123 = vmatpush1.bf16.msra.mxu0 %v2082
    %2124 = vmatprep.subr.bf16.mxu0 %v2085
    %2125 = vmatpush1.bf16.msra.mxu0 %v2084
    %2126 = vmatprep.subr.bf16.mxu0 %v2087
    %2127 = vmatpush1.bf16.msra.mxu0 %v2086
    %2128 = vmatprep.subr.bf16.mxu0 %v2089
    %2129 = vmatpush1.bf16.msra.mxu0 %v2088
    %2130 = vmatprep.subr.bf16.mxu0 %v2091
    %2131 = vmatpush1.bf16.msra.mxu0 %v2090
    %2132 = vmatprep.subr.bf16.mxu0 %v2093
    %2133 = vmatpush1.bf16.msra.mxu0 %v2092
    %2134 = vmatprep.subr.bf16.mxu0 %v2095
    %2135 = vmatpush1.bf16.msra.mxu0 %v2094
    %2136 = vmatprep.subr.bf16.mxu0 %v2097
    %2137 = vmatpush1.bf16.msra.mxu0 %v2096
    %2138 = vmatprep.subr.bf16.mxu0 %v2099
    %2139 = vmatpush1.bf16.msra.mxu0 %v2098
    %2140 = vmatprep.mubr.bf16.mxu0 %v2057
    %2141 = vmatmul.mubr.bf16.gmra.mrb[0].mxu0 %v2056
    %v2142 = vpop.f32.mrb[0].mxu0
    %v2143 = vadd.f32 %v2103, %v2142
    %v2144 = vpop.f32.mrb[0].mxu0
    %v2145 = vadd.f32 %v2107, %v2144
    %v2146 = vpop.f32.mrb[0].mxu0
    %v2147 = vadd.f32 %v2103, %v2146
    %v2148 = vpop.f32.mrb[0].mxu0
    %v2149 = vadd.f32 %v2107, %v2148
    %2150 = vmatprep.mubr.bf16.mxu0 %v2059
    %2151 = vmatmul.mubr.bf16.gmra.mrb[0].mxu0 %v2058
    %v2152 = vpop.f32.mrb[0].mxu0
    %v2153 = vadd.f32 %v2103, %v2152
    %v2154 = vpop.f32.mrb[0].mxu0
    %v2155 = vadd.f32 %v2107, %v2154
    %v2156 = vpop.f32.mrb[0].mxu0
    %v2157 = vadd.f32 %v2103, %v2156
    %v2158 = vpop.f32.mrb[0].mxu0
    %v2159 = vadd.f32 %v2107, %v2158
    %2160 = vmatprep.mubr.bf16.mxu0 %v2061
    %2161 = vmatmul.mubr.bf16.gmra.mrb[0].mxu0 %v2060
    %v2162 = vpop.f32.mrb[0].mxu0
    %v2163 = vadd.f32 %v2103, %v2162
    %v2164 = vpop.f32.mrb[0].mxu0
    %v2165 = vadd.f32 %v2107, %v2164
    %v2166 = vpop.f32.mrb[0].mxu0
    %v2167 = vadd.f32 %v2103, %v2166
    %v2168 = vpop.f32.mrb[0].mxu0
    %v2169 = vadd.f32 %v2107, %v2168
    %2170 = vmatprep.mubr.bf16.mxu0 %v2063
    %2171 = vmatmul.mubr.bf16.gmra.mrb[0].mxu0 %v2062
    %v2172 = vpop.f32.mrb[0].mxu0
    %v2173 = vadd.f32 %v2103, %v2172
    %v2174 = vpop.f32.mrb[0].mxu0
    %v2175 = vadd.f32 %v2107, %v2174
    %v2176 = vpop.f32.mrb[0].mxu0
    %v2177 = vadd.f32 %v2103, %v2176
    %v2178 = vpop.f32.mrb[0].mxu0
    %v2179 = vadd.f32 %v2107, %v2178
    %2180 = vdwg.mxu0
    %2181 = vst [vmem:[#allocation4] sm:$0xff] %v2143
    %2182 = vst [vmem:[#allocation4 + $0x10] sm:$0xff] %v2147
    %2183 = vst [vmem:[#allocation4 + $0x20] sm:$0xff] %v2153
    %2184 = vst [vmem:[#allocation4 + $0x30] sm:$0xff] %v2157
    %2185 = vst [vmem:[#allocation4 + $0x40] sm:$0xff] %v2163
    %2186 = vst [vmem:[#allocation4 + $0x50] sm:$0xff] %v2167
    %2187 = vst [vmem:[#allocation4 + $0x60] sm:$0xff] %v2173
    %2188 = vst [vmem:[#allocation4 + $0x70] sm:$0xff] %v2177
    %2189 = vst [vmem:[#allocation4 + $0x8] sm:$0xff] %v2179
    %2190 = vst [vmem:[#allocation4 + $0x18] sm:$0xff] %v2175
    %2191 = vst [vmem:[#allocation4 + $0x28] sm:$0xff] %v2169
    %2192 = vst [vmem:[#allocation4 + $0x38] sm:$0xff] %v2165
    %2193 = vst [vmem:[#allocation4 + $0x48] sm:$0xff] %v2159
    %2194 = vst [vmem:[#allocation4 + $0x58] sm:$0xff] %v2155
    %2195 = vst [vmem:[#allocation4 + $0x68] sm:$0xff] %v2149
    %2196 = vst [vmem:[#allocation4 + $0x78] sm:$0xff] %v2145
    %v2197 = vld [vmem:[#allocation4] sm:$0xff]
    %v2198 = vld [vmem:[#allocation4 + $0x8] sm:$0xff]
    %v2199 = vld [vmem:[#allocation2 + $0x4b0] sm:$0xff]
    %v2200 = vld [vmem:[#allocation2 + $0x4b8] sm:$0xff]
    %v2201 = vld [vmem:[#allocation2 + $0x4c0] sm:$0xff]
    %v2202 = vld [vmem:[#allocation2 + $0x4c8] sm:$0xff]
    %v2203 = vld [vmem:[#allocation2 + $0x4d0] sm:$0xff]
    %v2204 = vld [vmem:[#allocation2 + $0x4d8] sm:$0xff]
    %v2205 = vld [vmem:[#allocation2 + $0x4e0] sm:$0xff]
    %v2206 = vld [vmem:[#allocation2 + $0x4e8] sm:$0xff]
    %v2207 = vld [vmem:[#allocation2 + $0x4f0] sm:$0xff]
    %v2208 = vld [vmem:[#allocation2 + $0x4f8] sm:$0xff]
    %v2209 = vld [vmem:[#allocation2 + $0x500] sm:$0xff]
    %v2210 = vld [vmem:[#allocation2 + $0x508] sm:$0xff]
    %v2211 = vld [vmem:[#allocation2 + $0x510] sm:$0xff]
    %v2212 = vld [vmem:[#allocation2 + $0x518] sm:$0xff]
    %v2213 = vld [vmem:[#allocation2 + $0x520] sm:$0xff]
    %v2214 = vld [vmem:[#allocation2 + $0x528] sm:$0xff]
    %v2215 = vld [vmem:[#allocation2 + $0x530] sm:$0xff]
    %v2216 = vld [vmem:[#allocation2 + $0x538] sm:$0xff]
    %v2217 = vld [vmem:[#allocation2 + $0x540] sm:$0xff]
    %v2218 = vld [vmem:[#allocation2 + $0x548] sm:$0xff]
    %v2219 = vld [vmem:[#allocation2 + $0x550] sm:$0xff]
    %v2220 = vld [vmem:[#allocation2 + $0x558] sm:$0xff]
    %v2221 = vld [vmem:[#allocation2 + $0x560] sm:$0xff]
    %v2222 = vld [vmem:[#allocation2 + $0x568] sm:$0xff]
    %v2223 = vld [vmem:[#allocation2 + $0x570] sm:$0xff]
    %v2224 = vld [vmem:[#allocation2 + $0x578] sm:$0xff]
    %v2225 = vld [vmem:[#allocation2 + $0x580] sm:$0xff]
    %v2226 = vld [vmem:[#allocation2 + $0x588] sm:$0xff]
    %v2227 = vld [vmem:[#allocation2 + $0x590] sm:$0xff]
    %v2228 = vld [vmem:[#allocation2 + $0x598] sm:$0xff]
    %v2229 = vld [vmem:[#allocation2 + $0x5a0] sm:$0xff]
    %v2230 = vld [vmem:[#allocation2 + $0x5a8] sm:$0xff]
    %2231 = vmatprep.subr.bf16.mxu0 %v2200
    %2232 = vmatpush1.bf16.msra.mxu0 %v2199
    %2233 = vmatprep.subr.bf16.mxu0 %v2202
    %2234 = vmatpush1.bf16.msra.mxu0 %v2201
    %2235 = vmatprep.subr.bf16.mxu0 %v2204
    %2236 = vmatpush1.bf16.msra.mxu0 %v2203
    %2237 = vmatprep.subr.bf16.mxu0 %v2206
    %2238 = vmatpush1.bf16.msra.mxu0 %v2205
    %2239 = vmatprep.subr.bf16.mxu0 %v2208
    %2240 = vmatpush1.bf16.msra.mxu0 %v2207
    %2241 = vmatprep.subr.bf16.mxu0 %v2210
    %2242 = vmatpush1.bf16.msra.mxu0 %v2209
    %2243 = vmatprep.subr.bf16.mxu0 %v2212
    %2244 = vmatpush1.bf16.msra.mxu0 %v2211
    %2245 = vmatprep.subr.bf16.mxu0 %v2214
    %2246 = vmatpush1.bf16.msra.mxu0 %v2213
    %2247 = vmatprep.subr.bf16.mxu0 %v2216
    %2248 = vmatpush1.bf16.msra.mxu0 %v2215
    %2249 = vmatprep.subr.bf16.mxu0 %v2218
    %2250 = vmatpush1.bf16.msra.mxu0 %v2217
    %2251 = vmatprep.subr.bf16.mxu0 %v2220
    %2252 = vmatpush1.bf16.msra.mxu0 %v2219
    %2253 = vmatprep.subr.bf16.mxu0 %v2222
    %2254 = vmatpush1.bf16.msra.mxu0 %v2221
    %2255 = vmatprep.subr.bf16.mxu0 %v2224
    %2256 = vmatpush1.bf16.msra.mxu0 %v2223
    %2257 = vmatprep.subr.bf16.mxu0 %v2226
    %2258 = vmatpush1.bf16.msra.mxu0 %v2225
    %2259 = vmatprep.subr.bf16.mxu0 %v2228
    %2260 = vmatpush1.bf16.msra.mxu0 %v2227
    %2261 = vmatprep.subr.bf16.mxu0 %v2230
    %2262 = vmatpush1.bf16.msra.mxu0 %v2229
    %2263 = vmatprep.mubr.bf16.mxu0 0
    %2264 = vmatmul.mubr.bf16.gmra.mrb[0].mxu0 0
    %v2265 = vpop.f32.mrb[0].mxu0
    %v2266 = vadd.f32 0.0, %v2265
    %v2267 = vpop.f32.mrb[0].mxu0
    %v2268 = vadd.f32 0.0, %v2267
    %v2269 = vpop.f32.mrb[0].mxu0
    %v2270 = vpop.f32.mrb[0].mxu0
    %2271 = vdwg.mxu0
    %v2272 = vadd.f32 %v2197, %v2266
    %v2273 = vadd.f32 %v2198, %v2268
    %v2274 = vtanh.pop %v2272
    %v2275 = vtanh.pop %v2273
    %v2276 = vld [vmem:[#allocation4 + $0x10] sm:$0xff]
    %v2277 = vld [vmem:[#allocation4 + $0x18] sm:$0xff]
    %v2278 = vpack.c.bf16 %v2274, %v2274
    %v2279 = vpack.c.bf16 %v2275, %v2275
    %2280 = vmatprep.subr.bf16.mxu0 %v2200
    %2281 = vmatpush1.bf16.msra.mxu0 %v2199
    %2282 = vmatprep.subr.bf16.mxu0 %v2202
    %2283 = vmatpush1.bf16.msra.mxu0 %v2201
    %2284 = vmatprep.subr.bf16.mxu0 %v2204
    %2285 = vmatpush1.bf16.msra.mxu0 %v2203
    %2286 = vmatprep.subr.bf16.mxu0 %v2206
    %2287 = vmatpush1.bf16.msra.mxu0 %v2205
    %2288 = vmatprep.subr.bf16.mxu0 %v2208
    %2289 = vmatpush1.bf16.msra.mxu0 %v2207
    %2290 = vmatprep.subr.bf16.mxu0 %v2210
    %2291 = vmatpush1.bf16.msra.mxu0 %v2209
    %2292 = vmatprep.subr.bf16.mxu0 %v2212
    %2293 = vmatpush1.bf16.msra.mxu0 %v2211
    %2294 = vmatprep.subr.bf16.mxu0 %v2214
    %2295 = vmatpush1.bf16.msra.mxu0 %v2213
    %2296 = vmatprep.subr.bf16.mxu0 %v2216
    %2297 = vmatpush1.bf16.msra.mxu0 %v2215
    %2298 = vmatprep.subr.bf16.mxu0 %v2218
    %2299 = vmatpush1.bf16.msra.mxu0 %v2217
    %2300 = vmatprep.subr.bf16.mxu0 %v2220
    %2301 = vmatpush1.bf16.msra.mxu0 %v2219
    %2302 = vmatprep.subr.bf16.mxu0 %v2222
    %2303 = vmatpush1.bf16.msra.mxu0 %v2221
    %2304 = vmatprep.subr.bf16.mxu0 %v2224
    %2305 = vmatpush1.bf16.msra.mxu0 %v2223
    %2306 = vmatprep.subr.bf16.mxu0 %v2226
    %2307 = vmatpush1.bf16.msra.mxu0 %v2225
    %2308 = vmatprep.subr.bf16.mxu0 %v2228
    %2309 = vmatpush1.bf16.msra.mxu0 %v2227
    %2310 = vmatprep.subr.bf16.mxu0 %v2230
    %2311 = vmatpush1.bf16.msra.mxu0 %v2229
    %2312 = vmatprep.mubr.bf16.mxu0 %v2279
    %2313 = vmatmul.mubr.bf16.gmra.mrb[0].mxu0 %v2278
    %v2314 = vpop.f32.mrb[0].mxu0
    %v2315 = vadd.f32 0.0, %v2314
    %v2316 = vpop.f32.mrb[0].mxu0
    %v2317 = vadd.f32 0.0, %v2316
    %v2318 = vpop.f32.mrb[0].mxu0
    %v2319 = vpop.f32.mrb[0].mxu0
    %2320 = vdwg.mxu0
    %v2321 = vadd.f32 %v2276, %v2315
    %v2322 = vadd.f32 %v2277, %v2317
    %v2323 = vtanh.pop %v2321
    %v2324 = vtanh.pop %v2322
    %v2325 = vld [vmem:[#allocation4 + $0x20] sm:$0xff]
    %v2326 = vld [vmem:[#allocation4 + $0x28] sm:$0xff]
    %v2327 = vpack.c.bf16 %v2323, %v2323
    %v2328 = vpack.c.bf16 %v2324, %v2324
    %2329 = vmatprep.subr.bf16.mxu0 %v2200
    %2330 = vmatpush1.bf16.msra.mxu0 %v2199
    %2331 = vmatprep.subr.bf16.mxu0 %v2202
    %2332 = vmatpush1.bf16.msra.mxu0 %v2201
    %2333 = vmatprep.subr.bf16.mxu0 %v2204
    %2334 = vmatpush1.bf16.msra.mxu0 %v2203
    %2335 = vmatprep.subr.bf16.mxu0 %v2206
    %2336 = vmatpush1.bf16.msra.mxu0 %v2205
    %2337 = vmatprep.subr.bf16.mxu0 %v2208
    %2338 = vmatpush1.bf16.msra.mxu0 %v2207
    %2339 = vmatprep.subr.bf16.mxu0 %v2210
    %2340 = vmatpush1.bf16.msra.mxu0 %v2209
    %2341 = vmatprep.subr.bf16.mxu0 %v2212
    %2342 = vmatpush1.bf16.msra.mxu0 %v2211
    %2343 = vmatprep.subr.bf16.mxu0 %v2214
    %2344 = vmatpush1.bf16.msra.mxu0 %v2213
    %2345 = vmatprep.subr.bf16.mxu0 %v2216
    %2346 = vmatpush1.bf16.msra.mxu0 %v2215
    %2347 = vmatprep.subr.bf16.mxu0 %v2218
    %2348 = vmatpush1.bf16.msra.mxu0 %v2217
    %2349 = vmatprep.subr.bf16.mxu0 %v2220
    %2350 = vmatpush1.bf16.msra.mxu0 %v2219
    %2351 = vmatprep.subr.bf16.mxu0 %v2222
    %2352 = vmatpush1.bf16.msra.mxu0 %v2221
    %2353 = vmatprep.subr.bf16.mxu0 %v2224
    %2354 = vmatpush1.bf16.msra.mxu0 %v2223
    %2355 = vmatprep.subr.bf16.mxu0 %v2226
    %2356 = vmatpush1.bf16.msra.mxu0 %v2225
    %2357 = vmatprep.subr.bf16.mxu0 %v2228
    %2358 = vmatpush1.bf16.msra.mxu0 %v2227
    %2359 = vmatprep.subr.bf16.mxu0 %v2230
    %2360 = vmatpush1.bf16.msra.mxu0 %v2229
    %2361 = vmatprep.mubr.bf16.mxu0 %v2328
    %2362 = vmatmul.mubr.bf16.gmra.mrb[0].mxu0 %v2327
    %v2363 = vpop.f32.mrb[0].mxu0
    %v2364 = vadd.f32 0.0, %v2363
    %v2365 = vpop.f32.mrb[0].mxu0
    %v2366 = vadd.f32 0.0, %v2365
    %v2367 = vpop.f32.mrb[0].mxu0
    %v2368 = vpop.f32.mrb[0].mxu0
    %2369 = vdwg.mxu0
    %v2370 = vadd.f32 %v2325, %v2364
    %v2371 = vadd.f32 %v2326, %v2366
    %v2372 = vtanh.pop %v2370
    %v2373 = vtanh.pop %v2371
    %v2374 = vld [vmem:[#allocation4 + $0x30] sm:$0xff]
    %v2375 = vld [vmem:[#allocation4 + $0x38] sm:$0xff]
    %v2376 = vpack.c.bf16 %v2372, %v2372
    %v2377 = vpack.c.bf16 %v2373, %v2373
    %2378 = vmatprep.subr.bf16.mxu0 %v2200
    %2379 = vmatpush1.bf16.msra.mxu0 %v2199
    %2380 = vmatprep.subr.bf16.mxu0 %v2202
    %2381 = vmatpush1.bf16.msra.mxu0 %v2201
    %2382 = vmatprep.subr.bf16.mxu0 %v2204
    %2383 = vmatpush1.bf16.msra.mxu0 %v2203
    %2384 = vmatprep.subr.bf16.mxu0 %v2206
    %2385 = vmatpush1.bf16.msra.mxu0 %v2205
    %2386 = vmatprep.subr.bf16.mxu0 %v2208
    %2387 = vmatpush1.bf16.msra.mxu0 %v2207
    %2388 = vmatprep.subr.bf16.mxu0 %v2210
    %2389 = vmatpush1.bf16.msra.mxu0 %v2209
    %2390 = vmatprep.subr.bf16.mxu0 %v2212
    %2391 = vmatpush1.bf16.msra.mxu0 %v2211
    %2392 = vmatprep.subr.bf16.mxu0 %v2214
    %2393 = vmatpush1.bf16.msra.mxu0 %v2213
    %2394 = vmatprep.subr.bf16.mxu0 %v2216
    %2395 = vmatpush1.bf16.msra.mxu0 %v2215
    %2396 = vmatprep.subr.bf16.mxu0 %v2218
    %2397 = vmatpush1.bf16.msra.mxu0 %v2217
    %2398 = vmatprep.subr.bf16.mxu0 %v2220
    %2399 = vmatpush1.bf16.msra.mxu0 %v2219
    %2400 = vmatprep.subr.bf16.mxu0 %v2222
    %2401 = vmatpush1.bf16.msra.mxu0 %v2221
    %2402 = vmatprep.subr.bf16.mxu0 %v2224
    %2403 = vmatpush1.bf16.msra.mxu0 %v2223
    %2404 = vmatprep.subr.bf16.mxu0 %v2226
    %2405 = vmatpush1.bf16.msra.mxu0 %v2225
    %2406 = vmatprep.subr.bf16.mxu0 %v2228
    %2407 = vmatpush1.bf16.msra.mxu0 %v2227
    %2408 = vmatprep.subr.bf16.mxu0 %v2230
    %2409 = vmatpush1.bf16.msra.mxu0 %v2229
    %2410 = vmatprep.mubr.bf16.mxu0 %v2377
    %2411 = vmatmul.mubr.bf16.gmra.mrb[0].mxu0 %v2376
    %v2412 = vpop.f32.mrb[0].mxu0
    %v2413 = vadd.f32 0.0, %v2412
    %v2414 = vpop.f32.mrb[0].mxu0
    %v2415 = vadd.f32 0.0, %v2414
    %v2416 = vpop.f32.mrb[0].mxu0
    %v2417 = vpop.f32.mrb[0].mxu0
    %2418 = vdwg.mxu0
    %v2419 = vadd.f32 %v2374, %v2413
    %v2420 = vadd.f32 %v2375, %v2415
    %v2421 = vtanh.pop %v2419
    %v2422 = vtanh.pop %v2420
    %v2423 = vld [vmem:[#allocation4 + $0x40] sm:$0xff]
    %v2424 = vld [vmem:[#allocation4 + $0x48] sm:$0xff]
    %v2425 = vpack.c.bf16 %v2421, %v2421
    %v2426 = vpack.c.bf16 %v2422, %v2422
    %2427 = vmatprep.subr.bf16.mxu0 %v2200
    %2428 = vmatpush1.bf16.msra.mxu0 %v2199
    %2429 = vmatprep.subr.bf16.mxu0 %v2202
    %2430 = vmatpush1.bf16.msra.mxu0 %v2201
    %2431 = vmatprep.subr.bf16.mxu0 %v2204
    %2432 = vmatpush1.bf16.msra.mxu0 %v2203
    %2433 = vmatprep.subr.bf16.mxu0 %v2206
    %2434 = vmatpush1.bf16.msra.mxu0 %v2205
    %2435 = vmatprep.subr.bf16.mxu0 %v2208
    %2436 = vmatpush1.bf16.msra.mxu0 %v2207
    %2437 = vmatprep.subr.bf16.mxu0 %v2210
    %2438 = vmatpush1.bf16.msra.mxu0 %v2209
    %2439 = vmatprep.subr.bf16.mxu0 %v2212
    %2440 = vmatpush1.bf16.msra.mxu0 %v2211
    %2441 = vmatprep.subr.bf16.mxu0 %v2214
    %2442 = vmatpush1.bf16.msra.mxu0 %v2213
    %2443 = vmatprep.subr.bf16.mxu0 %v2216
    %2444 = vmatpush1.bf16.msra.mxu0 %v2215
    %2445 = vmatprep.subr.bf16.mxu0 %v2218
    %2446 = vmatpush1.bf16.msra.mxu0 %v2217
    %2447 = vmatprep.subr.bf16.mxu0 %v2220
    %2448 = vmatpush1.bf16.msra.mxu0 %v2219
    %2449 = vmatprep.subr.bf16.mxu0 %v2222
    %2450 = vmatpush1.bf16.msra.mxu0 %v2221
    %2451 = vmatprep.subr.bf16.mxu0 %v2224
    %2452 = vmatpush1.bf16.msra.mxu0 %v2223
    %2453 = vmatprep.subr.bf16.mxu0 %v2226
    %2454 = vmatpush1.bf16.msra.mxu0 %v2225
    %2455 = vmatprep.subr.bf16.mxu0 %v2228
    %2456 = vmatpush1.bf16.msra.mxu0 %v2227
    %2457 = vmatprep.subr.bf16.mxu0 %v2230
    %2458 = vmatpush1.bf16.msra.mxu0 %v2229
    %2459 = vmatprep.mubr.bf16.mxu0 %v2426
    %2460 = vmatmul.mubr.bf16.gmra.mrb[0].mxu0 %v2425
    %v2461 = vpop.f32.mrb[0].mxu0
    %v2462 = vadd.f32 0.0, %v2461
    %v2463 = vpop.f32.mrb[0].mxu0
    %v2464 = vadd.f32 0.0, %v2463
    %v2465 = vpop.f32.mrb[0].mxu0
    %v2466 = vpop.f32.mrb[0].mxu0
    %2467 = vdwg.mxu0
    %v2468 = vadd.f32 %v2423, %v2462
    %v2469 = vadd.f32 %v2424, %v2464
    %v2470 = vtanh.pop %v2468
    %v2471 = vtanh.pop %v2469
    %v2472 = vld [vmem:[#allocation4 + $0x50] sm:$0xff]
    %v2473 = vld [vmem:[#allocation4 + $0x58] sm:$0xff]
    %v2474 = vpack.c.bf16 %v2470, %v2470
    %v2475 = vpack.c.bf16 %v2471, %v2471
    %2476 = vmatprep.subr.bf16.mxu0 %v2200
    %2477 = vmatpush1.bf16.msra.mxu0 %v2199
    %2478 = vmatprep.subr.bf16.mxu0 %v2202
    %2479 = vmatpush1.bf16.msra.mxu0 %v2201
    %2480 = vmatprep.subr.bf16.mxu0 %v2204
    %2481 = vmatpush1.bf16.msra.mxu0 %v2203
    %2482 = vmatprep.subr.bf16.mxu0 %v2206
    %2483 = vmatpush1.bf16.msra.mxu0 %v2205
    %2484 = vmatprep.subr.bf16.mxu0 %v2208
    %2485 = vmatpush1.bf16.msra.mxu0 %v2207
    %2486 = vmatprep.subr.bf16.mxu0 %v2210
    %2487 = vmatpush1.bf16.msra.mxu0 %v2209
    %2488 = vmatprep.subr.bf16.mxu0 %v2212
    %2489 = vmatpush1.bf16.msra.mxu0 %v2211
    %2490 = vmatprep.subr.bf16.mxu0 %v2214
    %2491 = vmatpush1.bf16.msra.mxu0 %v2213
    %2492 = vmatprep.subr.bf16.mxu0 %v2216
    %2493 = vmatpush1.bf16.msra.mxu0 %v2215
    %2494 = vmatprep.subr.bf16.mxu0 %v2218
    %2495 = vmatpush1.bf16.msra.mxu0 %v2217
    %2496 = vmatprep.subr.bf16.mxu0 %v2220
    %2497 = vmatpush1.bf16.msra.mxu0 %v2219
    %2498 = vmatprep.subr.bf16.mxu0 %v2222
    %2499 = vmatpush1.bf16.msra.mxu0 %v2221
    %2500 = vmatprep.subr.bf16.mxu0 %v2224
    %2501 = vmatpush1.bf16.msra.mxu0 %v2223
    %2502 = vmatprep.subr.bf16.mxu0 %v2226
    %2503 = vmatpush1.bf16.msra.mxu0 %v2225
    %2504 = vmatprep.subr.bf16.mxu0 %v2228
    %2505 = vmatpush1.bf16.msra.mxu0 %v2227
    %2506 = vmatprep.subr.bf16.mxu0 %v2230
    %2507 = vmatpush1.bf16.msra.mxu0 %v2229
    %2508 = vmatprep.mubr.bf16.mxu0 %v2475
    %2509 = vmatmul.mubr.bf16.gmra.mrb[0].mxu0 %v2474
    %v2510 = vpop.f32.mrb[0].mxu0
    %v2511 = vadd.f32 0.0, %v2510
    %v2512 = vpop.f32.mrb[0].mxu0
    %v2513 = vadd.f32 0.0, %v2512
    %v2514 = vpop.f32.mrb[0].mxu0
    %v2515 = vpop.f32.mrb[0].mxu0
    %2516 = vdwg.mxu0
    %v2517 = vadd.f32 %v2472, %v2511
    %v2518 = vadd.f32 %v2473, %v2513
    %v2519 = vtanh.pop %v2517
    %v2520 = vtanh.pop %v2518
    %v2521 = vld [vmem:[#allocation4 + $0x60] sm:$0xff]
    %v2522 = vld [vmem:[#allocation4 + $0x68] sm:$0xff]
    %v2523 = vpack.c.bf16 %v2519, %v2519
    %v2524 = vpack.c.bf16 %v2520, %v2520
    %2525 = vmatprep.subr.bf16.mxu0 %v2200
    %2526 = vmatpush1.bf16.msra.mxu0 %v2199
    %2527 = vmatprep.subr.bf16.mxu0 %v2202
    %2528 = vmatpush1.bf16.msra.mxu0 %v2201
    %2529 = vmatprep.subr.bf16.mxu0 %v2204
    %2530 = vmatpush1.bf16.msra.mxu0 %v2203
    %2531 = vmatprep.subr.bf16.mxu0 %v2206
    %2532 = vmatpush1.bf16.msra.mxu0 %v2205
    %2533 = vmatprep.subr.bf16.mxu0 %v2208
    %2534 = vmatpush1.bf16.msra.mxu0 %v2207
    %2535 = vmatprep.subr.bf16.mxu0 %v2210
    %2536 = vmatpush1.bf16.msra.mxu0 %v2209
    %2537 = vmatprep.subr.bf16.mxu0 %v2212
    %2538 = vmatpush1.bf16.msra.mxu0 %v2211
    %2539 = vmatprep.subr.bf16.mxu0 %v2214
    %2540 = vmatpush1.bf16.msra.mxu0 %v2213
    %2541 = vmatprep.subr.bf16.mxu0 %v2216
    %2542 = vmatpush1.bf16.msra.mxu0 %v2215
    %2543 = vmatprep.subr.bf16.mxu0 %v2218
    %2544 = vmatpush1.bf16.msra.mxu0 %v2217
    %2545 = vmatprep.subr.bf16.mxu0 %v2220
    %2546 = vmatpush1.bf16.msra.mxu0 %v2219
    %2547 = vmatprep.subr.bf16.mxu0 %v2222
    %2548 = vmatpush1.bf16.msra.mxu0 %v2221
    %2549 = vmatprep.subr.bf16.mxu0 %v2224
    %2550 = vmatpush1.bf16.msra.mxu0 %v2223
    %2551 = vmatprep.subr.bf16.mxu0 %v2226
    %2552 = vmatpush1.bf16.msra.mxu0 %v2225
    %2553 = vmatprep.subr.bf16.mxu0 %v2228
    %2554 = vmatpush1.bf16.msra.mxu0 %v2227
    %2555 = vmatprep.subr.bf16.mxu0 %v2230
    %2556 = vmatpush1.bf16.msra.mxu0 %v2229
    %2557 = vmatprep.mubr.bf16.mxu0 %v2524
    %2558 = vmatmul.mubr.bf16.gmra.mrb[0].mxu0 %v2523
    %v2559 = vpop.f32.mrb[0].mxu0
    %v2560 = vadd.f32 0.0, %v2559
    %v2561 = vpop.f32.mrb[0].mxu0
    %v2562 = vadd.f32 0.0, %v2561
    %v2563 = vpop.f32.mrb[0].mxu0
    %v2564 = vpop.f32.mrb[0].mxu0
    %2565 = vdwg.mxu0
    %v2566 = vadd.f32 %v2521, %v2560
    %v2567 = vadd.f32 %v2522, %v2562
    %v2568 = vtanh.pop %v2566
    %v2569 = vtanh.pop %v2567
    %v2570 = vld [vmem:[#allocation4 + $0x70] sm:$0xff]
    %v2571 = vld [vmem:[#allocation4 + $0x78] sm:$0xff]
    %v2572 = vpack.c.bf16 %v2568, %v2568
    %v2573 = vpack.c.bf16 %v2569, %v2569
    %2574 = vmatprep.subr.bf16.mxu0 %v2200
    %2575 = vmatpush1.bf16.msra.mxu0 %v2199
    %2576 = vmatprep.subr.bf16.mxu0 %v2202
    %2577 = vmatpush1.bf16.msra.mxu0 %v2201
    %2578 = vmatprep.subr.bf16.mxu0 %v2204
    %2579 = vmatpush1.bf16.msra.mxu0 %v2203
    %2580 = vmatprep.subr.bf16.mxu0 %v2206
    %2581 = vmatpush1.bf16.msra.mxu0 %v2205
    %2582 = vmatprep.subr.bf16.mxu0 %v2208
    %2583 = vmatpush1.bf16.msra.mxu0 %v2207
    %2584 = vmatprep.subr.bf16.mxu0 %v2210
    %2585 = vmatpush1.bf16.msra.mxu0 %v2209
    %2586 = vmatprep.subr.bf16.mxu0 %v2212
    %2587 = vmatpush1.bf16.msra.mxu0 %v2211
    %2588 = vmatprep.subr.bf16.mxu0 %v2214
    %2589 = vmatpush1.bf16.msra.mxu0 %v2213
    %2590 = vmatprep.subr.bf16.mxu0 %v2216
    %2591 = vmatpush1.bf16.msra.mxu0 %v2215
    %2592 = vmatprep.subr.bf16.mxu0 %v2218
    %2593 = vmatpush1.bf16.msra.mxu0 %v2217
    %2594 = vmatprep.subr.bf16.mxu0 %v2220
    %2595 = vmatpush1.bf16.msra.mxu0 %v2219
    %2596 = vmatprep.subr.bf16.mxu0 %v2222
    %2597 = vmatpush1.bf16.msra.mxu0 %v2221
    %2598 = vmatprep.subr.bf16.mxu0 %v2224
    %2599 = vmatpush1.bf16.msra.mxu0 %v2223
    %2600 = vmatprep.subr.bf16.mxu0 %v2226
    %2601 = vmatpush1.bf16.msra.mxu0 %v2225
    %2602 = vmatprep.subr.bf16.mxu0 %v2228
    %2603 = vmatpush1.bf16.msra.mxu0 %v2227
    %2604 = vmatprep.subr.bf16.mxu0 %v2230
    %2605 = vmatpush1.bf16.msra.mxu0 %v2229
    %2606 = vmatprep.mubr.bf16.mxu0 %v2573
    %2607 = vmatmul.mubr.bf16.gmra.mrb[0].mxu0 %v2572
    %v2608 = vpop.f32.mrb[0].mxu0
    %v2609 = vadd.f32 0.0, %v2608
    %v2610 = vpop.f32.mrb[0].mxu0
    %v2611 = vadd.f32 0.0, %v2610
    %v2612 = vpop.f32.mrb[0].mxu0
    %v2613 = vpop.f32.mrb[0].mxu0
    %2614 = vdwg.mxu0
    %v2615 = vadd.f32 %v2570, %v2609
    %v2616 = vadd.f32 %v2571, %v2611
    %v2617 = vtanh.pop %v2615
    %v2618 = vtanh.pop %v2616
    %v2619 = vpack.c.bf16 %v2617, %v2617
    %v2620 = vpack.c.bf16 %v2618, %v2618
    %v2621 = vld [vmem:[#allocation2 + $0x5b0] sm:$0xff]
    %v2622 = vld [vmem:[#allocation2 + $0x5b8] sm:$0xff]
    %v2623 = vld [vmem:[#allocation2 + $0x5c0] sm:$0xff]
    %v2624 = vld [vmem:[#allocation2 + $0x5c8] sm:$0xff]
    %v2625 = vld [vmem:[#allocation2 + $0x5d0] sm:$0xff]
    %v2626 = vld [vmem:[#allocation2 + $0x5d8] sm:$0xff]
    %v2627 = vld [vmem:[#allocation2 + $0x5e0] sm:$0xff]
    %v2628 = vld [vmem:[#allocation2 + $0x5e8] sm:$0xff]
    %v2629 = vld [vmem:[#allocation2 + $0x5f0] sm:$0xff]
    %v2630 = vld [vmem:[#allocation2 + $0x5f8] sm:$0xff]
    %v2631 = vld [vmem:[#allocation2 + $0x600] sm:$0xff]
    %v2632 = vld [vmem:[#allocation2 + $0x608] sm:$0xff]
    %v2633 = vld [vmem:[#allocation2 + $0x610] sm:$0xff]
    %v2634 = vld [vmem:[#allocation2 + $0x618] sm:$0xff]
    %v2635 = vld [vmem:[#allocation2 + $0x620] sm:$0xff]
    %v2636 = vld [vmem:[#allocation2 + $0x628] sm:$0xff]
    %v2637 = vld [vmem:[#allocation2 + $0x630] sm:$0xff]
    %v2638 = vld [vmem:[#allocation2 + $0x638] sm:$0xff]
    %v2639 = vld [vmem:[#allocation2 + $0x640] sm:$0xff]
    %v2640 = vld [vmem:[#allocation2 + $0x648] sm:$0xff]
    %v2641 = vld [vmem:[#allocation2 + $0x650] sm:$0xff]
    %v2642 = vld [vmem:[#allocation2 + $0x658] sm:$0xff]
    %v2643 = vld [vmem:[#allocation2 + $0x660] sm:$0xff]
    %v2644 = vld [vmem:[#allocation2 + $0x668] sm:$0xff]
    %v2645 = vld [vmem:[#allocation2 + $0x670] sm:$0xff]
    %v2646 = vld [vmem:[#allocation2 + $0x678] sm:$0xff]
    %v2647 = vld [vmem:[#allocation2 + $0x680] sm:$0xff]
    %v2648 = vld [vmem:[#allocation2 + $0x688] sm:$0xff]
    %v2649 = vld [vmem:[#allocation2 + $0x690] sm:$0xff]
    %v2650 = vld [vmem:[#allocation2 + $0x698] sm:$0xff]
    %v2651 = vld [vmem:[#allocation2 + $0x6a0] sm:$0xff]
    %v2652 = vld [vmem:[#allocation2 + $0x6a8] sm:$0xff]
    %v2653 = vld [vmem:[#allocation2 + $0x6b0] sm:$0xff]
    %v2654 = vld [vmem:[#allocation2 + $0x6b8] sm:$0xff]
    %v2655 = vld [vmem:[#allocation2 + $0x6c0] sm:$0xff]
    %v2656 = vld [vmem:[#allocation2 + $0x6c8] sm:$0xff]
    %v2657 = vld [vmem:[#allocation2 + $0x6d0] sm:$0xff]
    %v2658 = vld [vmem:[#allocation2 + $0x6d8] sm:$0xff]
    %v2659 = vld [vmem:[#allocation2 + $0x6e0] sm:$0xff]
    %v2660 = vld [vmem:[#allocation2 + $0x6e8] sm:$0xff]
    %v2661 = vld [vmem:[#allocation2 + $0x6f0] sm:$0xff]
    %v2662 = vld [vmem:[#allocation2 + $0x6f8] sm:$0xff]
    %v2663 = vld [vmem:[#allocation2 + $0x700] sm:$0xff]
    %v2664 = vld [vmem:[#allocation2 + $0x708] sm:$0xff]
    %v2665 = vld [vmem:[#allocation2 + $0x710] sm:$0xff]
    %v2666 = vld [vmem:[#allocation2 + $0x718] sm:$0xff]
    %v2667 = vld [vmem:[#allocation2 + $0x720] sm:$0xff]
    %v2668 = vld [vmem:[#allocation2 + $0x728] sm:$0xff]
    %v2669 = vld [vmem:[#allocation2 + $0x730] sm:$0xff]
    %v2670 = vld [vmem:[#allocation2 + $0x738] sm:$0xff]
    %v2671 = vld [vmem:[#allocation2 + $0x740] sm:$0xff]
    %v2672 = vld [vmem:[#allocation2 + $0x748] sm:$0xff]
    %v2673 = vld [vmem:[#allocation2 + $0x750] sm:$0xff]
    %v2674 = vld [vmem:[#allocation2 + $0x758] sm:$0xff]
    %v2675 = vld [vmem:[#allocation2 + $0x760] sm:$0xff]
    %v2676 = vld [vmem:[#allocation2 + $0x768] sm:$0xff]
    %v2677 = vld [vmem:[#allocation2 + $0x770] sm:$0xff]
    %v2678 = vld [vmem:[#allocation2 + $0x778] sm:$0xff]
    %v2679 = vld [vmem:[#allocation2 + $0x780] sm:$0xff]
    %v2680 = vld [vmem:[#allocation2 + $0x788] sm:$0xff]
    %v2681 = vld [vmem:[#allocation2 + $0x790] sm:$0xff]
    %v2682 = vld [vmem:[#allocation2 + $0x798] sm:$0xff]
    %v2683 = vld [vmem:[#allocation2 + $0x7a0] sm:$0xff]
    %v2684 = vld [vmem:[#allocation2 + $0x7a8] sm:$0xff]
    %v2685 = vld [vmem:[#allocation2 + $0x7b0] sm:$0x1]
    %v2686 = vld [vmem:[#allocation2 + $0x7b8] sm:$0x1]
    %v2687 = vunpack.c.l.bf16 %v2685
    %v2688 = vunpack.c.l.bf16 %v2686
    %v2689 = vlaneseq
    %v2690 = vshrl.u32 %v2689, 7
    %v2691 = vsub.s32 0, %v2690
    %v2692 = vrot.slane %v2687, %v2691
    %v2693 = vlaneseq
    %v2694 = vshrl.u32 %v2693, 7
    %v2695 = vsub.s32 0, %v2694
    %v2696 = vrot.slane %v2688, %v2695
    %2697 = vmatprep.subr.bf16.mxu0 %v2622
    %2698 = vmatpush1.bf16.msra.mxu0 %v2621
    %2699 = vmatprep.subr.bf16.mxu0 %v2624
    %2700 = vmatpush1.bf16.msra.mxu0 %v2623
    %2701 = vmatprep.subr.bf16.mxu0 %v2626
    %2702 = vmatpush1.bf16.msra.mxu0 %v2625
    %2703 = vmatprep.subr.bf16.mxu0 %v2628
    %2704 = vmatpush1.bf16.msra.mxu0 %v2627
    %2705 = vmatprep.subr.bf16.mxu0 %v2630
    %2706 = vmatpush1.bf16.msra.mxu0 %v2629
    %2707 = vmatprep.subr.bf16.mxu0 %v2632
    %2708 = vmatpush1.bf16.msra.mxu0 %v2631
    %2709 = vmatprep.subr.bf16.mxu0 %v2634
    %2710 = vmatpush1.bf16.msra.mxu0 %v2633
    %2711 = vmatprep.subr.bf16.mxu0 %v2636
    %2712 = vmatpush1.bf16.msra.mxu0 %v2635
    %2713 = vmatprep.subr.bf16.mxu0 %v2638
    %2714 = vmatpush1.bf16.msra.mxu0 %v2637
    %2715 = vmatprep.subr.bf16.mxu0 %v2640
    %2716 = vmatpush1.bf16.msra.mxu0 %v2639
    %2717 = vmatprep.subr.bf16.mxu0 %v2642
    %2718 = vmatpush1.bf16.msra.mxu0 %v2641
    %2719 = vmatprep.subr.bf16.mxu0 %v2644
    %2720 = vmatpush1.bf16.msra.mxu0 %v2643
    %2721 = vmatprep.subr.bf16.mxu0 %v2646
    %2722 = vmatpush1.bf16.msra.mxu0 %v2645
    %2723 = vmatprep.subr.bf16.mxu0 %v2648
    %2724 = vmatpush1.bf16.msra.mxu0 %v2647
    %2725 = vmatprep.subr.bf16.mxu0 %v2650
    %2726 = vmatpush1.bf16.msra.mxu0 %v2649
    %2727 = vmatprep.subr.bf16.mxu0 %v2652
    %2728 = vmatpush1.bf16.msra.mxu0 %v2651
    %2729 = vmatprep.mubr.bf16.mxu0 %v2279
    %2730 = vmatmul.mubr.bf16.gmra.mrb[0].mxu0 %v2278
    %v2731 = vpop.f32.mrb[0].mxu0
    %v2732 = vadd.f32 %v2692, %v2731
    %v2733 = vpop.f32.mrb[0].mxu0
    %v2734 = vadd.f32 %v2696, %v2733
    %v2735 = vpop.f32.mrb[0].mxu0
    %v2736 = vpop.f32.mrb[0].mxu0
    %2737 = vdwg.mxu0
    %2738 = vmatprep.subr.bf16.mxu0 %v2654
    %2739 = vmatpush1.bf16.msra.mxu0 %v2653
    %2740 = vmatprep.subr.bf16.mxu0 %v2656
    %2741 = vmatpush1.bf16.msra.mxu0 %v2655
    %2742 = vmatprep.subr.bf16.mxu0 %v2658
    %2743 = vmatpush1.bf16.msra.mxu0 %v2657
    %2744 = vmatprep.subr.bf16.mxu0 %v2660
    %2745 = vmatpush1.bf16.msra.mxu0 %v2659
    %2746 = vmatprep.subr.bf16.mxu0 %v2662
    %2747 = vmatpush1.bf16.msra.mxu0 %v2661
    %2748 = vmatprep.subr.bf16.mxu0 %v2664
    %2749 = vmatpush1.bf16.msra.mxu0 %v2663
    %2750 = vmatprep.subr.bf16.mxu0 %v2666
    %2751 = vmatpush1.bf16.msra.mxu0 %v2665
    %2752 = vmatprep.subr.bf16.mxu0 %v2668
    %2753 = vmatpush1.bf16.msra.mxu0 %v2667
    %2754 = vmatprep.subr.bf16.mxu0 %v2670
    %2755 = vmatpush1.bf16.msra.mxu0 %v2669
    %2756 = vmatprep.subr.bf16.mxu0 %v2672
    %2757 = vmatpush1.bf16.msra.mxu0 %v2671
    %2758 = vmatprep.subr.bf16.mxu0 %v2674
    %2759 = vmatpush1.bf16.msra.mxu0 %v2673
    %2760 = vmatprep.subr.bf16.mxu0 %v2676
    %2761 = vmatpush1.bf16.msra.mxu0 %v2675
    %2762 = vmatprep.subr.bf16.mxu0 %v2678
    %2763 = vmatpush1.bf16.msra.mxu0 %v2677
    %2764 = vmatprep.subr.bf16.mxu0 %v2680
    %2765 = vmatpush1.bf16.msra.mxu0 %v2679
    %2766 = vmatprep.subr.bf16.mxu0 %v2682
    %2767 = vmatpush1.bf16.msra.mxu0 %v2681
    %2768 = vmatprep.subr.bf16.mxu0 %v2684
    %2769 = vmatpush1.bf16.msra.mxu0 %v2683
    %2770 = vmatprep.mubr.bf16.mxu0 %v2620
    %2771 = vmatmul.mubr.bf16.gmra.mrb[0].mxu0 %v2619
    %v2772 = vpop.f32.mrb[0].mxu0
    %v2773 = vadd.f32 %v2732, %v2772
    %v2774 = vpop.f32.mrb[0].mxu0
    %v2775 = vadd.f32 %v2734, %v2774
    %v2776 = vpop.f32.mrb[0].mxu0
    %v2777 = vpop.f32.mrb[0].mxu0
    %2778 = vdwg.mxu0
    %v2779 = vmax.f32 %v2773, 0.0
    %v2780 = vmax.f32 %v2775, 0.0
    %v2781 = vld [vmem:[#allocation2 + $0x7b0] sm:$0x10]
    %v2782 = vld [vmem:[#allocation2 + $0x7b8] sm:$0x10]
    %v2785 = vrot.slane %v2781, 4
    %v2786 = vrot.slane %v2782, 4
    %v2789 = vunpack.c.l.bf16 %v2785
    %v2790 = vunpack.c.l.bf16 %v2786
    %v2791 = vlaneseq
    %v2792 = vshrl.u32 %v2791, 7
    %v2793 = vsub.s32 0, %v2792
    %v2794 = vrot.slane %v2789, %v2793
    %v2795 = vlaneseq
    %v2796 = vshrl.u32 %v2795, 7
    %v2797 = vsub.s32 0, %v2796
    %v2798 = vrot.slane %v2790, %v2797
    %v2799 = vmul.f32 %v2779, %v2794
    %v2800 = vmul.f32 %v2780, %v2798
    %v2801 = vadd.f32 %v2799, %v2800
    %2802 = vadd.xlane.f32.xlu0 %v2801
    %v2803 = vpop.xlane.xlu0 %2802
    %v2804 = vxor.u32 %v2803, 2147483648
    %v2805 = vmul.f32 %v2804, 1.442695
    %v2806 = vpow.pop %v2805
    %v2807 = vadd.f32 %v2806, 1.0
    %v2808 = vrcp.pop %v2807
    %v2809 = vmul.f32 1.0, %v2808
    %2810 = vst [vmem:[%s3] sm:$0xff] %v2809
    // Predicated region
    $region74: #{rnn_forward.1} parent=1 // pred_check
      _
    $region75: #{rnn_forward.1} parent=1 // pred_check_branch
      %2812 = sbr.rel (0) target = $region77
    $region76: #{rnn_forward.1} parent=1 // pred_region
      _
    $region77: #{rnn_forward.1} parent=1 // pred_fallthru
      _
    // Predicated region
    $region78: #{rnn_forward.1} parent=1 // pred_check
      _
    $region79: #{rnn_forward.1} parent=1 // pred_check_branch
      %2814 = sbr.rel (0) target = $region81
    $region80: #{rnn_forward.1} parent=1 // pred_region
      _
    $region81: #{rnn_forward.1} parent=1 // pred_fallthru
      _
    %2815 = vsyncpa [#allocation10], 1
  %2816 = vsyncmov [#allocation7]
  %s2817 = vpop.sfrf %2816
  %p2818 = scmp.eq.s32.totalorder %s2817, 0
  %p2819 = pneg %p2818
  %2821 = shalt.err (%p2819)
  %s2822 = scalar_lea.sflag [#allocation7], 1
  %2823 = vsyncmov %s2822
  %s2824 = vpop.sfrf %2823
  %p2825 = scmp.eq.s32.totalorder %s2824, 0
  %p2826 = pneg %p2825
  %2828 = shalt.err (%p2826)
  %s2829 = scalar_lea.sflag [#allocation7], 2
  %2830 = vsyncmov %s2829
  %s2831 = vpop.sfrf %2830
  %p2832 = scmp.eq.s32.totalorder %s2831, 0
  %p2833 = pneg %p2832
  %2835 = shalt.err (%p2833)
  %2836 = vsyncmov [#allocation8]
  %s2837 = vpop.sfrf %2836
  %p2838 = scmp.eq.s32.totalorder %s2837, 0
  %p2839 = pneg %p2838
  %2841 = shalt.err (%p2839)
  %s2842 = scalar_lea.sflag [#allocation8], 1
  %2843 = vsyncmov %s2842
  %s2844 = vpop.sfrf %2843
  %p2845 = scmp.eq.s32.totalorder %s2844, 0
  %p2846 = pneg %p2845
  %2848 = shalt.err (%p2846)
  %s2849 = scalar_lea.sflag [#allocation8], 2
  %2850 = vsyncmov %s2849
  %s2851 = vpop.sfrf %2850
  %p2852 = scmp.eq.s32.totalorder %s2851, 0
  %p2853 = pneg %p2852
  %2855 = shalt.err (%p2853)
  %s2856 = scalar_lea.sflag [#allocation8], 3
  %2857 = vsyncmov %s2856
  %s2858 = vpop.sfrf %2857
  %p2859 = scmp.eq.s32.totalorder %s2858, 0
  %p2860 = pneg %p2859
  %2862 = shalt.err (%p2860)
  %s2863 = scalar_lea.sflag [#allocation8], 4
  %2864 = vsyncmov %s2863
  %s2865 = vpop.sfrf %2864
  %p2866 = scmp.eq.s32.totalorder %s2865, 0
  %p2867 = pneg %p2866
  %2869 = shalt.err (%p2867)
  %s2870 = scalar_lea.sflag [#allocation8], 5
  %2871 = vsyncmov %s2870
  %s2872 = vpop.sfrf %2871
  %p2873 = scmp.eq.s32.totalorder %s2872, 0
  %p2874 = pneg %p2873
  %2876 = shalt.err (%p2874)
  %s2877 = scalar_lea.sflag [#allocation8], 6
  %2878 = vsyncmov %s2877
  %s2879 = vpop.sfrf %2878
  %p2880 = scmp.eq.s32.totalorder %s2879, 0
  %p2881 = pneg %p2880
  %2883 = shalt.err (%p2881)
  %s2884 = scalar_lea.sflag [#allocation8], 7
  %2885 = vsyncmov %s2884
  %s2886 = vpop.sfrf %2885
  %p2887 = scmp.eq.s32.totalorder %s2886, 0
  %p2888 = pneg %p2887
  %2890 = shalt.err (%p2888)
  %s2891 = scalar_lea.sflag [#allocation8], 8
  %2892 = vsyncmov %s2891
  %s2893 = vpop.sfrf %2892
  %p2894 = scmp.eq.s32.totalorder %s2893, 0
  %p2895 = pneg %p2894
  %2897 = shalt.err (%p2895)
  %s2898 = scalar_lea.sflag [#allocation8], 9
  %2899 = vsyncmov %s2898
  %s2900 = vpop.sfrf %2899
  %p2901 = scmp.eq.s32.totalorder %s2900, 0
  %p2902 = pneg %p2901
  %2904 = shalt.err (%p2902)
  %s2905 = scalar_lea.sflag [#allocation8], 10
  %2906 = vsyncmov %s2905
  %s2907 = vpop.sfrf %2906
  %p2908 = scmp.eq.s32.totalorder %s2907, 0
  %p2909 = pneg %p2908
  %2911 = shalt.err (%p2909)
  %s2912 = scalar_lea.sflag [#allocation8], 11
  %2913 = vsyncmov %s2912
  %s2914 = vpop.sfrf %2913
  %p2915 = scmp.eq.s32.totalorder %s2914, 0
  %p2916 = pneg %p2915
  %2918 = shalt.err (%p2916)
  %s2919 = scalar_lea.sflag [#allocation8], 12
  %2920 = vsyncmov %s2919
  %s2921 = vpop.sfrf %2920
  %p2922 = scmp.eq.s32.totalorder %s2921, 0
  %p2923 = pneg %p2922
  %2925 = shalt.err (%p2923)
  %s2926 = scalar_lea.sflag [#allocation8], 13
  %2927 = vsyncmov %s2926
  %s2928 = vpop.sfrf %2927
  %p2929 = scmp.eq.s32.totalorder %s2928, 0
  %p2930 = pneg %p2929
  %2932 = shalt.err (%p2930)
  %s2933 = scalar_lea.sflag [#allocation8], 14
  %2934 = vsyncmov %s2933
  %s2935 = vpop.sfrf %2934
  %p2936 = scmp.eq.s32.totalorder %s2935, 0
  %p2937 = pneg %p2936
  %2939 = shalt.err (%p2937)
  %s2940 = scalar_lea.sflag [#allocation8], 15
  %2941 = vsyncmov %s2940
  %s2942 = vpop.sfrf %2941
  %p2943 = scmp.eq.s32.totalorder %s2942, 0
  %p2944 = pneg %p2943
  %2946 = shalt.err (%p2944)

</llo_original>
